<compile_context>
chip_gen: v5e
topology: v5e:2x2
jax: 0.10.0
libtpu: 0.0.40
codegen_flags: <defaults>
</compile_context>

<pallas_src>
import math
import sys
from functools import partial

import jax
import jax.numpy as jnp
from jax import lax
from jax.experimental import pallas as pl
from jax.experimental.pallas import tpu as pltpu

EPS = 1e-12  # hand-rolled transformer LayerNorm eps

_DN_LAST = (((1,), (1,)), ((), ()))  # contract last axes of both operands (A @ B^T)


def _layernorm(x, gamma, beta):
    mu = jnp.mean(x, axis=-1, keepdims=True)
    var = jnp.mean(jnp.square(x - mu), axis=-1, keepdims=True)
    return (x - mu) * lax.rsqrt(var + EPS) * gamma + beta


def encoder_layer_kernel(n_heads, q_tile, ff_tile,
                         x_full_ref, x_q_ref, bias_ref,
                         wq_ref, bq_ref, wk_ref, bk_ref, wv_ref, bv_ref,
                         wo_ref, bo_ref,
                         g1_ref, be1_ref,
                         w1t_ref, bf1_ref, w2_ref, bf2_ref,
                         g2_ref, be2_ref,
                         out_ref,
                         k_scratch, v_scratch):
    qi = pl.program_id(1)
    S, D = x_full_ref.shape[1], x_full_ref.shape[2]
    d_ff = w1t_ref.shape[0]
    dh = D // n_heads
    scale = 1.0 / math.sqrt(dh)
    cdt = k_scratch.dtype                      # MXU input dtype (f32 or bf16)

    # ---- K/V projections: computed once per batch element, reused by all q-tiles ----
    @pl.when(qi == 0)
    def _():
        x_full = x_full_ref[0]                 # (S, D), compute dtype
        k_scratch[...] = (jnp.dot(x_full, wk_ref[...],
                                  preferred_element_type=jnp.float32)
                          + bk_ref[...]).astype(cdt)
        v_scratch[...] = (jnp.dot(x_full, wv_ref[...],
                                  preferred_element_type=jnp.float32)
                          + bv_ref[...]).astype(cdt)

    x_q32 = x_q_ref[0].astype(jnp.float32)     # (TQ, D) f32 (residual kept in f32)
    # Fold 1/sqrt(dh) into Q once (instead of scaling every (TQ,S) score matrix).
    q = ((jnp.dot(x_q32.astype(cdt), wq_ref[...],
                  preferred_element_type=jnp.float32) + bq_ref[...])
         * scale).astype(cdt)                  # (TQ, D)
    k = k_scratch[...]                         # (S, D)
    v = v_scratch[...]                         # (S, D)
    bias = bias_ref[0].astype(jnp.float32)     # (TQ, S) additive mask bias, -> f32 once

    # ---- per-head scaled-dot-product attention (softmax stats in f32) ----
    # Static Python loop over heads; each iteration's (TQ,S) temporaries die inside the
    # iteration, only the (TQ,dh) head outputs stay live until the lane-dense concat.
    head_outs = []
    for h in range(n_heads):
        sl = slice(h * dh, (h + 1) * dh)
        s = lax.dot_general(q[:, sl], k[:, sl], _DN_LAST,
                            preferred_element_type=jnp.float32) + bias
        s = s - jnp.max(s, axis=-1, keepdims=True)
        p = jnp.exp(s)
        inv = pl.reciprocal(jnp.sum(p, axis=-1, keepdims=True), approx=True)
        oh = jnp.dot(p.astype(cdt), v[:, sl],
                     preferred_element_type=jnp.float32) * inv   # normalize (TQ,dh)
        head_outs.append(oh)
    concat = jnp.concatenate(head_outs, axis=-1)                 # (TQ, D), lane-dense

    # single wide output projection: (TQ, D) @ (D, D)
    att_out = (jnp.dot(concat.astype(cdt), wo_ref[...],
                       preferred_element_type=jnp.float32) + bo_ref[...])

    # ---- residual + norm1 (f32 residual) ----
    n1 = _layernorm(att_out + x_q32, g1_ref[...], be1_ref[...])

    # ---- position-wise FF applied to att_out (reference-module quirk), chunked ----
    att_c = att_out.astype(cdt)
    n_chunks = d_ff // ff_tile

    def ff_body(c, ffo):
        start = pl.multiple_of(c * ff_tile, ff_tile)
        w1s = w1t_ref[pl.ds(start, ff_tile), :]          # (ff_tile, D)  (W1 transposed)
        b1s = bf1_ref[pl.ds(c, 1), :]                    # (1, ff_tile)
        h1 = lax.dot_general(att_c, w1s, _DN_LAST,
                             preferred_element_type=jnp.float32) + b1s
        h1 = jnp.maximum(h1, 0.0).astype(cdt)
        w2s = w2_ref[pl.ds(start, ff_tile), :]           # (ff_tile, D)
        return ffo + jnp.dot(h1, w2s, preferred_element_type=jnp.float32)

    ffo = lax.fori_loop(0, n_chunks, ff_body,
                        jnp.zeros((q_tile, D), jnp.float32),
                        unroll=bool(n_chunks <= 4))
    ffo = ffo + bf2_ref[...]

    # ---- residual + norm2 ----
    out_ref[0] = _layernorm(ffo + n1, g2_ref[...], be2_ref[...]).astype(out_ref.dtype)


def _tpu_generation():
    try:
        kind = jax.devices()[0].device_kind.lower()
    except Exception:
        return ""
    for g in ("v7", "v6", "v5"):
        if g in kind:
            return g
    return ""


def _vmem_limit_bytes(gen):
    if gen == "v7":
        return 56 * 1024 * 1024     # 64 MiB physical; leave headroom for spill scratch
    if gen in ("v5", "v6"):
        return 100 * 1024 * 1024    # 128 MiB physical
    return 64 * 1024 * 1024


def _build_encoder_call(B, S, D, d_ff, n_heads, q_tile, ff_tile, compute_dtype,
                        out_dtype, single_buffer_weights, vmem_limit, cost_estimate):
    num_q_tiles = S // q_tile
    n_chunks = d_ff // ff_tile

    if single_buffer_weights:
        # Constant-index weights (and the per-batch full-x block): one VMEM buffer each.
        # Matters for the v7x 64 MiB budget; zero perf cost since the block is reused.
        def const_spec(shape):
            return pl.BlockSpec(shape, lambda b, qi: (0, 0),
                                pipeline_mode=pl.Buffered(1))

        x_full_spec = pl.BlockSpec((1, S, D), lambda b, qi: (b, 0, 0),
                                   pipeline_mode=pl.Buffered(1))
    else:
        def const_spec(shape):
            return pl.BlockSpec(shape, lambda b, qi: (0, 0))

        x_full_spec = pl.BlockSpec((1, S, D), lambda b, qi: (b, 0, 0))

    in_specs = [
        x_full_spec,                                              # x (full seq, K/V proj)
        pl.BlockSpec((1, q_tile, D), lambda b, qi: (b, qi, 0)),   # x q-tile (f32, residual)
        pl.BlockSpec((1, q_tile, S), lambda b, qi: (b, qi, 0)),   # additive mask bias bf16
        const_spec((D, D)), const_spec((1, D)),                   # Wq, bq
        const_spec((D, D)), const_spec((1, D)),                   # Wk, bk
        const_spec((D, D)), const_spec((1, D)),                   # Wv, bv
        const_spec((D, D)), const_spec((1, D)),                   # Wo, bo
        const_spec((1, D)), const_spec((1, D)),                   # gamma1, beta1
        const_spec((d_ff, D)), const_spec((n_chunks, ff_tile)),   # W1^T, b1 (chunked)
        const_spec((d_ff, D)), const_spec((1, D)),                # W2, b2
        const_spec((1, D)), const_spec((1, D)),                   # gamma2, beta2
    ]

    return pl.pallas_call(
        partial(encoder_layer_kernel, n_heads, q_tile, ff_tile),
        out_shape=jax.ShapeDtypeStruct((B, S, D), out_dtype),
        grid=(B, num_q_tiles),
        in_specs=in_specs,
        out_specs=pl.BlockSpec((1, q_tile, D), lambda b, qi: (b, qi, 0)),
        scratch_shapes=[
            pltpu.VMEM((S, D), compute_dtype),      # K projection (cached per batch)
            pltpu.VMEM((S, D), compute_dtype),      # V projection (cached per batch)
        ],
        compiler_params=pltpu.CompilerParams(
            # Batch axis is 'parallel' (megacore); the query-tile axis stays 'arbitrary'
            # because the cached K/V scratch carries state across query tiles of a batch.
            dimension_semantics=("parallel", "arbitrary"),
            vmem_limit_bytes=vmem_limit,
        ),
        cost_estimate=cost_estimate,
    )


def encoder_layer(x, mask, params, n_heads, *,
                  q_tile=None, ff_tile=None, compute_dtype=jnp.float32,
                  out_dtype=jnp.float32):
    B, S, D = x.shape
    d_ff = params["w1"].shape[1]
    assert D % n_heads == 0

    gen = _tpu_generation()
    if q_tile is None:
        q_tile = min(S, 128 if gen == "v7" else 256)
    if ff_tile is None:
        ff_tile = min(d_ff, 256 if gen == "v7" else 1024)

    assert S % q_tile == 0, "q_tile must divide S"
    assert d_ff % ff_tile == 0, "ff_tile must divide d_ff"
    if compute_dtype == jnp.bfloat16:
        assert q_tile % 16 == 0 or q_tile == S, \
            "bf16 packs 16 sublanes per vreg; use q_tile % 16 == 0"
    else:
        assert q_tile % 8 == 0 or q_tile == S

    # Additive mask bias computed once in the wrapper, shipped as bf16 (halves the only
    # B*S*S streamed input); the bias add stays f32 inside the kernel.
    # Note: for fully-masked rows this differs from masked_fill's "uniform softmax"
    # degenerate behavior; for any row with >=1 unmasked key it is equivalent.
    mask_bias = jnp.where(mask == 0, jnp.float32(-1e9),
                          jnp.float32(0.0)).astype(jnp.bfloat16)

    cdt = compute_dtype
    n_chunks = d_ff // ff_tile
    args = (
        x.astype(cdt),                       # full-x block (K/V projection input)
        x.astype(jnp.float32),               # q-tile block (Q projection + f32 residual)
        mask_bias,
        params["wq"].astype(cdt), params["bq"],
        params["wk"].astype(cdt), params["bk"],
        params["wv"].astype(cdt), params["bv"],
        params["wo"].astype(cdt), params["bo"],
        params["g1"], params["be1"],
        jnp.transpose(params["w1"]).astype(cdt),             # (d_ff, D)
        params["b1"].reshape(n_chunks, ff_tile),              # chunked b1
        params["w2"].astype(cdt), params["b2"],
        params["g2"], params["be2"],
    )

    flops = 2 * B * S * D * (4 * D + 2 * d_ff) + 4 * B * S * S * D
    bytes_accessed = int(
        B * S * D * (jnp.dtype(cdt).itemsize + 4)             # x shipped twice
        + B * S * S * 2                                       # bf16 mask bias
        + sum(int(v.size) * 4 for v in params.values())
        + B * S * D * jnp.dtype(out_dtype).itemsize)
    cost = pl.CostEstimate(flops=int(flops),
                           transcendentals=int(B * n_heads * S * S),
                           bytes_accessed=bytes_accessed)
    vmem_limit = _vmem_limit_bytes(gen)

    try:
        fn = _build_encoder_call(B, S, D, d_ff, n_heads, q_tile, ff_tile,
                                 cdt, out_dtype, True, vmem_limit, cost)
        return fn(*args)
    except Exception as e:
        # Not silent: falling back to default double buffering doubles weight VMEM.
        print("WARNING: single-buffered (pl.Buffered(1)) weight specs rejected "
              f"({type(e).__name__}: {e}); falling back to default double buffering.",
              file=sys.stderr)
        fn = _build_encoder_call(B, S, D, d_ff, n_heads, q_tile, ff_tile,
                                 cdt, out_dtype, False, vmem_limit, cost)
        return fn(*args)


def encoder_layer_ref(x, mask, params, n_heads):
    """Pure-JAX reference replicating the PyTorch forward."""
    B, S, D = x.shape
    dh = D // n_heads

    q = x @ params["wq"] + params["bq"]
    k = x @ params["wk"] + params["bk"]
    v = x @ params["wv"] + params["bv"]

    def split(t):  # (B,S,D) -> (B,H,S,dh)
        return t.reshape(B, S, n_heads, dh).transpose(0, 2, 1, 3)

    qh, kh, vh = split(q), split(k), split(v)
    scores = jnp.einsum("bhqd,bhkd->bhqk", qh, kh) / math.sqrt(dh)
    scores = jnp.where(mask[:, None, :, :] == 0, -1e9, scores)
    p = jax.nn.softmax(scores, axis=-1)
    oh = jnp.einsum("bhqk,bhkd->bhqd", p, vh)
    concat = oh.transpose(0, 2, 1, 3).reshape(B, S, D)
    att_out = concat @ params["wo"] + params["bo"]

    n1 = _layernorm(att_out + x, params["g1"], params["be1"])
    ffo = jnp.maximum(att_out @ params["w1"] + params["b1"], 0.0) @ params["w2"] + params["b2"]
    return _layernorm(ffo + n1, params["g2"], params["be2"])


def init_params(key, d_model, d_ff):
    ks = jax.random.split(key, 6)
    f32 = jnp.float32
    return {
        "wq": 0.02 * jax.random.normal(ks[0], (d_model, d_model), f32),
        "bq": jnp.zeros((1, d_model), f32),
        "wk": 0.02 * jax.random.normal(ks[1], (d_model, d_model), f32),
        "bk": jnp.zeros((1, d_model), f32),
        "wv": 0.02 * jax.random.normal(ks[2], (d_model, d_model), f32),
        "bv": jnp.zeros((1, d_model), f32),
        "wo": 0.02 * jax.random.normal(ks[3], (d_model, d_model), f32),
        "bo": jnp.zeros((1, d_model), f32),
        "g1": jnp.ones((1, d_model), f32),
        "be1": jnp.zeros((1, d_model), f32),
        "w1": 0.02 * jax.random.normal(ks[4], (d_model, d_ff), f32),
        "b1": jnp.zeros((1, d_ff), f32),
        "w2": 0.02 * jax.random.normal(ks[5], (d_ff, d_model), f32),
        "b2": jnp.zeros((1, d_model), f32),
        "g2": jnp.ones((1, d_model), f32),
        "be2": jnp.zeros((1, d_model), f32),
    }


if __name__ == "__main__":
    B, S, D, H = 2, 16, 32, 4
    D_FF = 4 * D  # 128

    key = jax.random.PRNGKey(0)
    kx, kp = jax.random.split(key, 2)
    x = jax.random.normal(kx, (B, S, D), jnp.float32)
    # keep everything except the last 3 key positions of batch 1
    mask = jnp.ones((B, S, S), jnp.float32)
    mask = mask.at[1, :, -3:].set(0.0)
    params = init_params(kp, D, D_FF)

    ref = encoder_layer_ref(x, mask, params, H)

    # f32 path (exact up to the approximate EUP reciprocal / rsqrt); ff_tile=64 exercises
    # the chunked FF loop (2 chunks).
    out = jax.block_until_ready(encoder_layer(x, mask, params, H, q_tile=8, ff_tile=64))
    assert out.shape == (B, S, D)
    err = float(jnp.max(jnp.abs(out - ref)))
    assert err < 5e-3, f"f32 max abs err = {err}"

    # bf16 MXU path (v6e/v7x recommendation): f32 accumulation, f32 softmax/LN stats and
    # f32 residual; q_tile is a multiple of 16 for bf16 sublane packing.
    out_bf16 = jax.block_until_ready(
        encoder_layer(x, mask, params, H, q_tile=16, compute_dtype=jnp.bfloat16))
    err_bf16 = float(jnp.max(jnp.abs(out_bf16 - ref)))
    assert err_bf16 < 1e-1, f"bf16 max abs err = {err_bf16}"

    print("KERNEL_OK")
</pallas_src>

<mosaic_0001>
module attributes {stable_mosaic.version = 11 : i64} {
  func.func @encoder_layer_kernel(%arg0: i32, %arg1: i32, %arg2: memref<1x16x32xf32, #tpu.memory_space<vmem>>, %arg3: memref<1x8x32xf32, #tpu.memory_space<vmem>>, %arg4: memref<1x8x16xbf16, #tpu.memory_space<vmem>>, %arg5: memref<32x32xf32, #tpu.memory_space<vmem>>, %arg6: memref<1x32xf32, #tpu.memory_space<vmem>>, %arg7: memref<32x32xf32, #tpu.memory_space<vmem>>, %arg8: memref<1x32xf32, #tpu.memory_space<vmem>>, %arg9: memref<32x32xf32, #tpu.memory_space<vmem>>, %arg10: memref<1x32xf32, #tpu.memory_space<vmem>>, %arg11: memref<32x32xf32, #tpu.memory_space<vmem>>, %arg12: memref<1x32xf32, #tpu.memory_space<vmem>>, %arg13: memref<1x32xf32, #tpu.memory_space<vmem>>, %arg14: memref<1x32xf32, #tpu.memory_space<vmem>>, %arg15: memref<128x32xf32, #tpu.memory_space<vmem>>, %arg16: memref<2x64xf32, #tpu.memory_space<vmem>>, %arg17: memref<128x32xf32, #tpu.memory_space<vmem>>, %arg18: memref<1x32xf32, #tpu.memory_space<vmem>>, %arg19: memref<1x32xf32, #tpu.memory_space<vmem>>, %arg20: memref<1x32xf32, #tpu.memory_space<vmem>>, %arg21: memref<1x8x32xf32, #tpu.memory_space<vmem>>, %arg22: memref<16x32xf32, #tpu.memory_space<vmem>>, %arg23: memref<16x32xf32, #tpu.memory_space<vmem>>) attributes {dimension_semantics = [#tpu.dimension_semantics<parallel>, #tpu.dimension_semantics<arbitrary>], iteration_bounds = array<i64: 2, 2>, scalar_prefetch = 0 : i64, scratch_operands = 2 : i64, tpu.core_type = #tpu.core_type<tc>, window_params = [{pipeline_mode = #tpu.pipeline_mode<synchronous>, transform_indices = @transform_0, window_bounds = array<i64: 1, 16, 32>}, {transform_indices = @transform_1, window_bounds = array<i64: 1, 8, 32>}, {transform_indices = @transform_2, window_bounds = array<i64: 1, 8, 16>}, {pipeline_mode = #tpu.pipeline_mode<synchronous>, transform_indices = @transform_3, window_bounds = array<i64: 32, 32>}, {pipeline_mode = #tpu.pipeline_mode<synchronous>, transform_indices = @transform_4, window_bounds = array<i64: 1, 32>}, {pipeline_mode = #tpu.pipeline_mode<synchronous>, transform_indices = @transform_5, window_bounds = array<i64: 32, 32>}, {pipeline_mode = #tpu.pipeline_mode<synchronous>, transform_indices = @transform_6, window_bounds = array<i64: 1, 32>}, {pipeline_mode = #tpu.pipeline_mode<synchronous>, transform_indices = @transform_7, window_bounds = array<i64: 32, 32>}, {pipeline_mode = #tpu.pipeline_mode<synchronous>, transform_indices = @transform_8, window_bounds = array<i64: 1, 32>}, {pipeline_mode = #tpu.pipeline_mode<synchronous>, transform_indices = @transform_9, window_bounds = array<i64: 32, 32>}, {pipeline_mode = #tpu.pipeline_mode<synchronous>, transform_indices = @transform_10, window_bounds = array<i64: 1, 32>}, {pipeline_mode = #tpu.pipeline_mode<synchronous>, transform_indices = @transform_11, window_bounds = array<i64: 1, 32>}, {pipeline_mode = #tpu.pipeline_mode<synchronous>, transform_indices = @transform_12, window_bounds = array<i64: 1, 32>}, {pipeline_mode = #tpu.pipeline_mode<synchronous>, transform_indices = @transform_13, window_bounds = array<i64: 128, 32>}, {pipeline_mode = #tpu.pipeline_mode<synchronous>, transform_indices = @transform_14, window_bounds = array<i64: 2, 64>}, {pipeline_mode = #tpu.pipeline_mode<synchronous>, transform_indices = @transform_15, window_bounds = array<i64: 128, 32>}, {pipeline_mode = #tpu.pipeline_mode<synchronous>, transform_indices = @transform_16, window_bounds = array<i64: 1, 32>}, {pipeline_mode = #tpu.pipeline_mode<synchronous>, transform_indices = @transform_17, window_bounds = array<i64: 1, 32>}, {pipeline_mode = #tpu.pipeline_mode<synchronous>, transform_indices = @transform_18, window_bounds = array<i64: 1, 32>}, {transform_indices = @transform_19, window_bounds = array<i64: 1, 8, 32>}]} {
    %c0_i32 = arith.constant 0 : i32
    %0 = arith.cmpi eq, %arg1, %c0_i32 : i32
    %1 = arith.extui %0 : i1 to i32
    %c0_i32_0 = arith.constant 0 : i32
    %2 = arith.cmpi ne, %1, %c0_i32_0 : i32
    scf.if %2 {
      %c0_74 = arith.constant 0 : index
      %c0_75 = arith.constant 0 : index
      %c0_76 = arith.constant 0 : index
      %174 = vector.load %arg2[%c0_74, %c0_75, %c0_76] : memref<1x16x32xf32, #tpu.memory_space<vmem>>, vector<1x16x32xf32>
      %175 = vector.shape_cast %174 : vector<1x16x32xf32> to vector<16x32xf32>
      %c0_77 = arith.constant 0 : index
      %c0_78 = arith.constant 0 : index
      %176 = vector.load %arg7[%c0_77, %c0_78] : memref<32x32xf32, #tpu.memory_space<vmem>>, vector<32x32xf32>
      %cst_79 = arith.constant dense<0.000000e+00> : vector<16x32xf32>
      %177 = tpu.matmul %175, %176, %cst_79 {dimension_numbers = #tpu.dot_dimension_numbers<[1], [0], [0], [1], [0, 0, 1, 1], [], []>} : vector<16x32xf32>, vector<32x32xf32>, vector<16x32xf32> -> vector<16x32xf32>
      %c0_80 = arith.constant 0 : index
      %c0_81 = arith.constant 0 : index
      %178 = vector.load %arg8[%c0_80, %c0_81] : memref<1x32xf32, #tpu.memory_space<vmem>>, vector<1x32xf32>
      %179 = vector.broadcast %178 : vector<1x32xf32> to vector<16x32xf32>
      %180 = arith.addf %177, %179 : vector<16x32xf32>
      %c0_82 = arith.constant 0 : index
      %c0_83 = arith.constant 0 : index
      %181 = vector.load %arg22[%c0_82, %c0_83] : memref<16x32xf32, #tpu.memory_space<vmem>>, vector<16x32xf32>
      tpu.vector_store %arg22[%c0_82, %c0_83], %180 {strides = array<i32>} : memref<16x32xf32, #tpu.memory_space<vmem>>, vector<16x32xf32>,
      %c0_84 = arith.constant 0 : index
      %c0_85 = arith.constant 0 : index
      %182 = vector.load %arg9[%c0_84, %c0_85] : memref<32x32xf32, #tpu.memory_space<vmem>>, vector<32x32xf32>
      %cst_86 = arith.constant dense<0.000000e+00> : vector<16x32xf32>
      %183 = tpu.matmul %175, %182, %cst_86 {dimension_numbers = #tpu.dot_dimension_numbers<[1], [0], [0], [1], [0, 0, 1, 1], [], []>} : vector<16x32xf32>, vector<32x32xf32>, vector<16x32xf32> -> vector<16x32xf32>
      %c0_87 = arith.constant 0 : index
      %c0_88 = arith.constant 0 : index
      %184 = vector.load %arg10[%c0_87, %c0_88] : memref<1x32xf32, #tpu.memory_space<vmem>>, vector<1x32xf32>
      %185 = vector.broadcast %184 : vector<1x32xf32> to vector<16x32xf32>
      %186 = arith.addf %183, %185 : vector<16x32xf32>
      %c0_89 = arith.constant 0 : index
      %c0_90 = arith.constant 0 : index
      %187 = vector.load %arg23[%c0_89, %c0_90] : memref<16x32xf32, #tpu.memory_space<vmem>>, vector<16x32xf32>
      tpu.vector_store %arg23[%c0_89, %c0_90], %186 {strides = array<i32>} : memref<16x32xf32, #tpu.memory_space<vmem>>, vector<16x32xf32>,
    } else {
    }
    %c0 = arith.constant 0 : index
    %c0_1 = arith.constant 0 : index
    %c0_2 = arith.constant 0 : index
    %3 = vector.load %arg3[%c0, %c0_1, %c0_2] : memref<1x8x32xf32, #tpu.memory_space<vmem>>, vector<1x8x32xf32>
    %4 = vector.shape_cast %3 : vector<1x8x32xf32> to vector<8x32xf32>
    %c0_3 = arith.constant 0 : index
    %c0_4 = arith.constant 0 : index
    %5 = vector.load %arg5[%c0_3, %c0_4] : memref<32x32xf32, #tpu.memory_space<vmem>>, vector<32x32xf32>
    %cst = arith.constant dense<0.000000e+00> : vector<8x32xf32>
    %6 = tpu.matmul %4, %5, %cst {dimension_numbers = #tpu.dot_dimension_numbers<[1], [0], [0], [1], [0, 0, 1, 1], [], []>} : vector<8x32xf32>, vector<32x32xf32>, vector<8x32xf32> -> vector<8x32xf32>
    %c0_5 = arith.constant 0 : index
    %c0_6 = arith.constant 0 : index
    %7 = vector.load %arg6[%c0_5, %c0_6] : memref<1x32xf32, #tpu.memory_space<vmem>>, vector<1x32xf32>
    %8 = vector.broadcast %7 : vector<1x32xf32> to vector<8x32xf32>
    %9 = arith.addf %6, %8 : vector<8x32xf32>
    %cst_7 = arith.constant 0.353553385 : f32
    %10 = vector.broadcast %cst_7 : f32 to vector<8x32xf32>
    %11 = arith.mulf %9, %10 : vector<8x32xf32>
    %c0_8 = arith.constant 0 : index
    %c0_9 = arith.constant 0 : index
    %12 = vector.load %arg22[%c0_8, %c0_9] : memref<16x32xf32, #tpu.memory_space<vmem>>, vector<16x32xf32>
    %c0_10 = arith.constant 0 : index
    %c0_11 = arith.constant 0 : index
    %13 = vector.load %arg23[%c0_10, %c0_11] : memref<16x32xf32, #tpu.memory_space<vmem>>, vector<16x32xf32>
    %c0_12 = arith.constant 0 : index
    %c0_13 = arith.constant 0 : index
    %c0_14 = arith.constant 0 : index
    %14 = vector.load %arg4[%c0_12, %c0_13, %c0_14] : memref<1x8x16xbf16, #tpu.memory_space<vmem>>, vector<1x8x16xbf16>
    %15 = vector.shape_cast %14 : vector<1x8x16xbf16> to vector<8x16xbf16>
    %16 = arith.extf %15 : vector<8x16xbf16> to vector<8x16xf32>
    %17 = vector.extract_strided_slice %11 {offsets = [0, 0], sizes = [8, 8], strides = [1, 1]} : vector<8x32xf32> to vector<8x8xf32>
    %18 = vector.extract_strided_slice %12 {offsets = [0, 0], sizes = [16, 8], strides = [1, 1]} : vector<16x32xf32> to vector<16x8xf32>
    %cst_15 = arith.constant dense<0.000000e+00> : vector<8x16xf32>
    %19 = tpu.matmul %17, %18, %cst_15 {dimension_numbers = #tpu.dot_dimension_numbers<[1], [1], [0], [0], [0, 0, 1, 0], [], []>} : vector<8x8xf32>, vector<16x8xf32>, vector<8x16xf32> -> vector<8x16xf32>
    %20 = arith.addf %19, %16 : vector<8x16xf32>
    %cst_16 = arith.constant dense<0xFF800000> : vector<8xf32>
    %21 = vector.multi_reduction <maximumf>, %20, %cst_16 [1] : vector<8x16xf32> to vector<8xf32>
    %22 = vector.shape_cast %21 : vector<8xf32> to vector<8x1xf32>
    %23 = vector.broadcast %22 : vector<8x1xf32> to vector<8x16xf32>
    %24 = arith.subf %20, %23 : vector<8x16xf32>
    %25 = math.exp %24 : vector<8x16xf32>
    %cst_17 = arith.constant dense<0.000000e+00> : vector<8xf32>
    %26 = vector.multi_reduction <add>, %25, %cst_17 [1] : vector<8x16xf32> to vector<8xf32>
    %27 = vector.shape_cast %26 : vector<8xf32> to vector<8x1xf32>
    %28 = tpu.reciprocal %27 {approx = true} : vector<8x1xf32> -> vector<8x1xf32>
    %29 = vector.extract_strided_slice %13 {offsets = [0, 0], sizes = [16, 8], strides = [1, 1]} : vector<16x32xf32> to vector<16x8xf32>
    %cst_18 = arith.constant dense<0.000000e+00> : vector<8x8xf32>
    %30 = tpu.matmul %25, %29, %cst_18 {dimension_numbers = #tpu.dot_dimension_numbers<[1], [0], [0], [1], [0, 0, 1, 1], [], []>} : vector<8x16xf32>, vector<16x8xf32>, vector<8x8xf32> -> vector<8x8xf32>
    %31 = vector.broadcast %28 : vector<8x1xf32> to vector<8x8xf32>
    %32 = arith.mulf %30, %31 : vector<8x8xf32>
    %33 = vector.extract_strided_slice %11 {offsets = [0, 8], sizes = [8, 8], strides = [1, 1]} : vector<8x32xf32> to vector<8x8xf32>
    %34 = vector.extract_strided_slice %12 {offsets = [0, 8], sizes = [16, 8], strides = [1, 1]} : vector<16x32xf32> to vector<16x8xf32>
    %cst_19 = arith.constant dense<0.000000e+00> : vector<8x16xf32>
    %35 = tpu.matmul %33, %34, %cst_19 {dimension_numbers = #tpu.dot_dimension_numbers<[1], [1], [0], [0], [0, 0, 1, 0], [], []>} : vector<8x8xf32>, vector<16x8xf32>, vector<8x16xf32> -> vector<8x16xf32>
    %36 = arith.addf %35, %16 : vector<8x16xf32>
    %cst_20 = arith.constant dense<0xFF800000> : vector<8xf32>
    %37 = vector.multi_reduction <maximumf>, %36, %cst_20 [1] : vector<8x16xf32> to vector<8xf32>
    %38 = vector.shape_cast %37 : vector<8xf32> to vector<8x1xf32>
    %39 = vector.broadcast %38 : vector<8x1xf32> to vector<8x16xf32>
    %40 = arith.subf %36, %39 : vector<8x16xf32>
    %41 = math.exp %40 : vector<8x16xf32>
    %cst_21 = arith.constant dense<0.000000e+00> : vector<8xf32>
    %42 = vector.multi_reduction <add>, %41, %cst_21 [1] : vector<8x16xf32> to vector<8xf32>
    %43 = vector.shape_cast %42 : vector<8xf32> to vector<8x1xf32>
    %44 = tpu.reciprocal %43 {approx = true} : vector<8x1xf32> -> vector<8x1xf32>
    %45 = vector.extract_strided_slice %13 {offsets = [0, 8], sizes = [16, 8], strides = [1, 1]} : vector<16x32xf32> to vector<16x8xf32>
    %cst_22 = arith.constant dense<0.000000e+00> : vector<8x8xf32>
    %46 = tpu.matmul %41, %45, %cst_22 {dimension_numbers = #tpu.dot_dimension_numbers<[1], [0], [0], [1], [0, 0, 1, 1], [], []>} : vector<8x16xf32>, vector<16x8xf32>, vector<8x8xf32> -> vector<8x8xf32>
    %47 = vector.broadcast %44 : vector<8x1xf32> to vector<8x8xf32>
    %48 = arith.mulf %46, %47 : vector<8x8xf32>
    %49 = vector.extract_strided_slice %11 {offsets = [0, 16], sizes = [8, 8], strides = [1, 1]} : vector<8x32xf32> to vector<8x8xf32>
    %50 = vector.extract_strided_slice %12 {offsets = [0, 16], sizes = [16, 8], strides = [1, 1]} : vector<16x32xf32> to vector<16x8xf32>
    %cst_23 = arith.constant dense<0.000000e+00> : vector<8x16xf32>
    %51 = tpu.matmul %49, %50, %cst_23 {dimension_numbers = #tpu.dot_dimension_numbers<[1], [1], [0], [0], [0, 0, 1, 0], [], []>} : vector<8x8xf32>, vector<16x8xf32>, vector<8x16xf32> -> vector<8x16xf32>
    %52 = arith.addf %51, %16 : vector<8x16xf32>
    %cst_24 = arith.constant dense<0xFF800000> : vector<8xf32>
    %53 = vector.multi_reduction <maximumf>, %52, %cst_24 [1] : vector<8x16xf32> to vector<8xf32>
    %54 = vector.shape_cast %53 : vector<8xf32> to vector<8x1xf32>
    %55 = vector.broadcast %54 : vector<8x1xf32> to vector<8x16xf32>
    %56 = arith.subf %52, %55 : vector<8x16xf32>
    %57 = math.exp %56 : vector<8x16xf32>
    %cst_25 = arith.constant dense<0.000000e+00> : vector<8xf32>
    %58 = vector.multi_reduction <add>, %57, %cst_25 [1] : vector<8x16xf32> to vector<8xf32>
    %59 = vector.shape_cast %58 : vector<8xf32> to vector<8x1xf32>
    %60 = tpu.reciprocal %59 {approx = true} : vector<8x1xf32> -> vector<8x1xf32>
    %61 = vector.extract_strided_slice %13 {offsets = [0, 16], sizes = [16, 8], strides = [1, 1]} : vector<16x32xf32> to vector<16x8xf32>
    %cst_26 = arith.constant dense<0.000000e+00> : vector<8x8xf32>
    %62 = tpu.matmul %57, %61, %cst_26 {dimension_numbers = #tpu.dot_dimension_numbers<[1], [0], [0], [1], [0, 0, 1, 1], [], []>} : vector<8x16xf32>, vector<16x8xf32>, vector<8x8xf32> -> vector<8x8xf32>
    %63 = vector.broadcast %60 : vector<8x1xf32> to vector<8x8xf32>
    %64 = arith.mulf %62, %63 : vector<8x8xf32>
    %65 = vector.extract_strided_slice %11 {offsets = [0, 24], sizes = [8, 8], strides = [1, 1]} : vector<8x32xf32> to vector<8x8xf32>
    %66 = vector.extract_strided_slice %12 {offsets = [0, 24], sizes = [16, 8], strides = [1, 1]} : vector<16x32xf32> to vector<16x8xf32>
    %cst_27 = arith.constant dense<0.000000e+00> : vector<8x16xf32>
    %67 = tpu.matmul %65, %66, %cst_27 {dimension_numbers = #tpu.dot_dimension_numbers<[1], [1], [0], [0], [0, 0, 1, 0], [], []>} : vector<8x8xf32>, vector<16x8xf32>, vector<8x16xf32> -> vector<8x16xf32>
    %68 = arith.addf %67, %16 : vector<8x16xf32>
    %cst_28 = arith.constant dense<0xFF800000> : vector<8xf32>
    %69 = vector.multi_reduction <maximumf>, %68, %cst_28 [1] : vector<8x16xf32> to vector<8xf32>
    %70 = vector.shape_cast %69 : vector<8xf32> to vector<8x1xf32>
    %71 = vector.broadcast %70 : vector<8x1xf32> to vector<8x16xf32>
    %72 = arith.subf %68, %71 : vector<8x16xf32>
    %73 = math.exp %72 : vector<8x16xf32>
    %cst_29 = arith.constant dense<0.000000e+00> : vector<8xf32>
    %74 = vector.multi_reduction <add>, %73, %cst_29 [1] : vector<8x16xf32> to vector<8xf32>
    %75 = vector.shape_cast %74 : vector<8xf32> to vector<8x1xf32>
    %76 = tpu.reciprocal %75 {approx = true} : vector<8x1xf32> -> vector<8x1xf32>
    %77 = vector.extract_strided_slice %13 {offsets = [0, 24], sizes = [16, 8], strides = [1, 1]} : vector<16x32xf32> to vector<16x8xf32>
    %cst_30 = arith.constant dense<0.000000e+00> : vector<8x8xf32>
    %78 = tpu.matmul %73, %77, %cst_30 {dimension_numbers = #tpu.dot_dimension_numbers<[1], [0], [0], [1], [0, 0, 1, 1], [], []>} : vector<8x16xf32>, vector<16x8xf32>, vector<8x8xf32> -> vector<8x8xf32>
    %79 = vector.broadcast %76 : vector<8x1xf32> to vector<8x8xf32>
    %80 = arith.mulf %78, %79 : vector<8x8xf32>
    %81 = tpu.concatenate %32, %48, %64, %80 in 1 : vector<8x8xf32>, vector<8x8xf32>, vector<8x8xf32>, vector<8x8xf32> -> vector<8x32xf32>
    %c0_31 = arith.constant 0 : index
    %c0_32 = arith.constant 0 : index
    %82 = vector.load %arg11[%c0_31, %c0_32] : memref<32x32xf32, #tpu.memory_space<vmem>>, vector<32x32xf32>
    %cst_33 = arith.constant dense<0.000000e+00> : vector<8x32xf32>
    %83 = tpu.matmul %81, %82, %cst_33 {dimension_numbers = #tpu.dot_dimension_numbers<[1], [0], [0], [1], [0, 0, 1, 1], [], []>} : vector<8x32xf32>, vector<32x32xf32>, vector<8x32xf32> -> vector<8x32xf32>
    %c0_34 = arith.constant 0 : index
    %c0_35 = arith.constant 0 : index
    %84 = vector.load %arg12[%c0_34, %c0_35] : memref<1x32xf32, #tpu.memory_space<vmem>>, vector<1x32xf32>
    %85 = vector.broadcast %84 : vector<1x32xf32> to vector<8x32xf32>
    %86 = arith.addf %83, %85 : vector<8x32xf32>
    %87 = arith.addf %86, %4 : vector<8x32xf32>
    %c0_36 = arith.constant 0 : index
    %c0_37 = arith.constant 0 : index
    %88 = vector.load %arg13[%c0_36, %c0_37] : memref<1x32xf32, #tpu.memory_space<vmem>>, vector<1x32xf32>
    %c0_38 = arith.constant 0 : index
    %c0_39 = arith.constant 0 : index
    %89 = vector.load %arg14[%c0_38, %c0_39] : memref<1x32xf32, #tpu.memory_space<vmem>>, vector<1x32xf32>
    %cst_40 = arith.constant dense<0.000000e+00> : vector<8xf32>
    %90 = vector.multi_reduction <add>, %87, %cst_40 [1] : vector<8x32xf32> to vector<8xf32>
    %91 = vector.shape_cast %90 : vector<8xf32> to vector<8x1xf32>
    %cst_41 = arith.constant 3.200000e+01 : f32
    %92 = vector.broadcast %cst_41 : f32 to vector<8x1xf32>
    %93 = arith.divf %91, %92 : vector<8x1xf32>
    %94 = vector.broadcast %93 : vector<8x1xf32> to vector<8x32xf32>
    %95 = arith.subf %87, %94 : vector<8x32xf32>
    %96 = arith.mulf %95, %95 : vector<8x32xf32>
    %cst_42 = arith.constant dense<0.000000e+00> : vector<8xf32>
    %97 = vector.multi_reduction <add>, %96, %cst_42 [1] : vector<8x32xf32> to vector<8xf32>
    %98 = vector.shape_cast %97 : vector<8xf32> to vector<8x1xf32>
    %cst_43 = arith.constant 3.200000e+01 : f32
    %99 = vector.broadcast %cst_43 : f32 to vector<8x1xf32>
    %100 = arith.divf %98, %99 : vector<8x1xf32>
    %101 = vector.broadcast %93 : vector<8x1xf32> to vector<8x32xf32>
    %102 = arith.subf %87, %101 : vector<8x32xf32>
    %cst_44 = arith.constant 9.99999996E-13 : f32
    %103 = vector.broadcast %cst_44 : f32 to vector<8x1xf32>
    %104 = arith.addf %100, %103 : vector<8x1xf32>
    %105 = math.rsqrt %104 : vector<8x1xf32>
    %106 = vector.broadcast %105 : vector<8x1xf32> to vector<8x32xf32>
    %107 = arith.mulf %102, %106 : vector<8x32xf32>
    %108 = vector.broadcast %88 : vector<1x32xf32> to vector<8x32xf32>
    %109 = arith.mulf %107, %108 : vector<8x32xf32>
    %110 = vector.broadcast %89 : vector<1x32xf32> to vector<8x32xf32>
    %111 = arith.addf %109, %110 : vector<8x32xf32>
    %cst_45 = arith.constant 0.000000e+00 : f32
    %112 = vector.broadcast %cst_45 : f32 to vector<8x32xf32>
    %c0_i32_46 = arith.constant 0 : i32
    %c64_i32 = arith.constant 64 : i32
    %113 = arith.muli %c0_i32_46, %c64_i32 : i32
    %114 = tpu.assume_multiple %113, 64 : i32
    %115 = arith.index_cast %114 : i32 to index
    %c0_47 = arith.constant 0 : index
    %116 = vector.load %arg15[%115, %c0_47] : memref<128x32xf32, #tpu.memory_space<vmem>>, vector<64x32xf32>
    %117 = arith.index_cast %c0_i32_46 : i32 to index
    %c0_48 = arith.constant 0 : index
    %118 = vector.load %arg16[%117, %c0_48] : memref<2x64xf32, #tpu.memory_space<vmem>>, vector<1x64xf32>
    %cst_49 = arith.constant dense<0.000000e+00> : vector<8x64xf32>
    %119 = tpu.matmul %86, %116, %cst_49 {dimension_numbers = #tpu.dot_dimension_numbers<[1], [1], [0], [0], [0, 0, 1, 0], [], []>} : vector<8x32xf32>, vector<64x32xf32>, vector<8x64xf32> -> vector<8x64xf32>
    %120 = vector.broadcast %118 : vector<1x64xf32> to vector<8x64xf32>
    %121 = arith.addf %119, %120 : vector<8x64xf32>
    %cst_50 = arith.constant 0.000000e+00 : f32
    %122 = vector.broadcast %cst_50 : f32 to vector<8x64xf32>
    %123 = arith.maximumf %121, %122 : vector<8x64xf32>
    %124 = arith.index_cast %114 : i32 to index
    %c0_51 = arith.constant 0 : index
    %125 = vector.load %arg17[%124, %c0_51] : memref<128x32xf32, #tpu.memory_space<vmem>>, vector<64x32xf32>
    %cst_52 = arith.constant dense<0.000000e+00> : vector<8x32xf32>
    %126 = tpu.matmul %123, %125, %cst_52 {dimension_numbers = #tpu.dot_dimension_numbers<[1], [0], [0], [1], [0, 0, 1, 1], [], []>} : vector<8x64xf32>, vector<64x32xf32>, vector<8x32xf32> -> vector<8x32xf32>
    %127 = arith.addf %112, %126 : vector<8x32xf32>
    %c1_i32 = arith.constant 1 : i32
    %c64_i32_53 = arith.constant 64 : i32
    %128 = arith.muli %c1_i32, %c64_i32_53 : i32
    %129 = tpu.assume_multiple %128, 64 : i32
    %130 = arith.index_cast %129 : i32 to index
    %c0_54 = arith.constant 0 : index
    %131 = vector.load %arg15[%130, %c0_54] : memref<128x32xf32, #tpu.memory_space<vmem>>, vector<64x32xf32>
    %132 = arith.index_cast %c1_i32 : i32 to index
    %c0_55 = arith.constant 0 : index
    %133 = vector.load %arg16[%132, %c0_55] : memref<2x64xf32, #tpu.memory_space<vmem>>, vector<1x64xf32>
    %cst_56 = arith.constant dense<0.000000e+00> : vector<8x64xf32>
    %134 = tpu.matmul %86, %131, %cst_56 {dimension_numbers = #tpu.dot_dimension_numbers<[1], [1], [0], [0], [0, 0, 1, 0], [], []>} : vector<8x32xf32>, vector<64x32xf32>, vector<8x64xf32> -> vector<8x64xf32>
    %135 = vector.broadcast %133 : vector<1x64xf32> to vector<8x64xf32>
    %136 = arith.addf %134, %135 : vector<8x64xf32>
    %cst_57 = arith.constant 0.000000e+00 : f32
    %137 = vector.broadcast %cst_57 : f32 to vector<8x64xf32>
    %138 = arith.maximumf %136, %137 : vector<8x64xf32>
    %139 = arith.index_cast %129 : i32 to index
    %c0_58 = arith.constant 0 : index
    %140 = vector.load %arg17[%139, %c0_58] : memref<128x32xf32, #tpu.memory_space<vmem>>, vector<64x32xf32>
    %cst_59 = arith.constant dense<0.000000e+00> : vector<8x32xf32>
    %141 = tpu.matmul %138, %140, %cst_59 {dimension_numbers = #tpu.dot_dimension_numbers<[1], [0], [0], [1], [0, 0, 1, 1], [], []>} : vector<8x64xf32>, vector<64x32xf32>, vector<8x32xf32> -> vector<8x32xf32>
    %142 = arith.addf %127, %141 : vector<8x32xf32>
    %c2_i32 = arith.constant 2 : i32
    %c0_60 = arith.constant 0 : index
    %c0_61 = arith.constant 0 : index
    %143 = vector.load %arg18[%c0_60, %c0_61] : memref<1x32xf32, #tpu.memory_space<vmem>>, vector<1x32xf32>
    %144 = vector.broadcast %143 : vector<1x32xf32> to vector<8x32xf32>
    %145 = arith.addf %142, %144 : vector<8x32xf32>
    %146 = arith.addf %145, %111 : vector<8x32xf32>
    %c0_62 = arith.constant 0 : index
    %c0_63 = arith.constant 0 : index
    %147 = vector.load %arg19[%c0_62, %c0_63] : memref<1x32xf32, #tpu.memory_space<vmem>>, vector<1x32xf32>
    %c0_64 = arith.constant 0 : index
    %c0_65 = arith.constant 0 : index
    %148 = vector.load %arg20[%c0_64, %c0_65] : memref<1x32xf32, #tpu.memory_space<vmem>>, vector<1x32xf32>
    %cst_66 = arith.constant dense<0.000000e+00> : vector<8xf32>
    %149 = vector.multi_reduction <add>, %146, %cst_66 [1] : vector<8x32xf32> to vector<8xf32>
    %150 = vector.shape_cast %149 : vector<8xf32> to vector<8x1xf32>
    %cst_67 = arith.constant 3.200000e+01 : f32
    %151 = vector.broadcast %cst_67 : f32 to vector<8x1xf32>
    %152 = arith.divf %150, %151 : vector<8x1xf32>
    %153 = vector.broadcast %152 : vector<8x1xf32> to vector<8x32xf32>
    %154 = arith.subf %146, %153 : vector<8x32xf32>
    %155 = arith.mulf %154, %154 : vector<8x32xf32>
    %cst_68 = arith.constant dense<0.000000e+00> : vector<8xf32>
    %156 = vector.multi_reduction <add>, %155, %cst_68 [1] : vector<8x32xf32> to vector<8xf32>
    %157 = vector.shape_cast %156 : vector<8xf32> to vector<8x1xf32>
    %cst_69 = arith.constant 3.200000e+01 : f32
    %158 = vector.broadcast %cst_69 : f32 to vector<8x1xf32>
    %159 = arith.divf %157, %158 : vector<8x1xf32>
    %160 = vector.broadcast %152 : vector<8x1xf32> to vector<8x32xf32>
    %161 = arith.subf %146, %160 : vector<8x32xf32>
    %cst_70 = arith.constant 9.99999996E-13 : f32
    %162 = vector.broadcast %cst_70 : f32 to vector<8x1xf32>
    %163 = arith.addf %159, %162 : vector<8x1xf32>
    %164 = math.rsqrt %163 : vector<8x1xf32>
    %165 = vector.broadcast %164 : vector<8x1xf32> to vector<8x32xf32>
    %166 = arith.mulf %161, %165 : vector<8x32xf32>
    %167 = vector.broadcast %147 : vector<1x32xf32> to vector<8x32xf32>
    %168 = arith.mulf %166, %167 : vector<8x32xf32>
    %169 = vector.broadcast %148 : vector<1x32xf32> to vector<8x32xf32>
    %170 = arith.addf %168, %169 : vector<8x32xf32>
    %c0_71 = arith.constant 0 : index
    %c0_72 = arith.constant 0 : index
    %c0_73 = arith.constant 0 : index
    %171 = vector.load %arg21[%c0_71, %c0_72, %c0_73] : memref<1x8x32xf32, #tpu.memory_space<vmem>>, vector<1x8x32xf32>
    %172 = vector.shape_cast %171 : vector<1x8x32xf32> to vector<8x32xf32>
    %173 = vector.shape_cast %170 : vector<8x32xf32> to vector<1x8x32xf32>
    tpu.vector_store %arg21[%c0_71, %c0_72, %c0_73], %173 {strides = array<i32>} : memref<1x8x32xf32, #tpu.memory_space<vmem>>, vector<1x8x32xf32>,
    return
  }
  func.func @transform_0(%arg0: i32, %arg1: i32) -> (i32, i32, i32) {
    %c0_i32 = arith.constant 0 : i32
    %c0_i32_0 = arith.constant 0 : i32
    %c0_i32_1 = arith.constant 0 : i32
    return %arg0, %c0_i32, %c0_i32_0 : i32, i32, i32
  }
  func.func @transform_1(%arg0: i32, %arg1: i32) -> (i32, i32, i32) {
    %c0_i32 = arith.constant 0 : i32
    %c0_i32_0 = arith.constant 0 : i32
    return %arg0, %arg1, %c0_i32 : i32, i32, i32
  }
  func.func @transform_2(%arg0: i32, %arg1: i32) -> (i32, i32, i32) {
    %c0_i32 = arith.constant 0 : i32
    %c0_i32_0 = arith.constant 0 : i32
    return %arg0, %arg1, %c0_i32 : i32, i32, i32
  }
  func.func @transform_3(%arg0: i32, %arg1: i32) -> (i32, i32) {
    %c0_i32 = arith.constant 0 : i32
    %c0_i32_0 = arith.constant 0 : i32
    %c0_i32_1 = arith.constant 0 : i32
    return %c0_i32, %c0_i32_0 : i32, i32
  }
  func.func @transform_4(%arg0: i32, %arg1: i32) -> (i32, i32) {
    %c0_i32 = arith.constant 0 : i32
    %c0_i32_0 = arith.constant 0 : i32
    %c0_i32_1 = arith.constant 0 : i32
    return %c0_i32, %c0_i32_0 : i32, i32
  }
  func.func @transform_5(%arg0: i32, %arg1: i32) -> (i32, i32) {
    %c0_i32 = arith.constant 0 : i32
    %c0_i32_0 = arith.constant 0 : i32
    %c0_i32_1 = arith.constant 0 : i32
    return %c0_i32, %c0_i32_0 : i32, i32
  }
  func.func @transform_6(%arg0: i32, %arg1: i32) -> (i32, i32) {
    %c0_i32 = arith.constant 0 : i32
    %c0_i32_0 = arith.constant 0 : i32
    %c0_i32_1 = arith.constant 0 : i32
    return %c0_i32, %c0_i32_0 : i32, i32
  }
  func.func @transform_7(%arg0: i32, %arg1: i32) -> (i32, i32) {
    %c0_i32 = arith.constant 0 : i32
    %c0_i32_0 = arith.constant 0 : i32
    %c0_i32_1 = arith.constant 0 : i32
    return %c0_i32, %c0_i32_0 : i32, i32
  }
  func.func @transform_8(%arg0: i32, %arg1: i32) -> (i32, i32) {
    %c0_i32 = arith.constant 0 : i32
    %c0_i32_0 = arith.constant 0 : i32
    %c0_i32_1 = arith.constant 0 : i32
    return %c0_i32, %c0_i32_0 : i32, i32
  }
  func.func @transform_9(%arg0: i32, %arg1: i32) -> (i32, i32) {
    %c0_i32 = arith.constant 0 : i32
    %c0_i32_0 = arith.constant 0 : i32
    %c0_i32_1 = arith.constant 0 : i32
    return %c0_i32, %c0_i32_0 : i32, i32
  }
  func.func @transform_10(%arg0: i32, %arg1: i32) -> (i32, i32) {
    %c0_i32 = arith.constant 0 : i32
    %c0_i32_0 = arith.constant 0 : i32
    %c0_i32_1 = arith.constant 0 : i32
    return %c0_i32, %c0_i32_0 : i32, i32
  }
  func.func @transform_11(%arg0: i32, %arg1: i32) -> (i32, i32) {
    %c0_i32 = arith.constant 0 : i32
    %c0_i32_0 = arith.constant 0 : i32
    %c0_i32_1 = arith.constant 0 : i32
    return %c0_i32, %c0_i32_0 : i32, i32
  }
  func.func @transform_12(%arg0: i32, %arg1: i32) -> (i32, i32) {
    %c0_i32 = arith.constant 0 : i32
    %c0_i32_0 = arith.constant 0 : i32
    %c0_i32_1 = arith.constant 0 : i32
    return %c0_i32, %c0_i32_0 : i32, i32
  }
  func.func @transform_13(%arg0: i32, %arg1: i32) -> (i32, i32) {
    %c0_i32 = arith.constant 0 : i32
    %c0_i32_0 = arith.constant 0 : i32
    %c0_i32_1 = arith.constant 0 : i32
    return %c0_i32, %c0_i32_0 : i32, i32
  }
  func.func @transform_14(%arg0: i32, %arg1: i32) -> (i32, i32) {
    %c0_i32 = arith.constant 0 : i32
    %c0_i32_0 = arith.constant 0 : i32
    %c0_i32_1 = arith.constant 0 : i32
    return %c0_i32, %c0_i32_0 : i32, i32
  }
  func.func @transform_15(%arg0: i32, %arg1: i32) -> (i32, i32) {
    %c0_i32 = arith.constant 0 : i32
    %c0_i32_0 = arith.constant 0 : i32
    %c0_i32_1 = arith.constant 0 : i32
    return %c0_i32, %c0_i32_0 : i32, i32
  }
  func.func @transform_16(%arg0: i32, %arg1: i32) -> (i32, i32) {
    %c0_i32 = arith.constant 0 : i32
    %c0_i32_0 = arith.constant 0 : i32
    %c0_i32_1 = arith.constant 0 : i32
    return %c0_i32, %c0_i32_0 : i32, i32
  }
  func.func @transform_17(%arg0: i32, %arg1: i32) -> (i32, i32) {
    %c0_i32 = arith.constant 0 : i32
    %c0_i32_0 = arith.constant 0 : i32
    %c0_i32_1 = arith.constant 0 : i32
    return %c0_i32, %c0_i32_0 : i32, i32
  }
  func.func @transform_18(%arg0: i32, %arg1: i32) -> (i32, i32) {
    %c0_i32 = arith.constant 0 : i32
    %c0_i32_0 = arith.constant 0 : i32
    %c0_i32_1 = arith.constant 0 : i32
    return %c0_i32, %c0_i32_0 : i32, i32
  }
  func.func @transform_19(%arg0: i32, %arg1: i32) -> (i32, i32, i32) {
    %c0_i32 = arith.constant 0 : i32
    %c0_i32_0 = arith.constant 0 : i32
    return %arg0, %arg1, %c0_i32 : i32, i32, i32
  }
}

module attributes {stable_mosaic.version = 11 : i64} {
  func.func @encoder_layer_kernel(%arg0: i32, %arg1: i32, %arg2: memref<1x16x32xf32, #tpu.memory_space<vmem>>, %arg3: memref<1x8x32xf32, #tpu.memory_space<vmem>>, %arg4: memref<1x8x16xbf16, #tpu.memory_space<vmem>>, %arg5: memref<32x32xf32, #tpu.memory_space<vmem>>, %arg6: memref<1x32xf32, #tpu.memory_space<vmem>>, %arg7: memref<32x32xf32, #tpu.memory_space<vmem>>, %arg8: memref<1x32xf32, #tpu.memory_space<vmem>>, %arg9: memref<32x32xf32, #tpu.memory_space<vmem>>, %arg10: memref<1x32xf32, #tpu.memory_space<vmem>>, %arg11: memref<32x32xf32, #tpu.memory_space<vmem>>, %arg12: memref<1x32xf32, #tpu.memory_space<vmem>>, %arg13: memref<1x32xf32, #tpu.memory_space<vmem>>, %arg14: memref<1x32xf32, #tpu.memory_space<vmem>>, %arg15: memref<128x32xf32, #tpu.memory_space<vmem>>, %arg16: memref<2x64xf32, #tpu.memory_space<vmem>>, %arg17: memref<128x32xf32, #tpu.memory_space<vmem>>, %arg18: memref<1x32xf32, #tpu.memory_space<vmem>>, %arg19: memref<1x32xf32, #tpu.memory_space<vmem>>, %arg20: memref<1x32xf32, #tpu.memory_space<vmem>>, %arg21: memref<1x8x32xf32, #tpu.memory_space<vmem>>, %arg22: memref<16x32xf32, #tpu.memory_space<vmem>>, %arg23: memref<16x32xf32, #tpu.memory_space<vmem>>) attributes {dimension_semantics = [#tpu.dimension_semantics<parallel>, #tpu.dimension_semantics<arbitrary>], iteration_bounds = array<i64: 2, 2>, scalar_prefetch = 0 : i64, scratch_operands = 2 : i64, tpu.core_type = #tpu.core_type<tc>, window_params = [{transform_indices = @transform_0, window_bounds = array<i64: 1, 16, 32>}, {transform_indices = @transform_1, window_bounds = array<i64: 1, 8, 32>}, {transform_indices = @transform_2, window_bounds = array<i64: 1, 8, 16>}, {pipeline_mode = #tpu.pipeline_mode<synchronous>, transform_indices = @transform_3, window_bounds = array<i64: 32, 32>}, {pipeline_mode = #tpu.pipeline_mode<synchronous>, transform_indices = @transform_4, window_bounds = array<i64: 1, 32>}, {pipeline_mode = #tpu.pipeline_mode<synchronous>, transform_indices = @transform_5, window_bounds = array<i64: 32, 32>}, {pipeline_mode = #tpu.pipeline_mode<synchronous>, transform_indices = @transform_6, window_bounds = array<i64: 1, 32>}, {pipeline_mode = #tpu.pipeline_mode<synchronous>, transform_indices = @transform_7, window_bounds = array<i64: 32, 32>}, {pipeline_mode = #tpu.pipeline_mode<synchronous>, transform_indices = @transform_8, window_bounds = array<i64: 1, 32>}, {pipeline_mode = #tpu.pipeline_mode<synchronous>, transform_indices = @transform_9, window_bounds = array<i64: 32, 32>}, {pipeline_mode = #tpu.pipeline_mode<synchronous>, transform_indices = @transform_10, window_bounds = array<i64: 1, 32>}, {pipeline_mode = #tpu.pipeline_mode<synchronous>, transform_indices = @transform_11, window_bounds = array<i64: 1, 32>}, {pipeline_mode = #tpu.pipeline_mode<synchronous>, transform_indices = @transform_12, window_bounds = array<i64: 1, 32>}, {pipeline_mode = #tpu.pipeline_mode<synchronous>, transform_indices = @transform_13, window_bounds = array<i64: 128, 32>}, {pipeline_mode = #tpu.pipeline_mode<synchronous>, transform_indices = @transform_14, window_bounds = array<i64: 2, 64>}, {pipeline_mode = #tpu.pipeline_mode<synchronous>, transform_indices = @transform_15, window_bounds = array<i64: 128, 32>}, {pipeline_mode = #tpu.pipeline_mode<synchronous>, transform_indices = @transform_16, window_bounds = array<i64: 1, 32>}, {pipeline_mode = #tpu.pipeline_mode<synchronous>, transform_indices = @transform_17, window_bounds = array<i64: 1, 32>}, {pipeline_mode = #tpu.pipeline_mode<synchronous>, transform_indices = @transform_18, window_bounds = array<i64: 1, 32>}, {transform_indices = @transform_19, window_bounds = array<i64: 1, 8, 32>}]} {
    %c0_i32 = arith.constant 0 : i32
    %0 = arith.cmpi eq, %arg1, %c0_i32 : i32
    %1 = arith.extui %0 : i1 to i32
    %c0_i32_0 = arith.constant 0 : i32
    %2 = arith.cmpi ne, %1, %c0_i32_0 : i32
    scf.if %2 {
      %c0_74 = arith.constant 0 : index
      %c0_75 = arith.constant 0 : index
      %c0_76 = arith.constant 0 : index
      %174 = vector.load %arg2[%c0_74, %c0_75, %c0_76] : memref<1x16x32xf32, #tpu.memory_space<vmem>>, vector<1x16x32xf32>
      %175 = vector.shape_cast %174 : vector<1x16x32xf32> to vector<16x32xf32>
      %c0_77 = arith.constant 0 : index
      %c0_78 = arith.constant 0 : index
      %176 = vector.load %arg7[%c0_77, %c0_78] : memref<32x32xf32, #tpu.memory_space<vmem>>, vector<32x32xf32>
      %cst_79 = arith.constant dense<0.000000e+00> : vector<16x32xf32>
      %177 = tpu.matmul %175, %176, %cst_79 {dimension_numbers = #tpu.dot_dimension_numbers<[1], [0], [0], [1], [0, 0, 1, 1], [], []>} : vector<16x32xf32>, vector<32x32xf32>, vector<16x32xf32> -> vector<16x32xf32>
      %c0_80 = arith.constant 0 : index
      %c0_81 = arith.constant 0 : index
      %178 = vector.load %arg8[%c0_80, %c0_81] : memref<1x32xf32, #tpu.memory_space<vmem>>, vector<1x32xf32>
      %179 = vector.broadcast %178 : vector<1x32xf32> to vector<16x32xf32>
      %180 = arith.addf %177, %179 : vector<16x32xf32>
      %c0_82 = arith.constant 0 : index
      %c0_83 = arith.constant 0 : index
      %181 = vector.load %arg22[%c0_82, %c0_83] : memref<16x32xf32, #tpu.memory_space<vmem>>, vector<16x32xf32>
      tpu.vector_store %arg22[%c0_82, %c0_83], %180 {strides = array<i32>} : memref<16x32xf32, #tpu.memory_space<vmem>>, vector<16x32xf32>,
      %c0_84 = arith.constant 0 : index
      %c0_85 = arith.constant 0 : index
      %182 = vector.load %arg9[%c0_84, %c0_85] : memref<32x32xf32, #tpu.memory_space<vmem>>, vector<32x32xf32>
      %cst_86 = arith.constant dense<0.000000e+00> : vector<16x32xf32>
      %183 = tpu.matmul %175, %182, %cst_86 {dimension_numbers = #tpu.dot_dimension_numbers<[1], [0], [0], [1], [0, 0, 1, 1], [], []>} : vector<16x32xf32>, vector<32x32xf32>, vector<16x32xf32> -> vector<16x32xf32>
      %c0_87 = arith.constant 0 : index
      %c0_88 = arith.constant 0 : index
      %184 = vector.load %arg10[%c0_87, %c0_88] : memref<1x32xf32, #tpu.memory_space<vmem>>, vector<1x32xf32>
      %185 = vector.broadcast %184 : vector<1x32xf32> to vector<16x32xf32>
      %186 = arith.addf %183, %185 : vector<16x32xf32>
      %c0_89 = arith.constant 0 : index
      %c0_90 = arith.constant 0 : index
      %187 = vector.load %arg23[%c0_89, %c0_90] : memref<16x32xf32, #tpu.memory_space<vmem>>, vector<16x32xf32>
      tpu.vector_store %arg23[%c0_89, %c0_90], %186 {strides = array<i32>} : memref<16x32xf32, #tpu.memory_space<vmem>>, vector<16x32xf32>,
    } else {
    }
    %c0 = arith.constant 0 : index
    %c0_1 = arith.constant 0 : index
    %c0_2 = arith.constant 0 : index
    %3 = vector.load %arg3[%c0, %c0_1, %c0_2] : memref<1x8x32xf32, #tpu.memory_space<vmem>>, vector<1x8x32xf32>
    %4 = vector.shape_cast %3 : vector<1x8x32xf32> to vector<8x32xf32>
    %c0_3 = arith.constant 0 : index
    %c0_4 = arith.constant 0 : index
    %5 = vector.load %arg5[%c0_3, %c0_4] : memref<32x32xf32, #tpu.memory_space<vmem>>, vector<32x32xf32>
    %cst = arith.constant dense<0.000000e+00> : vector<8x32xf32>
    %6 = tpu.matmul %4, %5, %cst {dimension_numbers = #tpu.dot_dimension_numbers<[1], [0], [0], [1], [0, 0, 1, 1], [], []>} : vector<8x32xf32>, vector<32x32xf32>, vector<8x32xf32> -> vector<8x32xf32>
    %c0_5 = arith.constant 0 : index
    %c0_6 = arith.constant 0 : index
    %7 = vector.load %arg6[%c0_5, %c0_6] : memref<1x32xf32, #tpu.memory_space<vmem>>, vector<1x32xf32>
    %8 = vector.broadcast %7 : vector<1x32xf32> to vector<8x32xf32>
    %9 = arith.addf %6, %8 : vector<8x32xf32>
    %cst_7 = arith.constant 0.353553385 : f32
    %10 = vector.broadcast %cst_7 : f32 to vector<8x32xf32>
    %11 = arith.mulf %9, %10 : vector<8x32xf32>
    %c0_8 = arith.constant 0 : index
    %c0_9 = arith.constant 0 : index
    %12 = vector.load %arg22[%c0_8, %c0_9] : memref<16x32xf32, #tpu.memory_space<vmem>>, vector<16x32xf32>
    %c0_10 = arith.constant 0 : index
    %c0_11 = arith.constant 0 : index
    %13 = vector.load %arg23[%c0_10, %c0_11] : memref<16x32xf32, #tpu.memory_space<vmem>>, vector<16x32xf32>
    %c0_12 = arith.constant 0 : index
    %c0_13 = arith.constant 0 : index
    %c0_14 = arith.constant 0 : index
    %14 = vector.load %arg4[%c0_12, %c0_13, %c0_14] : memref<1x8x16xbf16, #tpu.memory_space<vmem>>, vector<1x8x16xbf16>
    %15 = vector.shape_cast %14 : vector<1x8x16xbf16> to vector<8x16xbf16>
    %16 = arith.extf %15 : vector<8x16xbf16> to vector<8x16xf32>
    %17 = vector.extract_strided_slice %11 {offsets = [0, 0], sizes = [8, 8], strides = [1, 1]} : vector<8x32xf32> to vector<8x8xf32>
    %18 = vector.extract_strided_slice %12 {offsets = [0, 0], sizes = [16, 8], strides = [1, 1]} : vector<16x32xf32> to vector<16x8xf32>
    %cst_15 = arith.constant dense<0.000000e+00> : vector<8x16xf32>
    %19 = tpu.matmul %17, %18, %cst_15 {dimension_numbers = #tpu.dot_dimension_numbers<[1], [1], [0], [0], [0, 0, 1, 0], [], []>} : vector<8x8xf32>, vector<16x8xf32>, vector<8x16xf32> -> vector<8x16xf32>
    %20 = arith.addf %19, %16 : vector<8x16xf32>
    %cst_16 = arith.constant dense<0xFF800000> : vector<8xf32>
    %21 = vector.multi_reduction <maximumf>, %20, %cst_16 [1] : vector<8x16xf32> to vector<8xf32>
    %22 = vector.shape_cast %21 : vector<8xf32> to vector<8x1xf32>
    %23 = vector.broadcast %22 : vector<8x1xf32> to vector<8x16xf32>
    %24 = arith.subf %20, %23 : vector<8x16xf32>
    %25 = math.exp %24 : vector<8x16xf32>
    %cst_17 = arith.constant dense<0.000000e+00> : vector<8xf32>
    %26 = vector.multi_reduction <add>, %25, %cst_17 [1] : vector<8x16xf32> to vector<8xf32>
    %27 = vector.shape_cast %26 : vector<8xf32> to vector<8x1xf32>
    %28 = tpu.reciprocal %27 {approx = true} : vector<8x1xf32> -> vector<8x1xf32>
    %29 = vector.extract_strided_slice %13 {offsets = [0, 0], sizes = [16, 8], strides = [1, 1]} : vector<16x32xf32> to vector<16x8xf32>
    %cst_18 = arith.constant dense<0.000000e+00> : vector<8x8xf32>
    %30 = tpu.matmul %25, %29, %cst_18 {dimension_numbers = #tpu.dot_dimension_numbers<[1], [0], [0], [1], [0, 0, 1, 1], [], []>} : vector<8x16xf32>, vector<16x8xf32>, vector<8x8xf32> -> vector<8x8xf32>
    %31 = vector.broadcast %28 : vector<8x1xf32> to vector<8x8xf32>
    %32 = arith.mulf %30, %31 : vector<8x8xf32>
    %33 = vector.extract_strided_slice %11 {offsets = [0, 8], sizes = [8, 8], strides = [1, 1]} : vector<8x32xf32> to vector<8x8xf32>
    %34 = vector.extract_strided_slice %12 {offsets = [0, 8], sizes = [16, 8], strides = [1, 1]} : vector<16x32xf32> to vector<16x8xf32>
    %cst_19 = arith.constant dense<0.000000e+00> : vector<8x16xf32>
    %35 = tpu.matmul %33, %34, %cst_19 {dimension_numbers = #tpu.dot_dimension_numbers<[1], [1], [0], [0], [0, 0, 1, 0], [], []>} : vector<8x8xf32>, vector<16x8xf32>, vector<8x16xf32> -> vector<8x16xf32>
    %36 = arith.addf %35, %16 : vector<8x16xf32>
    %cst_20 = arith.constant dense<0xFF800000> : vector<8xf32>
    %37 = vector.multi_reduction <maximumf>, %36, %cst_20 [1] : vector<8x16xf32> to vector<8xf32>
    %38 = vector.shape_cast %37 : vector<8xf32> to vector<8x1xf32>
    %39 = vector.broadcast %38 : vector<8x1xf32> to vector<8x16xf32>
    %40 = arith.subf %36, %39 : vector<8x16xf32>
    %41 = math.exp %40 : vector<8x16xf32>
    %cst_21 = arith.constant dense<0.000000e+00> : vector<8xf32>
    %42 = vector.multi_reduction <add>, %41, %cst_21 [1] : vector<8x16xf32> to vector<8xf32>
    %43 = vector.shape_cast %42 : vector<8xf32> to vector<8x1xf32>
    %44 = tpu.reciprocal %43 {approx = true} : vector<8x1xf32> -> vector<8x1xf32>
    %45 = vector.extract_strided_slice %13 {offsets = [0, 8], sizes = [16, 8], strides = [1, 1]} : vector<16x32xf32> to vector<16x8xf32>
    %cst_22 = arith.constant dense<0.000000e+00> : vector<8x8xf32>
    %46 = tpu.matmul %41, %45, %cst_22 {dimension_numbers = #tpu.dot_dimension_numbers<[1], [0], [0], [1], [0, 0, 1, 1], [], []>} : vector<8x16xf32>, vector<16x8xf32>, vector<8x8xf32> -> vector<8x8xf32>
    %47 = vector.broadcast %44 : vector<8x1xf32> to vector<8x8xf32>
    %48 = arith.mulf %46, %47 : vector<8x8xf32>
    %49 = vector.extract_strided_slice %11 {offsets = [0, 16], sizes = [8, 8], strides = [1, 1]} : vector<8x32xf32> to vector<8x8xf32>
    %50 = vector.extract_strided_slice %12 {offsets = [0, 16], sizes = [16, 8], strides = [1, 1]} : vector<16x32xf32> to vector<16x8xf32>
    %cst_23 = arith.constant dense<0.000000e+00> : vector<8x16xf32>
    %51 = tpu.matmul %49, %50, %cst_23 {dimension_numbers = #tpu.dot_dimension_numbers<[1], [1], [0], [0], [0, 0, 1, 0], [], []>} : vector<8x8xf32>, vector<16x8xf32>, vector<8x16xf32> -> vector<8x16xf32>
    %52 = arith.addf %51, %16 : vector<8x16xf32>
    %cst_24 = arith.constant dense<0xFF800000> : vector<8xf32>
    %53 = vector.multi_reduction <maximumf>, %52, %cst_24 [1] : vector<8x16xf32> to vector<8xf32>
    %54 = vector.shape_cast %53 : vector<8xf32> to vector<8x1xf32>
    %55 = vector.broadcast %54 : vector<8x1xf32> to vector<8x16xf32>
    %56 = arith.subf %52, %55 : vector<8x16xf32>
    %57 = math.exp %56 : vector<8x16xf32>
    %cst_25 = arith.constant dense<0.000000e+00> : vector<8xf32>
    %58 = vector.multi_reduction <add>, %57, %cst_25 [1] : vector<8x16xf32> to vector<8xf32>
    %59 = vector.shape_cast %58 : vector<8xf32> to vector<8x1xf32>
    %60 = tpu.reciprocal %59 {approx = true} : vector<8x1xf32> -> vector<8x1xf32>
    %61 = vector.extract_strided_slice %13 {offsets = [0, 16], sizes = [16, 8], strides = [1, 1]} : vector<16x32xf32> to vector<16x8xf32>
    %cst_26 = arith.constant dense<0.000000e+00> : vector<8x8xf32>
    %62 = tpu.matmul %57, %61, %cst_26 {dimension_numbers = #tpu.dot_dimension_numbers<[1], [0], [0], [1], [0, 0, 1, 1], [], []>} : vector<8x16xf32>, vector<16x8xf32>, vector<8x8xf32> -> vector<8x8xf32>
    %63 = vector.broadcast %60 : vector<8x1xf32> to vector<8x8xf32>
    %64 = arith.mulf %62, %63 : vector<8x8xf32>
    %65 = vector.extract_strided_slice %11 {offsets = [0, 24], sizes = [8, 8], strides = [1, 1]} : vector<8x32xf32> to vector<8x8xf32>
    %66 = vector.extract_strided_slice %12 {offsets = [0, 24], sizes = [16, 8], strides = [1, 1]} : vector<16x32xf32> to vector<16x8xf32>
    %cst_27 = arith.constant dense<0.000000e+00> : vector<8x16xf32>
    %67 = tpu.matmul %65, %66, %cst_27 {dimension_numbers = #tpu.dot_dimension_numbers<[1], [1], [0], [0], [0, 0, 1, 0], [], []>} : vector<8x8xf32>, vector<16x8xf32>, vector<8x16xf32> -> vector<8x16xf32>
    %68 = arith.addf %67, %16 : vector<8x16xf32>
    %cst_28 = arith.constant dense<0xFF800000> : vector<8xf32>
    %69 = vector.multi_reduction <maximumf>, %68, %cst_28 [1] : vector<8x16xf32> to vector<8xf32>
    %70 = vector.shape_cast %69 : vector<8xf32> to vector<8x1xf32>
    %71 = vector.broadcast %70 : vector<8x1xf32> to vector<8x16xf32>
    %72 = arith.subf %68, %71 : vector<8x16xf32>
    %73 = math.exp %72 : vector<8x16xf32>
    %cst_29 = arith.constant dense<0.000000e+00> : vector<8xf32>
    %74 = vector.multi_reduction <add>, %73, %cst_29 [1] : vector<8x16xf32> to vector<8xf32>
    %75 = vector.shape_cast %74 : vector<8xf32> to vector<8x1xf32>
    %76 = tpu.reciprocal %75 {approx = true} : vector<8x1xf32> -> vector<8x1xf32>
    %77 = vector.extract_strided_slice %13 {offsets = [0, 24], sizes = [16, 8], strides = [1, 1]} : vector<16x32xf32> to vector<16x8xf32>
    %cst_30 = arith.constant dense<0.000000e+00> : vector<8x8xf32>
    %78 = tpu.matmul %73, %77, %cst_30 {dimension_numbers = #tpu.dot_dimension_numbers<[1], [0], [0], [1], [0, 0, 1, 1], [], []>} : vector<8x16xf32>, vector<16x8xf32>, vector<8x8xf32> -> vector<8x8xf32>
    %79 = vector.broadcast %76 : vector<8x1xf32> to vector<8x8xf32>
    %80 = arith.mulf %78, %79 : vector<8x8xf32>
    %81 = tpu.concatenate %32, %48, %64, %80 in 1 : vector<8x8xf32>, vector<8x8xf32>, vector<8x8xf32>, vector<8x8xf32> -> vector<8x32xf32>
    %c0_31 = arith.constant 0 : index
    %c0_32 = arith.constant 0 : index
    %82 = vector.load %arg11[%c0_31, %c0_32] : memref<32x32xf32, #tpu.memory_space<vmem>>, vector<32x32xf32>
    %cst_33 = arith.constant dense<0.000000e+00> : vector<8x32xf32>
    %83 = tpu.matmul %81, %82, %cst_33 {dimension_numbers = #tpu.dot_dimension_numbers<[1], [0], [0], [1], [0, 0, 1, 1], [], []>} : vector<8x32xf32>, vector<32x32xf32>, vector<8x32xf32> -> vector<8x32xf32>
    %c0_34 = arith.constant 0 : index
    %c0_35 = arith.constant 0 : index
    %84 = vector.load %arg12[%c0_34, %c0_35] : memref<1x32xf32, #tpu.memory_space<vmem>>, vector<1x32xf32>
    %85 = vector.broadcast %84 : vector<1x32xf32> to vector<8x32xf32>
    %86 = arith.addf %83, %85 : vector<8x32xf32>
    %87 = arith.addf %86, %4 : vector<8x32xf32>
    %c0_36 = arith.constant 0 : index
    %c0_37 = arith.constant 0 : index
    %88 = vector.load %arg13[%c0_36, %c0_37] : memref<1x32xf32, #tpu.memory_space<vmem>>, vector<1x32xf32>
    %c0_38 = arith.constant 0 : index
    %c0_39 = arith.constant 0 : index
    %89 = vector.load %arg14[%c0_38, %c0_39] : memref<1x32xf32, #tpu.memory_space<vmem>>, vector<1x32xf32>
    %cst_40 = arith.constant dense<0.000000e+00> : vector<8xf32>
    %90 = vector.multi_reduction <add>, %87, %cst_40 [1] : vector<8x32xf32> to vector<8xf32>
    %91 = vector.shape_cast %90 : vector<8xf32> to vector<8x1xf32>
    %cst_41 = arith.constant 3.200000e+01 : f32
    %92 = vector.broadcast %cst_41 : f32 to vector<8x1xf32>
    %93 = arith.divf %91, %92 : vector<8x1xf32>
    %94 = vector.broadcast %93 : vector<8x1xf32> to vector<8x32xf32>
    %95 = arith.subf %87, %94 : vector<8x32xf32>
    %96 = arith.mulf %95, %95 : vector<8x32xf32>
    %cst_42 = arith.constant dense<0.000000e+00> : vector<8xf32>
    %97 = vector.multi_reduction <add>, %96, %cst_42 [1] : vector<8x32xf32> to vector<8xf32>
    %98 = vector.shape_cast %97 : vector<8xf32> to vector<8x1xf32>
    %cst_43 = arith.constant 3.200000e+01 : f32
    %99 = vector.broadcast %cst_43 : f32 to vector<8x1xf32>
    %100 = arith.divf %98, %99 : vector<8x1xf32>
    %101 = vector.broadcast %93 : vector<8x1xf32> to vector<8x32xf32>
    %102 = arith.subf %87, %101 : vector<8x32xf32>
    %cst_44 = arith.constant 9.99999996E-13 : f32
    %103 = vector.broadcast %cst_44 : f32 to vector<8x1xf32>
    %104 = arith.addf %100, %103 : vector<8x1xf32>
    %105 = math.rsqrt %104 : vector<8x1xf32>
    %106 = vector.broadcast %105 : vector<8x1xf32> to vector<8x32xf32>
    %107 = arith.mulf %102, %106 : vector<8x32xf32>
    %108 = vector.broadcast %88 : vector<1x32xf32> to vector<8x32xf32>
    %109 = arith.mulf %107, %108 : vector<8x32xf32>
    %110 = vector.broadcast %89 : vector<1x32xf32> to vector<8x32xf32>
    %111 = arith.addf %109, %110 : vector<8x32xf32>
    %cst_45 = arith.constant 0.000000e+00 : f32
    %112 = vector.broadcast %cst_45 : f32 to vector<8x32xf32>
    %c0_i32_46 = arith.constant 0 : i32
    %c64_i32 = arith.constant 64 : i32
    %113 = arith.muli %c0_i32_46, %c64_i32 : i32
    %114 = tpu.assume_multiple %113, 64 : i32
    %115 = arith.index_cast %114 : i32 to index
    %c0_47 = arith.constant 0 : index
    %116 = vector.load %arg15[%115, %c0_47] : memref<128x32xf32, #tpu.memory_space<vmem>>, vector<64x32xf32>
    %117 = arith.index_cast %c0_i32_46 : i32 to index
    %c0_48 = arith.constant 0 : index
    %118 = vector.load %arg16[%117, %c0_48] : memref<2x64xf32, #tpu.memory_space<vmem>>, vector<1x64xf32>
    %cst_49 = arith.constant dense<0.000000e+00> : vector<8x64xf32>
    %119 = tpu.matmul %86, %116, %cst_49 {dimension_numbers = #tpu.dot_dimension_numbers<[1], [1], [0], [0], [0, 0, 1, 0], [], []>} : vector<8x32xf32>, vector<64x32xf32>, vector<8x64xf32> -> vector<8x64xf32>
    %120 = vector.broadcast %118 : vector<1x64xf32> to vector<8x64xf32>
    %121 = arith.addf %119, %120 : vector<8x64xf32>
    %cst_50 = arith.constant 0.000000e+00 : f32
    %122 = vector.broadcast %cst_50 : f32 to vector<8x64xf32>
    %123 = arith.maximumf %121, %122 : vector<8x64xf32>
    %124 = arith.index_cast %114 : i32 to index
    %c0_51 = arith.constant 0 : index
    %125 = vector.load %arg17[%124, %c0_51] : memref<128x32xf32, #tpu.memory_space<vmem>>, vector<64x32xf32>
    %cst_52 = arith.constant dense<0.000000e+00> : vector<8x32xf32>
    %126 = tpu.matmul %123, %125, %cst_52 {dimension_numbers = #tpu.dot_dimension_numbers<[1], [0], [0], [1], [0, 0, 1, 1], [], []>} : vector<8x64xf32>, vector<64x32xf32>, vector<8x32xf32> -> vector<8x32xf32>
    %127 = arith.addf %112, %126 : vector<8x32xf32>
    %c1_i32 = arith.constant 1 : i32
    %c64_i32_53 = arith.constant 64 : i32
    %128 = arith.muli %c1_i32, %c64_i32_53 : i32
    %129 = tpu.assume_multiple %128, 64 : i32
    %130 = arith.index_cast %129 : i32 to index
    %c0_54 = arith.constant 0 : index
    %131 = vector.load %arg15[%130, %c0_54] : memref<128x32xf32, #tpu.memory_space<vmem>>, vector<64x32xf32>
    %132 = arith.index_cast %c1_i32 : i32 to index
    %c0_55 = arith.constant 0 : index
    %133 = vector.load %arg16[%132, %c0_55] : memref<2x64xf32, #tpu.memory_space<vmem>>, vector<1x64xf32>
    %cst_56 = arith.constant dense<0.000000e+00> : vector<8x64xf32>
    %134 = tpu.matmul %86, %131, %cst_56 {dimension_numbers = #tpu.dot_dimension_numbers<[1], [1], [0], [0], [0, 0, 1, 0], [], []>} : vector<8x32xf32>, vector<64x32xf32>, vector<8x64xf32> -> vector<8x64xf32>
    %135 = vector.broadcast %133 : vector<1x64xf32> to vector<8x64xf32>
    %136 = arith.addf %134, %135 : vector<8x64xf32>
    %cst_57 = arith.constant 0.000000e+00 : f32
    %137 = vector.broadcast %cst_57 : f32 to vector<8x64xf32>
    %138 = arith.maximumf %136, %137 : vector<8x64xf32>
    %139 = arith.index_cast %129 : i32 to index
    %c0_58 = arith.constant 0 : index
    %140 = vector.load %arg17[%139, %c0_58] : memref<128x32xf32, #tpu.memory_space<vmem>>, vector<64x32xf32>
    %cst_59 = arith.constant dense<0.000000e+00> : vector<8x32xf32>
    %141 = tpu.matmul %138, %140, %cst_59 {dimension_numbers = #tpu.dot_dimension_numbers<[1], [0], [0], [1], [0, 0, 1, 1], [], []>} : vector<8x64xf32>, vector<64x32xf32>, vector<8x32xf32> -> vector<8x32xf32>
    %142 = arith.addf %127, %141 : vector<8x32xf32>
    %c2_i32 = arith.constant 2 : i32
    %c0_60 = arith.constant 0 : index
    %c0_61 = arith.constant 0 : index
    %143 = vector.load %arg18[%c0_60, %c0_61] : memref<1x32xf32, #tpu.memory_space<vmem>>, vector<1x32xf32>
    %144 = vector.broadcast %143 : vector<1x32xf32> to vector<8x32xf32>
    %145 = arith.addf %142, %144 : vector<8x32xf32>
    %146 = arith.addf %145, %111 : vector<8x32xf32>
    %c0_62 = arith.constant 0 : index
    %c0_63 = arith.constant 0 : index
    %147 = vector.load %arg19[%c0_62, %c0_63] : memref<1x32xf32, #tpu.memory_space<vmem>>, vector<1x32xf32>
    %c0_64 = arith.constant 0 : index
    %c0_65 = arith.constant 0 : index
    %148 = vector.load %arg20[%c0_64, %c0_65] : memref<1x32xf32, #tpu.memory_space<vmem>>, vector<1x32xf32>
    %cst_66 = arith.constant dense<0.000000e+00> : vector<8xf32>
    %149 = vector.multi_reduction <add>, %146, %cst_66 [1] : vector<8x32xf32> to vector<8xf32>
    %150 = vector.shape_cast %149 : vector<8xf32> to vector<8x1xf32>
    %cst_67 = arith.constant 3.200000e+01 : f32
    %151 = vector.broadcast %cst_67 : f32 to vector<8x1xf32>
    %152 = arith.divf %150, %151 : vector<8x1xf32>
    %153 = vector.broadcast %152 : vector<8x1xf32> to vector<8x32xf32>
    %154 = arith.subf %146, %153 : vector<8x32xf32>
    %155 = arith.mulf %154, %154 : vector<8x32xf32>
    %cst_68 = arith.constant dense<0.000000e+00> : vector<8xf32>
    %156 = vector.multi_reduction <add>, %155, %cst_68 [1] : vector<8x32xf32> to vector<8xf32>
    %157 = vector.shape_cast %156 : vector<8xf32> to vector<8x1xf32>
    %cst_69 = arith.constant 3.200000e+01 : f32
    %158 = vector.broadcast %cst_69 : f32 to vector<8x1xf32>
    %159 = arith.divf %157, %158 : vector<8x1xf32>
    %160 = vector.broadcast %152 : vector<8x1xf32> to vector<8x32xf32>
    %161 = arith.subf %146, %160 : vector<8x32xf32>
    %cst_70 = arith.constant 9.99999996E-13 : f32
    %162 = vector.broadcast %cst_70 : f32 to vector<8x1xf32>
    %163 = arith.addf %159, %162 : vector<8x1xf32>
    %164 = math.rsqrt %163 : vector<8x1xf32>
    %165 = vector.broadcast %164 : vector<8x1xf32> to vector<8x32xf32>
    %166 = arith.mulf %161, %165 : vector<8x32xf32>
    %167 = vector.broadcast %147 : vector<1x32xf32> to vector<8x32xf32>
    %168 = arith.mulf %166, %167 : vector<8x32xf32>
    %169 = vector.broadcast %148 : vector<1x32xf32> to vector<8x32xf32>
    %170 = arith.addf %168, %169 : vector<8x32xf32>
    %c0_71 = arith.constant 0 : index
    %c0_72 = arith.constant 0 : index
    %c0_73 = arith.constant 0 : index
    %171 = vector.load %arg21[%c0_71, %c0_72, %c0_73] : memref<1x8x32xf32, #tpu.memory_space<vmem>>, vector<1x8x32xf32>
    %172 = vector.shape_cast %171 : vector<1x8x32xf32> to vector<8x32xf32>
    %173 = vector.shape_cast %170 : vector<8x32xf32> to vector<1x8x32xf32>
    tpu.vector_store %arg21[%c0_71, %c0_72, %c0_73], %173 {strides = array<i32>} : memref<1x8x32xf32, #tpu.memory_space<vmem>>, vector<1x8x32xf32>,
    return
  }
  func.func @transform_0(%arg0: i32, %arg1: i32) -> (i32, i32, i32) {
    %c0_i32 = arith.constant 0 : i32
    %c0_i32_0 = arith.constant 0 : i32
    %c0_i32_1 = arith.constant 0 : i32
    return %arg0, %c0_i32, %c0_i32_0 : i32, i32, i32
  }
  func.func @transform_1(%arg0: i32, %arg1: i32) -> (i32, i32, i32) {
    %c0_i32 = arith.constant 0 : i32
    %c0_i32_0 = arith.constant 0 : i32
    return %arg0, %arg1, %c0_i32 : i32, i32, i32
  }
  func.func @transform_2(%arg0: i32, %arg1: i32) -> (i32, i32, i32) {
    %c0_i32 = arith.constant 0 : i32
    %c0_i32_0 = arith.constant 0 : i32
    return %arg0, %arg1, %c0_i32 : i32, i32, i32
  }
  func.func @transform_3(%arg0: i32, %arg1: i32) -> (i32, i32) {
    %c0_i32 = arith.constant 0 : i32
    %c0_i32_0 = arith.constant 0 : i32
    %c0_i32_1 = arith.constant 0 : i32
    return %c0_i32, %c0_i32_0 : i32, i32
  }
  func.func @transform_4(%arg0: i32, %arg1: i32) -> (i32, i32) {
    %c0_i32 = arith.constant 0 : i32
    %c0_i32_0 = arith.constant 0 : i32
    %c0_i32_1 = arith.constant 0 : i32
    return %c0_i32, %c0_i32_0 : i32, i32
  }
  func.func @transform_5(%arg0: i32, %arg1: i32) -> (i32, i32) {
    %c0_i32 = arith.constant 0 : i32
    %c0_i32_0 = arith.constant 0 : i32
    %c0_i32_1 = arith.constant 0 : i32
    return %c0_i32, %c0_i32_0 : i32, i32
  }
  func.func @transform_6(%arg0: i32, %arg1: i32) -> (i32, i32) {
    %c0_i32 = arith.constant 0 : i32
    %c0_i32_0 = arith.constant 0 : i32
    %c0_i32_1 = arith.constant 0 : i32
    return %c0_i32, %c0_i32_0 : i32, i32
  }
  func.func @transform_7(%arg0: i32, %arg1: i32) -> (i32, i32) {
    %c0_i32 = arith.constant 0 : i32
    %c0_i32_0 = arith.constant 0 : i32
    %c0_i32_1 = arith.constant 0 : i32
    return %c0_i32, %c0_i32_0 : i32, i32
  }
  func.func @transform_8(%arg0: i32, %arg1: i32) -> (i32, i32) {
    %c0_i32 = arith.constant 0 : i32
    %c0_i32_0 = arith.constant 0 : i32
    %c0_i32_1 = arith.constant 0 : i32
    return %c0_i32, %c0_i32_0 : i32, i32
  }
  func.func @transform_9(%arg0: i32, %arg1: i32) -> (i32, i32) {
    %c0_i32 = arith.constant 0 : i32
    %c0_i32_0 = arith.constant 0 : i32
    %c0_i32_1 = arith.constant 0 : i32
    return %c0_i32, %c0_i32_0 : i32, i32
  }
  func.func @transform_10(%arg0: i32, %arg1: i32) -> (i32, i32) {
    %c0_i32 = arith.constant 0 : i32
    %c0_i32_0 = arith.constant 0 : i32
    %c0_i32_1 = arith.constant 0 : i32
    return %c0_i32, %c0_i32_0 : i32, i32
  }
  func.func @transform_11(%arg0: i32, %arg1: i32) -> (i32, i32) {
    %c0_i32 = arith.constant 0 : i32
    %c0_i32_0 = arith.constant 0 : i32
    %c0_i32_1 = arith.constant 0 : i32
    return %c0_i32, %c0_i32_0 : i32, i32
  }
  func.func @transform_12(%arg0: i32, %arg1: i32) -> (i32, i32) {
    %c0_i32 = arith.constant 0 : i32
    %c0_i32_0 = arith.constant 0 : i32
    %c0_i32_1 = arith.constant 0 : i32
    return %c0_i32, %c0_i32_0 : i32, i32
  }
  func.func @transform_13(%arg0: i32, %arg1: i32) -> (i32, i32) {
    %c0_i32 = arith.constant 0 : i32
    %c0_i32_0 = arith.constant 0 : i32
    %c0_i32_1 = arith.constant 0 : i32
    return %c0_i32, %c0_i32_0 : i32, i32
  }
  func.func @transform_14(%arg0: i32, %arg1: i32) -> (i32, i32) {
    %c0_i32 = arith.constant 0 : i32
    %c0_i32_0 = arith.constant 0 : i32
    %c0_i32_1 = arith.constant 0 : i32
    return %c0_i32, %c0_i32_0 : i32, i32
  }
  func.func @transform_15(%arg0: i32, %arg1: i32) -> (i32, i32) {
    %c0_i32 = arith.constant 0 : i32
    %c0_i32_0 = arith.constant 0 : i32
    %c0_i32_1 = arith.constant 0 : i32
    return %c0_i32, %c0_i32_0 : i32, i32
  }
  func.func @transform_16(%arg0: i32, %arg1: i32) -> (i32, i32) {
    %c0_i32 = arith.constant 0 : i32
    %c0_i32_0 = arith.constant 0 : i32
    %c0_i32_1 = arith.constant 0 : i32
    return %c0_i32, %c0_i32_0 : i32, i32
  }
  func.func @transform_17(%arg0: i32, %arg1: i32) -> (i32, i32) {
    %c0_i32 = arith.constant 0 : i32
    %c0_i32_0 = arith.constant 0 : i32
    %c0_i32_1 = arith.constant 0 : i32
    return %c0_i32, %c0_i32_0 : i32, i32
  }
  func.func @transform_18(%arg0: i32, %arg1: i32) -> (i32, i32) {
    %c0_i32 = arith.constant 0 : i32
    %c0_i32_0 = arith.constant 0 : i32
    %c0_i32_1 = arith.constant 0 : i32
    return %c0_i32, %c0_i32_0 : i32, i32
  }
  func.func @transform_19(%arg0: i32, %arg1: i32) -> (i32, i32, i32) {
    %c0_i32 = arith.constant 0 : i32
    %c0_i32_0 = arith.constant 0 : i32
    return %arg0, %arg1, %c0_i32 : i32, i32, i32
  }
}

</mosaic_0001>

<llo_original>
// kernel: tpu_custom_call.1
$region0: #{tpu_custom_call.1}
  #allocation0 [shape = 'u32[]', space=smem, size = 0x4, offset = 0x4, fixed_abs, tag = 'smem constant byte address 0x4 - core index']
  #allocation1 [shape = 'u32[72,128]{1,0:T(1,128)}', space=vmem, size = 0x9000, scoped, tag = 'internal scratch']
  #allocation2 [shape = 'f32[16,32]{1,0:T(8,128)}', space=vmem, size = 0x2000, scoped, tag = 'scratch operand']
  #allocation3 [shape = 'f32[16,32]{1,0:T(8,128)}', space=vmem, size = 0x2000, scoped, tag = 'scratch operand']
  %s0 = inlined_call_operand.vmem [shape: f32[2,16,32], index: 0, kind: input, shape index: {}]
  %s1 = inlined_call_operand.vmem [shape: f32[2,16,32], index: 1, kind: input, shape index: {}]
  %s2 = inlined_call_operand.vmem [shape: bf16[2,16,16], index: 2, kind: input, shape index: {}]
  %s3 = inlined_call_operand.vmem [shape: f32[32,32], index: 3, kind: input, shape index: {}]
  %s4 = inlined_call_operand.vmem [shape: f32[1,32], index: 4, kind: input, shape index: {}]
  %s5 = inlined_call_operand.vmem [shape: f32[32,32], index: 5, kind: input, shape index: {}]
  %s6 = inlined_call_operand.vmem [shape: f32[1,32], index: 6, kind: input, shape index: {}]
  %s7 = inlined_call_operand.vmem [shape: f32[32,32], index: 7, kind: input, shape index: {}]
  %s8 = inlined_call_operand.vmem [shape: f32[1,32], index: 8, kind: input, shape index: {}]
  %s9 = inlined_call_operand.vmem [shape: f32[32,32], index: 9, kind: input, shape index: {}]
  %s10 = inlined_call_operand.vmem [shape: f32[1,32], index: 10, kind: input, shape index: {}]
  %s11 = inlined_call_operand.vmem [shape: f32[1,32], index: 11, kind: input, shape index: {}]
  %s12 = inlined_call_operand.vmem [shape: f32[1,32], index: 12, kind: input, shape index: {}]
  %s13 = inlined_call_operand.vmem [shape: f32[128,32], index: 13, kind: input, shape index: {}]
  %s14 = inlined_call_operand.vmem [shape: f32[2,64], index: 14, kind: input, shape index: {}]
  %s15 = inlined_call_operand.vmem [shape: f32[128,32], index: 15, kind: input, shape index: {}]
  %s16 = inlined_call_operand.vmem [shape: f32[1,32], index: 16, kind: input, shape index: {}]
  %s17 = inlined_call_operand.vmem [shape: f32[1,32], index: 17, kind: input, shape index: {}]
  %s18 = inlined_call_operand.vmem [shape: f32[1,32], index: 18, kind: input, shape index: {}]
  %s19 = inlined_call_operand.hbm [shape: f32[2,16,32], index: 19, kind: output, shape index: {}]
  %s20 = sld [smem:[#allocation0]]
  $region113: #{tpu_custom_call.1} parent=0
    _
  %s22 = ssub.s32 1, %s20
  %s23 = scalar_select 0, %s22, %s20
  $region1: #{tpu_custom_call.1} parent=0
    #allocation4 [shape = 'u8[8192]{0}', space=vmem, size = 0x2000, scoped, tag = 'output window, operand 0']
    #allocation5 [shape = 's32[2]{0}', space=sflag, size = 0x8, scoped, tag = 'scoped memory for tpu_custom_call.1']
    %24 = vsyncpa [#allocation5], 0
    %s25 = scalar_lea.sflag [#allocation5], 1
    %26 = vsyncpa %s25, 0
    loop: start=0, step=1, limit=6
    $region2: #{tpu_custom_call.1} parent=1 // loop_pre_header
      _
    $region3: #{tpu_custom_call.1} parent=1 // loop_header
      %s28 = sphi 0, %s32
      %p29 = scmp.ge.s32.totalorder %s28, 6
      %s35 = sphi 0, %s47
      %s36 = sphi 0, %s43
      %s37 = sphi 0, %s35
      %s38 = sphi 0, %s36
      %s39 = sphi 0, %s37
      %s40 = sphi 0, %s38
      %s50 = sphi 0, %s52
      %s53 = sphi 0, %s50
      %s54 = sphi 0, %s53
      %s70 = sphi 0, %s54
      %s78 = sphi 0, %s80
      %s81 = sphi 0, %s78
      %s82 = sphi 0, %s81
      %s98 = sphi 0, %s82
      %s106 = sphi 0, %s108
      %s109 = sphi 0, %s106
      %s110 = sphi 0, %s109
      %s126 = sphi 0, %s110
      %s130 = sphi 0, %s130
      %s132 = sphi 0, %s130
      %s133 = sphi 0, %s132
      %s147 = sphi 0, %s133
      %s151 = sphi 0, %s151
      %s153 = sphi 0, %s151
      %s154 = sphi 0, %s153
      %s168 = sphi 0, %s154
      %s172 = sphi 0, %s172
      %s174 = sphi 0, %s172
      %s175 = sphi 0, %s174
      %s189 = sphi 0, %s175
      %s193 = sphi 0, %s193
      %s195 = sphi 0, %s193
      %s196 = sphi 0, %s195
      %s210 = sphi 0, %s196
      %s214 = sphi 0, %s214
      %s216 = sphi 0, %s214
      %s217 = sphi 0, %s216
      %s231 = sphi 0, %s217
      %s235 = sphi 0, %s235
      %s237 = sphi 0, %s235
      %s238 = sphi 0, %s237
      %s252 = sphi 0, %s238
      %s256 = sphi 0, %s256
      %s258 = sphi 0, %s256
      %s259 = sphi 0, %s258
      %s273 = sphi 0, %s259
      %s277 = sphi 0, %s277
      %s279 = sphi 0, %s277
      %s280 = sphi 0, %s279
      %s294 = sphi 0, %s280
      %s298 = sphi 0, %s298
      %s300 = sphi 0, %s298
      %s301 = sphi 0, %s300
      %s315 = sphi 0, %s301
      %s319 = sphi 0, %s319
      %s321 = sphi 0, %s319
      %s322 = sphi 0, %s321
      %s336 = sphi 0, %s322
      %s340 = sphi 0, %s340
      %s342 = sphi 0, %s340
      %s343 = sphi 0, %s342
      %s357 = sphi 0, %s343
      %s361 = sphi 0, %s361
      %s363 = sphi 0, %s361
      %s364 = sphi 0, %s363
      %s378 = sphi 0, %s364
      %s382 = sphi 0, %s382
      %s384 = sphi 0, %s382
      %s385 = sphi 0, %s384
      %s399 = sphi 0, %s385
      %s403 = sphi 0, %s403
      %s405 = sphi 0, %s403
      %s406 = sphi 0, %s405
      %s420 = sphi 0, %s406
      %s424 = sphi 0, %s424
      %s426 = sphi 0, %s424
      %s427 = sphi 0, %s426
      %s441 = sphi 0, %s427
      %s445 = sphi 0, %s445
      %s447 = sphi 0, %s445
      %s448 = sphi 0, %s447
      %s462 = sphi 0, %s448
      %s470 = sphi 0, %s472
      %s473 = sphi 0, %s470
      %s474 = sphi 0, %s473
      %s490 = sphi 0, %s474
    $region4: #{tpu_custom_call.1} parent=1 // loop_header_branch
      %31 = sbr.rel (%p29) target = $region8
    $region5: #{tpu_custom_call.1} parent=1 // loop_body
      %s33 = ssub.s32 %s28, 1
      %s34 = ssub.s32 %s28, 2
      %s41 = sadd.s32 1, %s36
      %p42 = scmp.ge.s32.totalorder %s41, 2
      %s43 = scalar_select %p42, 0, %s41
      %s44 = sadd.s32 1, %s35
      %s45 = scalar_select %p42, %s44, %s35
      %p46 = scmp.ge.s32.totalorder %s45, 2
      %s47 = scalar_select %p46, 0, %s45
      %s48 = ssub.s32 %s35, %s47
      %p49 = scmp.eq.s32.totalorder %s48, 0
      %s51 = sadd.s32 %s50, 1
      %s52 = scalar_select %p49, %s50, %s51
      %p55 = pneg %p49
      %p56 = scmp.eq.s32.totalorder %s28, 3
      %p57 = por %p55, %p56
      %p58 = scmp.ne.s32.totalorder %s50, %s53
      %p59 = scmp.eq.s32.totalorder %s28, 0
      %p60 = por %p58, %p59
      %p61 = scmp.ne.s32.totalorder %s50, %s53
      %p62 = scmp.eq.s32.totalorder %s33, 3
      %p63 = por %p61, %p62
      %p64 = scmp.ne.s32.totalorder %s53, %s54
      %p65 = scmp.eq.s32.totalorder %s33, 0
      %p66 = por %p64, %p65
      %p67 = scmp.ne.s32.totalorder %s53, %s54
      %p68 = scmp.eq.s32.totalorder %s34, 3
      %p69 = por %p67, %p68
      %p71 = scmp.ne.s32.totalorder %s54, %s70
      %p72 = scmp.eq.s32.totalorder %s34, 0
      %p73 = por %p71, %p72
      %s74 = ssub.s32 %s35, %s47
      %s75 = ssub.s32 %s36, %s43
      %s76 = sor.u32 %s74, %s75
      %p77 = scmp.eq.s32.totalorder %s76, 0
      %s79 = sadd.s32 %s78, 1
      %s80 = scalar_select %p77, %s78, %s79
      %p83 = pneg %p77
      %p84 = scmp.eq.s32.totalorder %s28, 3
      %p85 = por %p83, %p84
      %p86 = scmp.ne.s32.totalorder %s78, %s81
      %p87 = scmp.eq.s32.totalorder %s28, 0
      %p88 = por %p86, %p87
      %p89 = scmp.ne.s32.totalorder %s78, %s81
      %p90 = scmp.eq.s32.totalorder %s33, 3
      %p91 = por %p89, %p90
      %p92 = scmp.ne.s32.totalorder %s81, %s82
      %p93 = scmp.eq.s32.totalorder %s33, 0
      %p94 = por %p92, %p93
      %p95 = scmp.ne.s32.totalorder %s81, %s82
      %p96 = scmp.eq.s32.totalorder %s34, 3
      %p97 = por %p95, %p96
      %p99 = scmp.ne.s32.totalorder %s82, %s98
      %p100 = scmp.eq.s32.totalorder %s34, 0
      %p101 = por %p99, %p100
      %s102 = ssub.s32 %s35, %s47
      %s103 = ssub.s32 %s36, %s43
      %s104 = sor.u32 %s102, %s103
      %p105 = scmp.eq.s32.totalorder %s104, 0
      %s107 = sadd.s32 %s106, 1
      %s108 = scalar_select %p105, %s106, %s107
      %p111 = pneg %p105
      %p112 = scmp.eq.s32.totalorder %s28, 3
      %p113 = por %p111, %p112
      %p114 = scmp.ne.s32.totalorder %s106, %s109
      %p115 = scmp.eq.s32.totalorder %s28, 0
      %p116 = por %p114, %p115
      %p117 = scmp.ne.s32.totalorder %s106, %s109
      %p118 = scmp.eq.s32.totalorder %s33, 3
      %p119 = por %p117, %p118
      %p120 = scmp.ne.s32.totalorder %s109, %s110
      %p121 = scmp.eq.s32.totalorder %s33, 0
      %p122 = por %p120, %p121
      %p123 = scmp.ne.s32.totalorder %s109, %s110
      %p124 = scmp.eq.s32.totalorder %s34, 3
      %p125 = por %p123, %p124
      %p127 = scmp.ne.s32.totalorder %s110, %s126
      %p128 = scmp.eq.s32.totalorder %s34, 0
      %p129 = por %p127, %p128
      %s131 = sadd.s32 %s130, 1
      %p134 = scmp.eq.s32.totalorder %s28, 3
      %p135 = scmp.ne.s32.totalorder %s130, %s132
      %p136 = scmp.eq.s32.totalorder %s28, 0
      %p137 = por %p135, %p136
      %p138 = scmp.ne.s32.totalorder %s130, %s132
      %p139 = scmp.eq.s32.totalorder %s33, 3
      %p140 = por %p138, %p139
      %p141 = scmp.ne.s32.totalorder %s132, %s133
      %p142 = scmp.eq.s32.totalorder %s33, 0
      %p143 = por %p141, %p142
      %p144 = scmp.ne.s32.totalorder %s132, %s133
      %p145 = scmp.eq.s32.totalorder %s34, 3
      %p146 = por %p144, %p145
      %p148 = scmp.ne.s32.totalorder %s133, %s147
      %p149 = scmp.eq.s32.totalorder %s34, 0
      %p150 = por %p148, %p149
      %s152 = sadd.s32 %s151, 1
      %p155 = scmp.eq.s32.totalorder %s28, 3
      %p156 = scmp.ne.s32.totalorder %s151, %s153
      %p157 = scmp.eq.s32.totalorder %s28, 0
      %p158 = por %p156, %p157
      %p159 = scmp.ne.s32.totalorder %s151, %s153
      %p160 = scmp.eq.s32.totalorder %s33, 3
      %p161 = por %p159, %p160
      %p162 = scmp.ne.s32.totalorder %s153, %s154
      %p163 = scmp.eq.s32.totalorder %s33, 0
      %p164 = por %p162, %p163
      %p165 = scmp.ne.s32.totalorder %s153, %s154
      %p166 = scmp.eq.s32.totalorder %s34, 3
      %p167 = por %p165, %p166
      %p169 = scmp.ne.s32.totalorder %s154, %s168
      %p170 = scmp.eq.s32.totalorder %s34, 0
      %p171 = por %p169, %p170
      %s173 = sadd.s32 %s172, 1
      %p176 = scmp.eq.s32.totalorder %s28, 3
      %p177 = scmp.ne.s32.totalorder %s172, %s174
      %p178 = scmp.eq.s32.totalorder %s28, 0
      %p179 = por %p177, %p178
      %p180 = scmp.ne.s32.totalorder %s172, %s174
      %p181 = scmp.eq.s32.totalorder %s33, 3
      %p182 = por %p180, %p181
      %p183 = scmp.ne.s32.totalorder %s174, %s175
      %p184 = scmp.eq.s32.totalorder %s33, 0
      %p185 = por %p183, %p184
      %p186 = scmp.ne.s32.totalorder %s174, %s175
      %p187 = scmp.eq.s32.totalorder %s34, 3
      %p188 = por %p186, %p187
      %p190 = scmp.ne.s32.totalorder %s175, %s189
      %p191 = scmp.eq.s32.totalorder %s34, 0
      %p192 = por %p190, %p191
      %s194 = sadd.s32 %s193, 1
      %p197 = scmp.eq.s32.totalorder %s28, 3
      %p198 = scmp.ne.s32.totalorder %s193, %s195
      %p199 = scmp.eq.s32.totalorder %s28, 0
      %p200 = por %p198, %p199
      %p201 = scmp.ne.s32.totalorder %s193, %s195
      %p202 = scmp.eq.s32.totalorder %s33, 3
      %p203 = por %p201, %p202
      %p204 = scmp.ne.s32.totalorder %s195, %s196
      %p205 = scmp.eq.s32.totalorder %s33, 0
      %p206 = por %p204, %p205
      %p207 = scmp.ne.s32.totalorder %s195, %s196
      %p208 = scmp.eq.s32.totalorder %s34, 3
      %p209 = por %p207, %p208
      %p211 = scmp.ne.s32.totalorder %s196, %s210
      %p212 = scmp.eq.s32.totalorder %s34, 0
      %p213 = por %p211, %p212
      %s215 = sadd.s32 %s214, 1
      %p218 = scmp.eq.s32.totalorder %s28, 3
      %p219 = scmp.ne.s32.totalorder %s214, %s216
      %p220 = scmp.eq.s32.totalorder %s28, 0
      %p221 = por %p219, %p220
      %p222 = scmp.ne.s32.totalorder %s214, %s216
      %p223 = scmp.eq.s32.totalorder %s33, 3
      %p224 = por %p222, %p223
      %p225 = scmp.ne.s32.totalorder %s216, %s217
      %p226 = scmp.eq.s32.totalorder %s33, 0
      %p227 = por %p225, %p226
      %p228 = scmp.ne.s32.totalorder %s216, %s217
      %p229 = scmp.eq.s32.totalorder %s34, 3
      %p230 = por %p228, %p229
      %p232 = scmp.ne.s32.totalorder %s217, %s231
      %p233 = scmp.eq.s32.totalorder %s34, 0
      %p234 = por %p232, %p233
      %s236 = sadd.s32 %s235, 1
      %p239 = scmp.eq.s32.totalorder %s28, 3
      %p240 = scmp.ne.s32.totalorder %s235, %s237
      %p241 = scmp.eq.s32.totalorder %s28, 0
      %p242 = por %p240, %p241
      %p243 = scmp.ne.s32.totalorder %s235, %s237
      %p244 = scmp.eq.s32.totalorder %s33, 3
      %p245 = por %p243, %p244
      %p246 = scmp.ne.s32.totalorder %s237, %s238
      %p247 = scmp.eq.s32.totalorder %s33, 0
      %p248 = por %p246, %p247
      %p249 = scmp.ne.s32.totalorder %s237, %s238
      %p250 = scmp.eq.s32.totalorder %s34, 3
      %p251 = por %p249, %p250
      %p253 = scmp.ne.s32.totalorder %s238, %s252
      %p254 = scmp.eq.s32.totalorder %s34, 0
      %p255 = por %p253, %p254
      %s257 = sadd.s32 %s256, 1
      %p260 = scmp.eq.s32.totalorder %s28, 3
      %p261 = scmp.ne.s32.totalorder %s256, %s258
      %p262 = scmp.eq.s32.totalorder %s28, 0
      %p263 = por %p261, %p262
      %p264 = scmp.ne.s32.totalorder %s256, %s258
      %p265 = scmp.eq.s32.totalorder %s33, 3
      %p266 = por %p264, %p265
      %p267 = scmp.ne.s32.totalorder %s258, %s259
      %p268 = scmp.eq.s32.totalorder %s33, 0
      %p269 = por %p267, %p268
      %p270 = scmp.ne.s32.totalorder %s258, %s259
      %p271 = scmp.eq.s32.totalorder %s34, 3
      %p272 = por %p270, %p271
      %p274 = scmp.ne.s32.totalorder %s259, %s273
      %p275 = scmp.eq.s32.totalorder %s34, 0
      %p276 = por %p274, %p275
      %s278 = sadd.s32 %s277, 1
      %p281 = scmp.eq.s32.totalorder %s28, 3
      %p282 = scmp.ne.s32.totalorder %s277, %s279
      %p283 = scmp.eq.s32.totalorder %s28, 0
      %p284 = por %p282, %p283
      %p285 = scmp.ne.s32.totalorder %s277, %s279
      %p286 = scmp.eq.s32.totalorder %s33, 3
      %p287 = por %p285, %p286
      %p288 = scmp.ne.s32.totalorder %s279, %s280
      %p289 = scmp.eq.s32.totalorder %s33, 0
      %p290 = por %p288, %p289
      %p291 = scmp.ne.s32.totalorder %s279, %s280
      %p292 = scmp.eq.s32.totalorder %s34, 3
      %p293 = por %p291, %p292
      %p295 = scmp.ne.s32.totalorder %s280, %s294
      %p296 = scmp.eq.s32.totalorder %s34, 0
      %p297 = por %p295, %p296
      %s299 = sadd.s32 %s298, 1
      %p302 = scmp.eq.s32.totalorder %s28, 3
      %p303 = scmp.ne.s32.totalorder %s298, %s300
      %p304 = scmp.eq.s32.totalorder %s28, 0
      %p305 = por %p303, %p304
      %p306 = scmp.ne.s32.totalorder %s298, %s300
      %p307 = scmp.eq.s32.totalorder %s33, 3
      %p308 = por %p306, %p307
      %p309 = scmp.ne.s32.totalorder %s300, %s301
      %p310 = scmp.eq.s32.totalorder %s33, 0
      %p311 = por %p309, %p310
      %p312 = scmp.ne.s32.totalorder %s300, %s301
      %p313 = scmp.eq.s32.totalorder %s34, 3
      %p314 = por %p312, %p313
      %p316 = scmp.ne.s32.totalorder %s301, %s315
      %p317 = scmp.eq.s32.totalorder %s34, 0
      %p318 = por %p316, %p317
      %s320 = sadd.s32 %s319, 1
      %p323 = scmp.eq.s32.totalorder %s28, 3
      %p324 = scmp.ne.s32.totalorder %s319, %s321
      %p325 = scmp.eq.s32.totalorder %s28, 0
      %p326 = por %p324, %p325
      %p327 = scmp.ne.s32.totalorder %s319, %s321
      %p328 = scmp.eq.s32.totalorder %s33, 3
      %p329 = por %p327, %p328
      %p330 = scmp.ne.s32.totalorder %s321, %s322
      %p331 = scmp.eq.s32.totalorder %s33, 0
      %p332 = por %p330, %p331
      %p333 = scmp.ne.s32.totalorder %s321, %s322
      %p334 = scmp.eq.s32.totalorder %s34, 3
      %p335 = por %p333, %p334
      %p337 = scmp.ne.s32.totalorder %s322, %s336
      %p338 = scmp.eq.s32.totalorder %s34, 0
      %p339 = por %p337, %p338
      %s341 = sadd.s32 %s340, 1
      %p344 = scmp.eq.s32.totalorder %s28, 3
      %p345 = scmp.ne.s32.totalorder %s340, %s342
      %p346 = scmp.eq.s32.totalorder %s28, 0
      %p347 = por %p345, %p346
      %p348 = scmp.ne.s32.totalorder %s340, %s342
      %p349 = scmp.eq.s32.totalorder %s33, 3
      %p350 = por %p348, %p349
      %p351 = scmp.ne.s32.totalorder %s342, %s343
      %p352 = scmp.eq.s32.totalorder %s33, 0
      %p353 = por %p351, %p352
      %p354 = scmp.ne.s32.totalorder %s342, %s343
      %p355 = scmp.eq.s32.totalorder %s34, 3
      %p356 = por %p354, %p355
      %p358 = scmp.ne.s32.totalorder %s343, %s357
      %p359 = scmp.eq.s32.totalorder %s34, 0
      %p360 = por %p358, %p359
      %s362 = sadd.s32 %s361, 1
      %p365 = scmp.eq.s32.totalorder %s28, 3
      %p366 = scmp.ne.s32.totalorder %s361, %s363
      %p367 = scmp.eq.s32.totalorder %s28, 0
      %p368 = por %p366, %p367
      %p369 = scmp.ne.s32.totalorder %s361, %s363
      %p370 = scmp.eq.s32.totalorder %s33, 3
      %p371 = por %p369, %p370
      %p372 = scmp.ne.s32.totalorder %s363, %s364
      %p373 = scmp.eq.s32.totalorder %s33, 0
      %p374 = por %p372, %p373
      %p375 = scmp.ne.s32.totalorder %s363, %s364
      %p376 = scmp.eq.s32.totalorder %s34, 3
      %p377 = por %p375, %p376
      %p379 = scmp.ne.s32.totalorder %s364, %s378
      %p380 = scmp.eq.s32.totalorder %s34, 0
      %p381 = por %p379, %p380
      %s383 = sadd.s32 %s382, 1
      %p386 = scmp.eq.s32.totalorder %s28, 3
      %p387 = scmp.ne.s32.totalorder %s382, %s384
      %p388 = scmp.eq.s32.totalorder %s28, 0
      %p389 = por %p387, %p388
      %p390 = scmp.ne.s32.totalorder %s382, %s384
      %p391 = scmp.eq.s32.totalorder %s33, 3
      %p392 = por %p390, %p391
      %p393 = scmp.ne.s32.totalorder %s384, %s385
      %p394 = scmp.eq.s32.totalorder %s33, 0
      %p395 = por %p393, %p394
      %p396 = scmp.ne.s32.totalorder %s384, %s385
      %p397 = scmp.eq.s32.totalorder %s34, 3
      %p398 = por %p396, %p397
      %p400 = scmp.ne.s32.totalorder %s385, %s399
      %p401 = scmp.eq.s32.totalorder %s34, 0
      %p402 = por %p400, %p401
      %s404 = sadd.s32 %s403, 1
      %p407 = scmp.eq.s32.totalorder %s28, 3
      %p408 = scmp.ne.s32.totalorder %s403, %s405
      %p409 = scmp.eq.s32.totalorder %s28, 0
      %p410 = por %p408, %p409
      %p411 = scmp.ne.s32.totalorder %s403, %s405
      %p412 = scmp.eq.s32.totalorder %s33, 3
      %p413 = por %p411, %p412
      %p414 = scmp.ne.s32.totalorder %s405, %s406
      %p415 = scmp.eq.s32.totalorder %s33, 0
      %p416 = por %p414, %p415
      %p417 = scmp.ne.s32.totalorder %s405, %s406
      %p418 = scmp.eq.s32.totalorder %s34, 3
      %p419 = por %p417, %p418
      %p421 = scmp.ne.s32.totalorder %s406, %s420
      %p422 = scmp.eq.s32.totalorder %s34, 0
      %p423 = por %p421, %p422
      %s425 = sadd.s32 %s424, 1
      %p428 = scmp.eq.s32.totalorder %s28, 3
      %p429 = scmp.ne.s32.totalorder %s424, %s426
      %p430 = scmp.eq.s32.totalorder %s28, 0
      %p431 = por %p429, %p430
      %p432 = scmp.ne.s32.totalorder %s424, %s426
      %p433 = scmp.eq.s32.totalorder %s33, 3
      %p434 = por %p432, %p433
      %p435 = scmp.ne.s32.totalorder %s426, %s427
      %p436 = scmp.eq.s32.totalorder %s33, 0
      %p437 = por %p435, %p436
      %p438 = scmp.ne.s32.totalorder %s426, %s427
      %p439 = scmp.eq.s32.totalorder %s34, 3
      %p440 = por %p438, %p439
      %p442 = scmp.ne.s32.totalorder %s427, %s441
      %p443 = scmp.eq.s32.totalorder %s34, 0
      %p444 = por %p442, %p443
      %s446 = sadd.s32 %s445, 1
      %p449 = scmp.eq.s32.totalorder %s28, 3
      %p450 = scmp.ne.s32.totalorder %s445, %s447
      %p451 = scmp.eq.s32.totalorder %s28, 0
      %p452 = por %p450, %p451
      %p453 = scmp.ne.s32.totalorder %s445, %s447
      %p454 = scmp.eq.s32.totalorder %s33, 3
      %p455 = por %p453, %p454
      %p456 = scmp.ne.s32.totalorder %s447, %s448
      %p457 = scmp.eq.s32.totalorder %s33, 0
      %p458 = por %p456, %p457
      %p459 = scmp.ne.s32.totalorder %s447, %s448
      %p460 = scmp.eq.s32.totalorder %s34, 3
      %p461 = por %p459, %p460
      %p463 = scmp.ne.s32.totalorder %s448, %s462
      %p464 = scmp.eq.s32.totalorder %s34, 0
      %p465 = por %p463, %p464
      %s466 = ssub.s32 %s35, %s47
      %s467 = ssub.s32 %s36, %s43
      %s468 = sor.u32 %s466, %s467
      %p469 = scmp.eq.s32.totalorder %s468, 0
      %s471 = sadd.s32 %s470, 1
      %s472 = scalar_select %p469, %s470, %s471
      %p475 = pneg %p469
      %p476 = scmp.eq.s32.totalorder %s28, 3
      %p477 = por %p475, %p476
      %p478 = scmp.ne.s32.totalorder %s470, %s473
      %p479 = scmp.eq.s32.totalorder %s28, 0
      %p480 = por %p478, %p479
      %p481 = scmp.ne.s32.totalorder %s470, %s473
      %p482 = scmp.eq.s32.totalorder %s33, 3
      %p483 = por %p481, %p482
      %p484 = scmp.ne.s32.totalorder %s473, %s474
      %p485 = scmp.eq.s32.totalorder %s33, 0
      %p486 = por %p484, %p485
      %p487 = scmp.ne.s32.totalorder %s473, %s474
      %p488 = scmp.eq.s32.totalorder %s34, 3
      %p489 = por %p487, %p488
      %p491 = scmp.ne.s32.totalorder %s474, %s490
      %p492 = scmp.eq.s32.totalorder %s34, 0
      %p493 = por %p491, %p492
      %p494 = scmp.le.s32.totalorder 1, %s28
      %p495 = scmp.lt.s32.totalorder %s28, 5
      %p496 = pnand %p494, %p495
      %p497 = pneg %p496
      // Predicated region
      $region9: #{tpu_custom_call.1} parent=5 // pred_check
        _
      $region10: #{tpu_custom_call.1} parent=5 // pred_check_branch
        %499 = sbr.rel (%p496) target = $region12
      $region11: #{tpu_custom_call.1} parent=5 // pred_region
        %s500 = ssub.s32 %s28, 1
        // Predicated region
        $region13: #{tpu_custom_call.1} parent=11 // pred_check
          %p501 = pneg %p66
        $region14: #{tpu_custom_call.1} parent=11 // pred_check_branch
          %503 = sbr.rel (%p501) target = $region16
        $region15: #{tpu_custom_call.1} parent=11 // pred_region
          %p504 = scmp.lt.s32.totalorder %s37, 1
          %s505 = scalar_select %p504, %s37, 1
          %s506 = smul.addr %s505, 2
          %s507 = smul.addr %s506, 8
          %s508 = scalar_lea.vmem %s0, %s507
        $region16: #{tpu_custom_call.1} parent=11 // pred_fallthru
          _
        // Predicated region
        $region17: #{tpu_custom_call.1} parent=11 // pred_check
          %p509 = pneg %p143
        $region18: #{tpu_custom_call.1} parent=11 // pred_check_branch
          %511 = sbr.rel (%p509) target = $region20
        $region19: #{tpu_custom_call.1} parent=11 // pred_region
          _
        $region20: #{tpu_custom_call.1} parent=11 // pred_fallthru
          _
        // Predicated region
        $region21: #{tpu_custom_call.1} parent=11 // pred_check
          %p512 = pneg %p164
        $region22: #{tpu_custom_call.1} parent=11 // pred_check_branch
          %514 = sbr.rel (%p512) target = $region24
        $region23: #{tpu_custom_call.1} parent=11 // pred_region
          _
        $region24: #{tpu_custom_call.1} parent=11 // pred_fallthru
          _
        // Predicated region
        $region25: #{tpu_custom_call.1} parent=11 // pred_check
          %p515 = pneg %p185
        $region26: #{tpu_custom_call.1} parent=11 // pred_check_branch
          %517 = sbr.rel (%p515) target = $region28
        $region27: #{tpu_custom_call.1} parent=11 // pred_region
          _
        $region28: #{tpu_custom_call.1} parent=11 // pred_fallthru
          _
        // Predicated region
        $region29: #{tpu_custom_call.1} parent=11 // pred_check
          %p518 = pneg %p206
        $region30: #{tpu_custom_call.1} parent=11 // pred_check_branch
          %520 = sbr.rel (%p518) target = $region32
        $region31: #{tpu_custom_call.1} parent=11 // pred_region
          _
        $region32: #{tpu_custom_call.1} parent=11 // pred_fallthru
          _
        // Predicated region
        $region33: #{tpu_custom_call.1} parent=11 // pred_check
          %p521 = pneg %p227
        $region34: #{tpu_custom_call.1} parent=11 // pred_check_branch
          %523 = sbr.rel (%p521) target = $region36
        $region35: #{tpu_custom_call.1} parent=11 // pred_region
          _
        $region36: #{tpu_custom_call.1} parent=11 // pred_fallthru
          _
        // Predicated region
        $region37: #{tpu_custom_call.1} parent=11 // pred_check
          %p524 = pneg %p248
        $region38: #{tpu_custom_call.1} parent=11 // pred_check_branch
          %526 = sbr.rel (%p524) target = $region40
        $region39: #{tpu_custom_call.1} parent=11 // pred_region
          _
        $region40: #{tpu_custom_call.1} parent=11 // pred_fallthru
          _
        // Predicated region
        $region41: #{tpu_custom_call.1} parent=11 // pred_check
          %p527 = pneg %p269
        $region42: #{tpu_custom_call.1} parent=11 // pred_check_branch
          %529 = sbr.rel (%p527) target = $region44
        $region43: #{tpu_custom_call.1} parent=11 // pred_region
          _
        $region44: #{tpu_custom_call.1} parent=11 // pred_fallthru
          _
        // Predicated region
        $region45: #{tpu_custom_call.1} parent=11 // pred_check
          %p530 = pneg %p290
        $region46: #{tpu_custom_call.1} parent=11 // pred_check_branch
          %532 = sbr.rel (%p530) target = $region48
        $region47: #{tpu_custom_call.1} parent=11 // pred_region
          _
        $region48: #{tpu_custom_call.1} parent=11 // pred_fallthru
          _
        // Predicated region
        $region49: #{tpu_custom_call.1} parent=11 // pred_check
          %p533 = pneg %p311
        $region50: #{tpu_custom_call.1} parent=11 // pred_check_branch
          %535 = sbr.rel (%p533) target = $region52
        $region51: #{tpu_custom_call.1} parent=11 // pred_region
          _
        $region52: #{tpu_custom_call.1} parent=11 // pred_fallthru
          _
        // Predicated region
        $region53: #{tpu_custom_call.1} parent=11 // pred_check
          %p536 = pneg %p332
        $region54: #{tpu_custom_call.1} parent=11 // pred_check_branch
          %538 = sbr.rel (%p536) target = $region56
        $region55: #{tpu_custom_call.1} parent=11 // pred_region
          _
        $region56: #{tpu_custom_call.1} parent=11 // pred_fallthru
          _
        // Predicated region
        $region57: #{tpu_custom_call.1} parent=11 // pred_check
          %p539 = pneg %p353
        $region58: #{tpu_custom_call.1} parent=11 // pred_check_branch
          %541 = sbr.rel (%p539) target = $region60
        $region59: #{tpu_custom_call.1} parent=11 // pred_region
          _
        $region60: #{tpu_custom_call.1} parent=11 // pred_fallthru
          _
        // Predicated region
        $region61: #{tpu_custom_call.1} parent=11 // pred_check
          %p542 = pneg %p374
        $region62: #{tpu_custom_call.1} parent=11 // pred_check_branch
          %544 = sbr.rel (%p542) target = $region64
        $region63: #{tpu_custom_call.1} parent=11 // pred_region
          _
        $region64: #{tpu_custom_call.1} parent=11 // pred_fallthru
          _
        // Predicated region
        $region65: #{tpu_custom_call.1} parent=11 // pred_check
          %p545 = pneg %p395
        $region66: #{tpu_custom_call.1} parent=11 // pred_check_branch
          %547 = sbr.rel (%p545) target = $region68
        $region67: #{tpu_custom_call.1} parent=11 // pred_region
          _
        $region68: #{tpu_custom_call.1} parent=11 // pred_fallthru
          _
        // Predicated region
        $region69: #{tpu_custom_call.1} parent=11 // pred_check
          %p548 = pneg %p416
        $region70: #{tpu_custom_call.1} parent=11 // pred_check_branch
          %550 = sbr.rel (%p548) target = $region72
        $region71: #{tpu_custom_call.1} parent=11 // pred_region
          _
        $region72: #{tpu_custom_call.1} parent=11 // pred_fallthru
          _
        // Predicated region
        $region73: #{tpu_custom_call.1} parent=11 // pred_check
          %p551 = pneg %p437
        $region74: #{tpu_custom_call.1} parent=11 // pred_check_branch
          %553 = sbr.rel (%p551) target = $region76
        $region75: #{tpu_custom_call.1} parent=11 // pred_region
          _
        $region76: #{tpu_custom_call.1} parent=11 // pred_fallthru
          _
        // Predicated region
        $region77: #{tpu_custom_call.1} parent=11 // pred_check
          %p554 = pneg %p458
        $region78: #{tpu_custom_call.1} parent=11 // pred_check_branch
          %556 = sbr.rel (%p554) target = $region80
        $region79: #{tpu_custom_call.1} parent=11 // pred_region
          _
        $region80: #{tpu_custom_call.1} parent=11 // pred_fallthru
          _
      $region12: #{tpu_custom_call.1} parent=5 // pred_fallthru
        _
      %p557 = scmp.lt.s32.totalorder %s28, 4
      // Predicated region
      $region81: #{tpu_custom_call.1} parent=5 // pred_check
        %p558 = pneg %p557
      $region82: #{tpu_custom_call.1} parent=5 // pred_check_branch
        %560 = sbr.rel (%p558) target = $region84
      $region83: #{tpu_custom_call.1} parent=5 // pred_region
        // Predicated region
        $region85: #{tpu_custom_call.1} parent=83 // pred_check
          %p561 = pneg %p88
        $region86: #{tpu_custom_call.1} parent=83 // pred_check_branch
          %563 = sbr.rel (%p561) target = $region88
        $region87: #{tpu_custom_call.1} parent=83 // pred_region
          %p564 = scmp.lt.s32.totalorder %s35, 1
          %s565 = scalar_select %p564, %s35, 1
          %p566 = scmp.lt.s32.totalorder %s36, 1
          %s567 = scalar_select %p566, %s36, 1
          %s568 = smul.addr %s565, 2
          %s569 = sadd.s32 %s567, %s568
          %s570 = smul.addr %s569, 8
          %s571 = scalar_lea.vmem %s1, %s570
        $region88: #{tpu_custom_call.1} parent=83 // pred_fallthru
          _
        // Predicated region
        $region89: #{tpu_custom_call.1} parent=83 // pred_check
          %p572 = pneg %p116
        $region90: #{tpu_custom_call.1} parent=83 // pred_check_branch
          %574 = sbr.rel (%p572) target = $region92
        $region91: #{tpu_custom_call.1} parent=83 // pred_region
          %p575 = scmp.lt.s32.totalorder %s35, 1
          %s576 = scalar_select %p575, %s35, 1
          %p577 = scmp.lt.s32.totalorder %s36, 1
          %s578 = scalar_select %p577, %s36, 1
          %s579 = smul.addr %s576, 2
          %s580 = sadd.s32 %s578, %s579
          %s581 = smul.addr %s580, 4
          %s582 = scalar_lea.vmem %s2, %s581
        $region92: #{tpu_custom_call.1} parent=83 // pred_fallthru
          _
      $region84: #{tpu_custom_call.1} parent=5 // pred_fallthru
        _
      %p583 = scmp.le.s32.totalorder 1, %s28
      %p584 = scmp.lt.s32.totalorder %s28, 5
      %p585 = pnand %p583, %p584
      %p586 = pneg %p585
      // Predicated region
      $region93: #{tpu_custom_call.1} parent=5 // pred_check
        _
      $region94: #{tpu_custom_call.1} parent=5 // pred_check_branch
        %588 = sbr.rel (%p585) target = $region96
      $region95: #{tpu_custom_call.1} parent=5 // pred_region
        %s589 = ssub.s32 %s28, 1
        %p590 = scmp.lt.s32.totalorder %s37, 1
        %s591 = scalar_select %p590, %s37, 1
        %s592 = smul.addr %s591, 2
        %s593 = smul.addr %s592, 8
        %s594 = scalar_lea.vmem %s0, %s593
        %p595 = pneg %p66
        %p596 = pneg %p63
        %p597 = scmp.lt.s32.totalorder %s37, 1
        %s598 = scalar_select %p597, %s37, 1
        %p599 = scmp.lt.s32.totalorder %s38, 1
        %s600 = scalar_select %p599, %s38, 1
        %s601 = smul.addr %s598, 2
        %s602 = sadd.s32 %s600, %s601
        %s603 = smul.addr %s602, 8
        %s604 = scalar_lea.vmem %s1, %s603
        %p605 = pneg %p94
        %p606 = pneg %p91
        %p607 = scmp.lt.s32.totalorder %s37, 1
        %s608 = scalar_select %p607, %s37, 1
        %p609 = scmp.lt.s32.totalorder %s38, 1
        %s610 = scalar_select %p609, %s38, 1
        %s611 = smul.addr %s608, 2
        %s612 = sadd.s32 %s610, %s611
        %s613 = smul.addr %s612, 4
        %s614 = scalar_lea.vmem %s2, %s613
        %p615 = pneg %p122
        %p616 = pneg %p119
        %p617 = pneg %p143
        %p618 = pneg %p140
        %p619 = pneg %p164
        %p620 = pneg %p161
        %p621 = pneg %p185
        %p622 = pneg %p182
        %p623 = pneg %p206
        %p624 = pneg %p203
        %p625 = pneg %p227
        %p626 = pneg %p224
        %p627 = pneg %p248
        %p628 = pneg %p245
        %p629 = pneg %p269
        %p630 = pneg %p266
        %p631 = pneg %p290
        %p632 = pneg %p287
        %p633 = pneg %p311
        %p634 = pneg %p308
        %p635 = pneg %p332
        %p636 = pneg %p329
        %p637 = pneg %p353
        %p638 = pneg %p350
        %p639 = pneg %p374
        %p640 = pneg %p371
        %p641 = pneg %p395
        %p642 = pneg %p392
        %p643 = pneg %p416
        %p644 = pneg %p413
        %p645 = pneg %p437
        %p646 = pneg %p434
        %p647 = pneg %p458
        %p648 = pneg %p455
        %p649 = pneg %p486
        %p650 = pneg %p483
        %s651 = sand.u32 %s473, 1
        %s652 = scalar_lea.sflag [#allocation5], %s651
        %s653 = sand.u32 %s473, 1
        %s654 = smul.addr %s653, 8
        %s655 = scalar_lea.vmem [#allocation4], %s654
        %p656 = scmp.lt.s32.totalorder %s37, 1
        %s657 = scalar_select %p656, %s37, 1
        %s658 = smul.addr %s657, 2
        %s659 = smul.addr %s658, 8
        %s660 = scalar_lea.vmem %s0, %s659
        %p661 = scmp.lt.s32.totalorder %s37, 1
        %s662 = scalar_select %p661, %s37, 1
        %p663 = scmp.lt.s32.totalorder %s38, 1
        %s664 = scalar_select %p663, %s38, 1
        %s665 = smul.addr %s662, 2
        %s666 = sadd.s32 %s664, %s665
        %s667 = smul.addr %s666, 8
        %s668 = scalar_lea.vmem %s1, %s667
        %p669 = scmp.lt.s32.totalorder %s37, 1
        %s670 = scalar_select %p669, %s37, 1
        %p671 = scmp.lt.s32.totalorder %s38, 1
        %s672 = scalar_select %p671, %s38, 1
        %s673 = smul.addr %s670, 2
        %s674 = sadd.s32 %s672, %s673
        %s675 = smul.addr %s674, 4
        %s676 = scalar_lea.vmem %s2, %s675
        %p677 = scmp.eq.s32.totalorder %s38, 0
        // Predicated region
        $region97: #{tpu_custom_call.1} parent=95 // pred_check
          %p678 = pneg %p677
        $region98: #{tpu_custom_call.1} parent=95 // pred_check_branch
          %680 = sbr.rel (%p678) target = $region100
        $region99: #{tpu_custom_call.1} parent=95 // pred_region
          %v681 = vld [vmem:[%s660] sm:$0xff]
          %v682 = vld [vmem:[%s660 + $0x8] sm:$0xff]
          %v683 = vld [vmem:[%s5] sm:$0xff]
          %v684 = vld [vmem:[%s5 + $0x8] sm:$0xff]
          %v685 = vld [vmem:[%s5 + $0x10] sm:$0xff]
          %v686 = vld [vmem:[%s5 + $0x18] sm:$0xff]
          %v687 = vld [vmem:[%s6] sm:$0x1]
          %v689 = vperm.slane %v687, 0
          %vm691 = vcmask 261120
          %v693 = vsel %vm691, %v681, 0
          %v696 = vsel %vm691, %v682, 0
          %698 = vmatpush.msra.mxu0 0.0
          %699 = vmatpush.msra.mxu0 0.0
          %700 = vmatpush.msra.mxu0 0.0
          %701 = vmatpush.msra.mxu0 0.0
          %702 = vmatpush.msra.mxu0 0.0
          %703 = vmatpush.msra.mxu0 0.0
          %704 = vmatpush.msra.mxu0 0.0
          %705 = vmatpush.msra.mxu0 0.0
          %706 = vmatpush.msra.mxu0 0.0
          %707 = vmatpush.msra.mxu0 0.0
          %708 = vmatpush.msra.mxu0 0.0
          %709 = vmatpush.msra.mxu0 0.0
          %710 = vmatpush.msra.mxu0 %v686
          %711 = vmatpush.msra.mxu0 %v685
          %712 = vmatpush.msra.mxu0 %v684
          %713 = vmatpush.msra.mxu0 %v683
          %714 = vmatmul.f32.gmra.mxu0 %v693
          %v715 = vpop.f32.mrf.mxu0
          %v716 = vadd.f32 %v689, %v715
          %717 = vmatmul.f32.gmra.mxu0 %v696
          %v718 = vpop.f32.mrf.mxu0
          %v719 = vadd.f32 %v689, %v718
          %720 = vdwg.mxu0
          %721 = vst.msk [vmem:[#allocation2] sm:$0xff] %vm691, %v716
          %722 = vst.msk [vmem:[#allocation2 + $0x8] sm:$0xff] %vm691, %v719
          %v723 = vld [vmem:[%s7] sm:$0xff]
          %v724 = vld [vmem:[%s7 + $0x8] sm:$0xff]
          %v725 = vld [vmem:[%s7 + $0x10] sm:$0xff]
          %v726 = vld [vmem:[%s7 + $0x18] sm:$0xff]
          %v727 = vld [vmem:[%s8] sm:$0x1]
          %v729 = vperm.slane %v727, 0
          %731 = vmatpush.msra.mxu0 0.0
          %732 = vmatpush.msra.mxu0 0.0
          %733 = vmatpush.msra.mxu0 0.0
          %734 = vmatpush.msra.mxu0 0.0
          %735 = vmatpush.msra.mxu0 0.0
          %736 = vmatpush.msra.mxu0 0.0
          %737 = vmatpush.msra.mxu0 0.0
          %738 = vmatpush.msra.mxu0 0.0
          %739 = vmatpush.msra.mxu0 0.0
          %740 = vmatpush.msra.mxu0 0.0
          %741 = vmatpush.msra.mxu0 0.0
          %742 = vmatpush.msra.mxu0 0.0
          %743 = vmatpush.msra.mxu0 %v726
          %744 = vmatpush.msra.mxu0 %v725
          %745 = vmatpush.msra.mxu0 %v724
          %746 = vmatpush.msra.mxu0 %v723
          %747 = vmatmul.f32.gmra.mxu0 %v693
          %v748 = vpop.f32.mrf.mxu0
          %v749 = vadd.f32 %v729, %v748
          %750 = vmatmul.f32.gmra.mxu0 %v696
          %v751 = vpop.f32.mrf.mxu0
          %v752 = vadd.f32 %v729, %v751
          %753 = vdwg.mxu0
          %754 = vst.msk [vmem:[#allocation3] sm:$0xff] %vm691, %v749
          %755 = vst.msk [vmem:[#allocation3 + $0x8] sm:$0xff] %vm691, %v752
        $region100: #{tpu_custom_call.1} parent=95 // pred_fallthru
          _
        %v756 = vld [vmem:[%s668] sm:$0xff]
        %v757 = vld [vmem:[%s3] sm:$0xff]
        %v758 = vld [vmem:[%s3 + $0x8] sm:$0xff]
        %v759 = vld [vmem:[%s3 + $0x10] sm:$0xff]
        %v760 = vld [vmem:[%s3 + $0x18] sm:$0xff]
        %v761 = vld [vmem:[%s4] sm:$0x1]
        %v763 = vperm.slane %v761, 0
        %vm765 = vcmask 261120
        %v767 = vsel %vm765, %v756, 0
        %769 = vmatpush.msra.mxu0 0.0
        %770 = vmatpush.msra.mxu0 0.0
        %771 = vmatpush.msra.mxu0 0.0
        %772 = vmatpush.msra.mxu0 0.0
        %773 = vmatpush.msra.mxu0 0.0
        %774 = vmatpush.msra.mxu0 0.0
        %775 = vmatpush.msra.mxu0 0.0
        %776 = vmatpush.msra.mxu0 0.0
        %777 = vmatpush.msra.mxu0 0.0
        %778 = vmatpush.msra.mxu0 0.0
        %779 = vmatpush.msra.mxu0 0.0
        %780 = vmatpush.msra.mxu0 0.0
        %781 = vmatpush.msra.mxu0 %v760
        %782 = vmatpush.msra.mxu0 %v759
        %783 = vmatpush.msra.mxu0 %v758
        %784 = vmatpush.msra.mxu0 %v757
        %785 = vmatmul.f32.gmra.mxu0 %v767
        %v786 = vpop.f32.mrf.mxu0
        %v787 = vadd.f32 %v763, %v786
        %788 = vdwg.mxu0
        %v789 = vmul.f32 %v787, 0.35355338
        %v790 = vld [vmem:[#allocation2] sm:$0xff]
        %v791 = vld [vmem:[#allocation2 + $0x8] sm:$0xff]
        %v792 = vld [vmem:[#allocation3] sm:$0xff]
        %v793 = vld [vmem:[#allocation3 + $0x8] sm:$0xff]
        %v794 = vld [vmem:[%s676] sm:$0xf]
        %v795 = vunpack.c.l.bf16 %v794
        %vm796 = vcmask 64512
        %v798 = vsel %vm796, %v789, 0
        %v801 = vsel %vm796, %v790, 0
        %v804 = vsel %vm796, %v791, 0
        %806 = vmatpush.xpose.msra.mxu0 0.0
        %807 = vmatpush.xpose.msra.mxu0 0.0
        %808 = vmatpush.xpose.msra.mxu0 0.0
        %809 = vmatpush.xpose.msra.mxu0 0.0
        %810 = vmatpush.xpose.msra.mxu0 0.0
        %811 = vmatpush.xpose.msra.mxu0 0.0
        %812 = vmatpush.xpose.msra.mxu0 0.0
        %813 = vmatpush.xpose.msra.mxu0 0.0
        %814 = vmatpush.xpose.msra.mxu0 0.0
        %815 = vmatpush.xpose.msra.mxu0 0.0
        %816 = vmatpush.xpose.msra.mxu0 0.0
        %817 = vmatpush.xpose.msra.mxu0 0.0
        %818 = vmatpush.xpose.msra.mxu0 0.0
        %819 = vmatpush.xpose.msra.mxu0 0.0
        %820 = vmatpush.xpose.msra.mxu0 %v804
        %821 = vmatpush.xpose.msra.mxu0 %v801
        %822 = vmatmul.f32.gmra.mxu0 %v798
        %v823 = vpop.f32.mrf.mxu0
        %v824 = vadd.f32 %v795, %v823
        %825 = vdwg.mxu0
        %vm826 = vcmask 130048
        %v827 = vsel %vm826, %v824, -inf
        %828 = vmax.xlane.f32.xlu0 %v827
        %v829 = vpop.xlane.xlu0 %828
        %v830 = vsub.f32 %v824, %v829
        %v831 = vmul.f32 %v830, 1.442695
        %v832 = vpow.pop %v831
        %v833 = vsel %vm826, %v832, 0.0
        %834 = vadd.xlane.f32.xlu0 %v833
        %v835 = vpop.xlane.xlu0 %834
        %v836 = vrcp.pop %v835
        %v838 = vsel %vm826, %v832, 0
        %840 = vmatpush.msra.mxu0 0.0
        %841 = vmatpush.msra.mxu0 0.0
        %842 = vmatpush.msra.mxu0 0.0
        %843 = vmatpush.msra.mxu0 0.0
        %844 = vmatpush.msra.mxu0 0.0
        %845 = vmatpush.msra.mxu0 0.0
        %846 = vmatpush.msra.mxu0 0.0
        %847 = vmatpush.msra.mxu0 0.0
        %848 = vmatpush.msra.mxu0 0.0
        %849 = vmatpush.msra.mxu0 0.0
        %850 = vmatpush.msra.mxu0 0.0
        %851 = vmatpush.msra.mxu0 0.0
        %852 = vmatpush.msra.mxu0 0.0
        %853 = vmatpush.msra.mxu0 0.0
        %854 = vmatpush.msra.mxu0 %v793
        %855 = vmatpush.msra.mxu0 %v792
        %856 = vmatmul.f32.gmra.mxu0 %v838
        %v857 = vpop.f32.mrf.mxu0
        %v858 = vadd.f32 0.0, %v857
        %859 = vdwg.mxu0
        %v860 = vmul.f32 %v858, %v836
        %861 = vrot.lane.b32.xlu0 %v789, 120
        %v862 = vpop.permute.xlu0 %861
        %863 = vrot.lane.b32.xlu0 %v790, 120
        %v864 = vpop.permute.xlu0 %863
        %865 = vrot.lane.b32.xlu0 %v791, 120
        %v866 = vpop.permute.xlu0 %865
        %v867 = vsel %vm796, %v862, 0
        %v869 = vsel %vm796, %v864, 0
        %v871 = vsel %vm796, %v866, 0
        %873 = vmatpush.xpose.msra.mxu0 0.0
        %874 = vmatpush.xpose.msra.mxu0 0.0
        %875 = vmatpush.xpose.msra.mxu0 0.0
        %876 = vmatpush.xpose.msra.mxu0 0.0
        %877 = vmatpush.xpose.msra.mxu0 0.0
        %878 = vmatpush.xpose.msra.mxu0 0.0
        %879 = vmatpush.xpose.msra.mxu0 0.0
        %880 = vmatpush.xpose.msra.mxu0 0.0
        %881 = vmatpush.xpose.msra.mxu0 0.0
        %882 = vmatpush.xpose.msra.mxu0 0.0
        %883 = vmatpush.xpose.msra.mxu0 0.0
        %884 = vmatpush.xpose.msra.mxu0 0.0
        %885 = vmatpush.xpose.msra.mxu0 0.0
        %886 = vmatpush.xpose.msra.mxu0 0.0
        %887 = vmatpush.xpose.msra.mxu0 %v871
        %888 = vmatpush.xpose.msra.mxu0 %v869
        %889 = vmatmul.f32.gmra.mxu0 %v867
        %v890 = vpop.f32.mrf.mxu0
        %v891 = vadd.f32 %v795, %v890
        %892 = vdwg.mxu0
        %v893 = vsel %vm826, %v891, -inf
        %894 = vmax.xlane.f32.xlu0 %v893
        %v895 = vpop.xlane.xlu0 %894
        %v896 = vsub.f32 %v891, %v895
        %v897 = vmul.f32 %v896, 1.442695
        %v898 = vpow.pop %v897
        %v899 = vsel %vm826, %v898, 0.0
        %900 = vadd.xlane.f32.xlu0 %v899
        %v901 = vpop.xlane.xlu0 %900
        %v902 = vrcp.pop %v901
        %905 = vrot.lane.b32.xlu0 %v792, 120
        %v906 = vpop.permute.xlu0 %905
        %907 = vrot.lane.b32.xlu0 %v793, 120
        %v908 = vpop.permute.xlu0 %907
        %v912 = vsel %vm826, %v898, 0
        %914 = vmatpush.msra.mxu0 0.0
        %915 = vmatpush.msra.mxu0 0.0
        %916 = vmatpush.msra.mxu0 0.0
        %917 = vmatpush.msra.mxu0 0.0
        %918 = vmatpush.msra.mxu0 0.0
        %919 = vmatpush.msra.mxu0 0.0
        %920 = vmatpush.msra.mxu0 0.0
        %921 = vmatpush.msra.mxu0 0.0
        %922 = vmatpush.msra.mxu0 0.0
        %923 = vmatpush.msra.mxu0 0.0
        %924 = vmatpush.msra.mxu0 0.0
        %925 = vmatpush.msra.mxu0 0.0
        %926 = vmatpush.msra.mxu0 0.0
        %927 = vmatpush.msra.mxu0 0.0
        %928 = vmatpush.msra.mxu0 %v908
        %929 = vmatpush.msra.mxu0 %v906
        %930 = vmatmul.f32.gmra.mxu0 %v912
        %v931 = vpop.f32.mrf.mxu0
        %v932 = vadd.f32 0.0, %v931
        %933 = vdwg.mxu0
        %v934 = vmul.f32 %v932, %v902
        %935 = vrot.lane.b32.xlu0 %v789, 112
        %v936 = vpop.permute.xlu0 %935
        %937 = vrot.lane.b32.xlu0 %v790, 112
        %v938 = vpop.permute.xlu0 %937
        %939 = vrot.lane.b32.xlu0 %v791, 112
        %v940 = vpop.permute.xlu0 %939
        %v941 = vsel %vm796, %v936, 0
        %v943 = vsel %vm796, %v938, 0
        %v945 = vsel %vm796, %v940, 0
        %947 = vmatpush.xpose.msra.mxu0 0.0
        %948 = vmatpush.xpose.msra.mxu0 0.0
        %949 = vmatpush.xpose.msra.mxu0 0.0
        %950 = vmatpush.xpose.msra.mxu0 0.0
        %951 = vmatpush.xpose.msra.mxu0 0.0
        %952 = vmatpush.xpose.msra.mxu0 0.0
        %953 = vmatpush.xpose.msra.mxu0 0.0
        %954 = vmatpush.xpose.msra.mxu0 0.0
        %955 = vmatpush.xpose.msra.mxu0 0.0
        %956 = vmatpush.xpose.msra.mxu0 0.0
        %957 = vmatpush.xpose.msra.mxu0 0.0
        %958 = vmatpush.xpose.msra.mxu0 0.0
        %959 = vmatpush.xpose.msra.mxu0 0.0
        %960 = vmatpush.xpose.msra.mxu0 0.0
        %961 = vmatpush.xpose.msra.mxu0 %v945
        %962 = vmatpush.xpose.msra.mxu0 %v943
        %963 = vmatmul.f32.gmra.mxu0 %v941
        %v964 = vpop.f32.mrf.mxu0
        %v965 = vadd.f32 %v795, %v964
        %966 = vdwg.mxu0
        %v967 = vsel %vm826, %v965, -inf
        %968 = vmax.xlane.f32.xlu0 %v967
        %v969 = vpop.xlane.xlu0 %968
        %v970 = vsub.f32 %v965, %v969
        %v971 = vmul.f32 %v970, 1.442695
        %v972 = vpow.pop %v971
        %v973 = vsel %vm826, %v972, 0.0
        %974 = vadd.xlane.f32.xlu0 %v973
        %v975 = vpop.xlane.xlu0 %974
        %v976 = vrcp.pop %v975
        %977 = vrot.lane.b32.xlu0 %v792, 112
        %v978 = vpop.permute.xlu0 %977
        %979 = vrot.lane.b32.xlu0 %v793, 112
        %v980 = vpop.permute.xlu0 %979
        %v984 = vsel %vm826, %v972, 0
        %986 = vmatpush.msra.mxu0 0.0
        %987 = vmatpush.msra.mxu0 0.0
        %988 = vmatpush.msra.mxu0 0.0
        %989 = vmatpush.msra.mxu0 0.0
        %990 = vmatpush.msra.mxu0 0.0
        %991 = vmatpush.msra.mxu0 0.0
        %992 = vmatpush.msra.mxu0 0.0
        %993 = vmatpush.msra.mxu0 0.0
        %994 = vmatpush.msra.mxu0 0.0
        %995 = vmatpush.msra.mxu0 0.0
        %996 = vmatpush.msra.mxu0 0.0
        %997 = vmatpush.msra.mxu0 0.0
        %998 = vmatpush.msra.mxu0 0.0
        %999 = vmatpush.msra.mxu0 0.0
        %1000 = vmatpush.msra.mxu0 %v980
        %1001 = vmatpush.msra.mxu0 %v978
        %1002 = vmatmul.f32.gmra.mxu0 %v984
        %v1003 = vpop.f32.mrf.mxu0
        %v1004 = vadd.f32 0.0, %v1003
        %1005 = vdwg.mxu0
        %v1006 = vmul.f32 %v1004, %v976
        %1007 = vrot.lane.b32.xlu0 %v789, 104
        %v1008 = vpop.permute.xlu0 %1007
        %1009 = vrot.lane.b32.xlu0 %v790, 104
        %v1010 = vpop.permute.xlu0 %1009
        %1011 = vrot.lane.b32.xlu0 %v791, 104
        %v1012 = vpop.permute.xlu0 %1011
        %v1013 = vsel %vm796, %v1008, 0
        %v1015 = vsel %vm796, %v1010, 0
        %v1017 = vsel %vm796, %v1012, 0
        %1019 = vmatpush.xpose.msra.mxu0 0.0
        %1020 = vmatpush.xpose.msra.mxu0 0.0
        %1021 = vmatpush.xpose.msra.mxu0 0.0
        %1022 = vmatpush.xpose.msra.mxu0 0.0
        %1023 = vmatpush.xpose.msra.mxu0 0.0
        %1024 = vmatpush.xpose.msra.mxu0 0.0
        %1025 = vmatpush.xpose.msra.mxu0 0.0
        %1026 = vmatpush.xpose.msra.mxu0 0.0
        %1027 = vmatpush.xpose.msra.mxu0 0.0
        %1028 = vmatpush.xpose.msra.mxu0 0.0
        %1029 = vmatpush.xpose.msra.mxu0 0.0
        %1030 = vmatpush.xpose.msra.mxu0 0.0
        %1031 = vmatpush.xpose.msra.mxu0 0.0
        %1032 = vmatpush.xpose.msra.mxu0 0.0
        %1033 = vmatpush.xpose.msra.mxu0 %v1017
        %1034 = vmatpush.xpose.msra.mxu0 %v1015
        %1035 = vmatmul.f32.gmra.mxu0 %v1013
        %v1036 = vpop.f32.mrf.mxu0
        %v1037 = vadd.f32 %v795, %v1036
        %1038 = vdwg.mxu0
        %v1039 = vsel %vm826, %v1037, -inf
        %1040 = vmax.xlane.f32.xlu0 %v1039
        %v1041 = vpop.xlane.xlu0 %1040
        %v1042 = vsub.f32 %v1037, %v1041
        %v1043 = vmul.f32 %v1042, 1.442695
        %v1044 = vpow.pop %v1043
        %v1045 = vsel %vm826, %v1044, 0.0
        %1046 = vadd.xlane.f32.xlu0 %v1045
        %v1047 = vpop.xlane.xlu0 %1046
        %v1048 = vrcp.pop %v1047
        %1049 = vrot.lane.b32.xlu0 %v792, 104
        %v1050 = vpop.permute.xlu0 %1049
        %1051 = vrot.lane.b32.xlu0 %v793, 104
        %v1052 = vpop.permute.xlu0 %1051
        %v1056 = vsel %vm826, %v1044, 0
        %1058 = vmatpush.msra.mxu0 0.0
        %1059 = vmatpush.msra.mxu0 0.0
        %1060 = vmatpush.msra.mxu0 0.0
        %1061 = vmatpush.msra.mxu0 0.0
        %1062 = vmatpush.msra.mxu0 0.0
        %1063 = vmatpush.msra.mxu0 0.0
        %1064 = vmatpush.msra.mxu0 0.0
        %1065 = vmatpush.msra.mxu0 0.0
        %1066 = vmatpush.msra.mxu0 0.0
        %1067 = vmatpush.msra.mxu0 0.0
        %1068 = vmatpush.msra.mxu0 0.0
        %1069 = vmatpush.msra.mxu0 0.0
        %1070 = vmatpush.msra.mxu0 0.0
        %1071 = vmatpush.msra.mxu0 0.0
        %1072 = vmatpush.msra.mxu0 %v1052
        %1073 = vmatpush.msra.mxu0 %v1050
        %1074 = vmatmul.f32.gmra.mxu0 %v1056
        %v1075 = vpop.f32.mrf.mxu0
        %v1076 = vadd.f32 0.0, %v1075
        %1077 = vdwg.mxu0
        %v1078 = vmul.f32 %v1076, %v1048
        %1080 = vrot.lane.b32.xlu0 %v934, 8
        %v1081 = vpop.permute.xlu0 %1080
        %1084 = vrot.lane.b32.xlu0 %v1006, 16
        %v1085 = vpop.permute.xlu0 %1084
        %1088 = vrot.lane.b32.xlu0 %v1078, 24
        %v1089 = vpop.permute.xlu0 %1088
        %v1091 = vsel %vm796, %v860, %v1081
        %v1092 = vsel %vm826, %v1091, %v1085
        %vm1093 = vcmask 195584
        %v1094 = vsel %vm1093, %v1092, %v1089
        %v1095 = vld [vmem:[%s9] sm:$0xff]
        %v1096 = vld [vmem:[%s9 + $0x8] sm:$0xff]
        %v1097 = vld [vmem:[%s9 + $0x10] sm:$0xff]
        %v1098 = vld [vmem:[%s9 + $0x18] sm:$0xff]
        %v1099 = vld [vmem:[%s10] sm:$0x1]
        %v1101 = vperm.slane %v1099, 0
        %v1104 = vsel %vm765, %v1094, 0
        %1106 = vmatpush.msra.mxu0 0.0
        %1107 = vmatpush.msra.mxu0 0.0
        %1108 = vmatpush.msra.mxu0 0.0
        %1109 = vmatpush.msra.mxu0 0.0
        %1110 = vmatpush.msra.mxu0 0.0
        %1111 = vmatpush.msra.mxu0 0.0
        %1112 = vmatpush.msra.mxu0 0.0
        %1113 = vmatpush.msra.mxu0 0.0
        %1114 = vmatpush.msra.mxu0 0.0
        %1115 = vmatpush.msra.mxu0 0.0
        %1116 = vmatpush.msra.mxu0 0.0
        %1117 = vmatpush.msra.mxu0 0.0
        %1118 = vmatpush.msra.mxu0 %v1098
        %1119 = vmatpush.msra.mxu0 %v1097
        %1120 = vmatpush.msra.mxu0 %v1096
        %1121 = vmatpush.msra.mxu0 %v1095
        %1122 = vmatmul.f32.gmra.mxu0 %v1104
        %v1123 = vpop.f32.mrf.mxu0
        %v1124 = vadd.f32 %v1101, %v1123
        %1125 = vdwg.mxu0
        %v1126 = vadd.f32 %v1124, %v756
        %v1127 = vld [vmem:[%s11] sm:$0x1]
        %v1128 = vld [vmem:[%s12] sm:$0x1]
        %v1129 = vsel %vm765, %v1126, 0.0
        %1130 = vadd.xlane.f32.xlu0 %v1129
        %v1131 = vpop.xlane.xlu0 %1130
        %v1132 = vrcp.pop 32.0
        %v1133 = vmul.f32 32.0, %v1132
        %v1134 = vsub.f32 1.0, %v1133
        %v1135 = vmul.f32 %v1132, %v1134
        %v1136 = vadd.f32 %v1132, %v1135
        %vm1137 = vweird.f32 %v1132
        %v1138 = vsel %vm1137, %v1132, %v1136
        %v1139 = vmul.f32 %v1131, %v1138
        %v1140 = vsub.f32 %v1126, %v1139
        %v1141 = vmul.f32 %v1140, %v1140
        %v1142 = vsel %vm765, %v1141, 0.0
        %1143 = vadd.xlane.f32.xlu0 %v1142
        %v1144 = vpop.xlane.xlu0 %1143
        %v1145 = vmul.f32 %v1144, %v1138
        %v1146 = vadd.f32 %v1145, 1e-12
        %v1147 = vrsqrt.pop %v1146
        %v1148 = vmul.f32 %v1147, %v1146
        %v1149 = vmul.f32 %v1148, %v1147
        %v1150 = vmul.f32 0.5, %v1149
        %v1151 = vsub.f32 1.5, %v1150
        %v1152 = vmul.f32 %v1147, %v1151
        %vm1153 = vweird.f32 %v1146
        %vm1154 = vweird.f32 %v1147
        %vm1155 = vmor %vm1153, %vm1154
        %v1156 = vsel %vm1155, %v1147, %v1152
        %v1157 = vmul.f32 %v1140, %v1156
        %v1159 = vperm.slane %v1127, 0
        %v1161 = vmul.f32 %v1157, %v1159
        %v1163 = vperm.slane %v1128, 0
        %v1165 = vadd.f32 %v1161, %v1163
        %v1166 = vld [vmem:[%s13] sm:$0xff]
        %v1167 = vld [vmem:[%s13 + $0x8] sm:$0xff]
        %v1168 = vld [vmem:[%s13 + $0x10] sm:$0xff]
        %v1169 = vld [vmem:[%s13 + $0x18] sm:$0xff]
        %v1170 = vld [vmem:[%s13 + $0x20] sm:$0xff]
        %v1171 = vld [vmem:[%s13 + $0x28] sm:$0xff]
        %v1172 = vld [vmem:[%s13 + $0x30] sm:$0xff]
        %v1173 = vld [vmem:[%s13 + $0x38] sm:$0xff]
        %v1174 = vld [vmem:[%s14] sm:$0x1]
        %v1175 = vperm.slane %v1174, 0
        %v1177 = vsel %vm765, %v1124, 0
        %v1180 = vsel %vm765, %v1166, 0
        %v1183 = vsel %vm765, %v1167, 0
        %v1186 = vsel %vm765, %v1168, 0
        %v1189 = vsel %vm765, %v1169, 0
        %v1192 = vsel %vm765, %v1170, 0
        %v1195 = vsel %vm765, %v1171, 0
        %v1198 = vsel %vm765, %v1172, 0
        %v1201 = vsel %vm765, %v1173, 0
        %1203 = vmatpush.xpose.msra.mxu0 0.0
        %1204 = vmatpush.xpose.msra.mxu0 0.0
        %1205 = vmatpush.xpose.msra.mxu0 0.0
        %1206 = vmatpush.xpose.msra.mxu0 0.0
        %1207 = vmatpush.xpose.msra.mxu0 0.0
        %1208 = vmatpush.xpose.msra.mxu0 0.0
        %1209 = vmatpush.xpose.msra.mxu0 0.0
        %1210 = vmatpush.xpose.msra.mxu0 0.0
        %1211 = vmatpush.xpose.msra.mxu0 %v1201
        %1212 = vmatpush.xpose.msra.mxu0 %v1198
        %1213 = vmatpush.xpose.msra.mxu0 %v1195
        %1214 = vmatpush.xpose.msra.mxu0 %v1192
        %1215 = vmatpush.xpose.msra.mxu0 %v1189
        %1216 = vmatpush.xpose.msra.mxu0 %v1186
        %1217 = vmatpush.xpose.msra.mxu0 %v1183
        %1218 = vmatpush.xpose.msra.mxu0 %v1180
        %1219 = vmatmul.f32.gmra.mxu0 %v1177
        %v1220 = vpop.f32.mrf.mxu0
        %v1221 = vadd.f32 %v1175, %v1220
        %1222 = vdwg.mxu0
        %v1223 = vmax.f32 %v1221, 0.0
        %v1224 = vld [vmem:[%s15] sm:$0xff]
        %v1225 = vld [vmem:[%s15 + $0x8] sm:$0xff]
        %v1226 = vld [vmem:[%s15 + $0x10] sm:$0xff]
        %v1227 = vld [vmem:[%s15 + $0x18] sm:$0xff]
        %v1228 = vld [vmem:[%s15 + $0x20] sm:$0xff]
        %v1229 = vld [vmem:[%s15 + $0x28] sm:$0xff]
        %v1230 = vld [vmem:[%s15 + $0x30] sm:$0xff]
        %v1231 = vld [vmem:[%s15 + $0x38] sm:$0xff]
        %s1232 = scalar_lea.vmem %s13, 64
        %v1233 = vld [vmem:[%s1232] sm:$0xff]
        %v1234 = vld [vmem:[%s1232 + $0x8] sm:$0xff]
        %v1235 = vld [vmem:[%s1232 + $0x10] sm:$0xff]
        %v1236 = vld [vmem:[%s1232 + $0x18] sm:$0xff]
        %v1237 = vld [vmem:[%s1232 + $0x20] sm:$0xff]
        %v1238 = vld [vmem:[%s1232 + $0x28] sm:$0xff]
        %v1239 = vld [vmem:[%s1232 + $0x30] sm:$0xff]
        %v1240 = vld [vmem:[%s1232 + $0x38] sm:$0xff]
        %v1241 = vld [vmem:[%s14 + $0x1] sm:$0x1]
        %v1242 = vperm.slane %v1241, 0
        %v1244 = vsel %vm765, %v1233, 0
        %v1247 = vsel %vm765, %v1234, 0
        %v1250 = vsel %vm765, %v1235, 0
        %v1253 = vsel %vm765, %v1236, 0
        %v1256 = vsel %vm765, %v1237, 0
        %v1259 = vsel %vm765, %v1238, 0
        %v1262 = vsel %vm765, %v1239, 0
        %v1265 = vsel %vm765, %v1240, 0
        %1267 = vmatpush.xpose.msra.mxu0 0.0
        %1268 = vmatpush.xpose.msra.mxu0 0.0
        %1269 = vmatpush.xpose.msra.mxu0 0.0
        %1270 = vmatpush.xpose.msra.mxu0 0.0
        %1271 = vmatpush.xpose.msra.mxu0 0.0
        %1272 = vmatpush.xpose.msra.mxu0 0.0
        %1273 = vmatpush.xpose.msra.mxu0 0.0
        %1274 = vmatpush.xpose.msra.mxu0 0.0
        %1275 = vmatpush.xpose.msra.mxu0 %v1265
        %1276 = vmatpush.xpose.msra.mxu0 %v1262
        %1277 = vmatpush.xpose.msra.mxu0 %v1259
        %1278 = vmatpush.xpose.msra.mxu0 %v1256
        %1279 = vmatpush.xpose.msra.mxu0 %v1253
        %1280 = vmatpush.xpose.msra.mxu0 %v1250
        %1281 = vmatpush.xpose.msra.mxu0 %v1247
        %1282 = vmatpush.xpose.msra.mxu0 %v1244
        %1283 = vmatmul.f32.gmra.mxu0 %v1177
        %v1284 = vpop.f32.mrf.mxu0
        %v1285 = vadd.f32 %v1242, %v1284
        %1286 = vdwg.mxu0
        %v1287 = vmax.f32 %v1285, 0.0
        %s1288 = scalar_lea.vmem %s15, 64
        %v1289 = vld [vmem:[%s1288] sm:$0xff]
        %v1290 = vld [vmem:[%s1288 + $0x8] sm:$0xff]
        %v1291 = vld [vmem:[%s1288 + $0x10] sm:$0xff]
        %v1292 = vld [vmem:[%s1288 + $0x18] sm:$0xff]
        %v1293 = vld [vmem:[%s1288 + $0x20] sm:$0xff]
        %v1294 = vld [vmem:[%s1288 + $0x28] sm:$0xff]
        %v1295 = vld [vmem:[%s1288 + $0x30] sm:$0xff]
        %v1296 = vld [vmem:[%s1288 + $0x38] sm:$0xff]
        %vm1297 = vcmask 523264
        %v1299 = vsel %vm1297, %v1287, 0
        %1301 = vmatpush.msra.mxu0 0.0
        %1302 = vmatpush.msra.mxu0 0.0
        %1303 = vmatpush.msra.mxu0 0.0
        %1304 = vmatpush.msra.mxu0 0.0
        %1305 = vmatpush.msra.mxu0 0.0
        %1306 = vmatpush.msra.mxu0 0.0
        %1307 = vmatpush.msra.mxu0 0.0
        %1308 = vmatpush.msra.mxu0 0.0
        %1309 = vmatpush.msra.mxu0 %v1296
        %1310 = vmatpush.msra.mxu0 %v1295
        %1311 = vmatpush.msra.mxu0 %v1294
        %1312 = vmatpush.msra.mxu0 %v1293
        %1313 = vmatpush.msra.mxu0 %v1292
        %1314 = vmatpush.msra.mxu0 %v1291
        %1315 = vmatpush.msra.mxu0 %v1290
        %1316 = vmatpush.msra.mxu0 %v1289
        %1317 = vmatmul.f32.gmra.mxu0 %v1299
        %v1318 = vpop.f32.mrf.mxu0
        %v1319 = vadd.f32 0.0, %v1318
        %1320 = vdwg.mxu0
        %v1322 = vsel %vm1297, %v1223, 0
        %1324 = vmatpush.msra.mxu0 0.0
        %1325 = vmatpush.msra.mxu0 0.0
        %1326 = vmatpush.msra.mxu0 0.0
        %1327 = vmatpush.msra.mxu0 0.0
        %1328 = vmatpush.msra.mxu0 0.0
        %1329 = vmatpush.msra.mxu0 0.0
        %1330 = vmatpush.msra.mxu0 0.0
        %1331 = vmatpush.msra.mxu0 0.0
        %1332 = vmatpush.msra.mxu0 %v1231
        %1333 = vmatpush.msra.mxu0 %v1230
        %1334 = vmatpush.msra.mxu0 %v1229
        %1335 = vmatpush.msra.mxu0 %v1228
        %1336 = vmatpush.msra.mxu0 %v1227
        %1337 = vmatpush.msra.mxu0 %v1226
        %1338 = vmatpush.msra.mxu0 %v1225
        %1339 = vmatpush.msra.mxu0 %v1224
        %1340 = vmatmul.f32.gmra.mxu0 %v1322
        %v1341 = vpop.f32.mrf.mxu0
        %v1342 = vadd.f32 %v1319, %v1341
        %1343 = vdwg.mxu0
        %v1344 = vld [vmem:[%s16] sm:$0x1]
        %v1346 = vperm.slane %v1344, 0
        %v1348 = vadd.f32 %v1342, %v1346
        %v1349 = vadd.f32 %v1348, %v1165
        %v1350 = vld [vmem:[%s17] sm:$0x1]
        %v1351 = vld [vmem:[%s18] sm:$0x1]
        %v1352 = vsel %vm765, %v1349, 0.0
        %1353 = vadd.xlane.f32.xlu0 %v1352
        %v1354 = vpop.xlane.xlu0 %1353
        %v1355 = vmul.f32 %v1354, %v1138
        %v1356 = vsub.f32 %v1349, %v1355
        %v1357 = vmul.f32 %v1356, %v1356
        %v1358 = vsel %vm765, %v1357, 0.0
        %1359 = vadd.xlane.f32.xlu0 %v1358
        %v1360 = vpop.xlane.xlu0 %1359
        %v1361 = vmul.f32 %v1360, %v1138
        %v1362 = vadd.f32 %v1361, 1e-12
        %v1363 = vrsqrt.pop %v1362
        %v1364 = vmul.f32 %v1363, %v1362
        %v1365 = vmul.f32 %v1364, %v1363
        %v1366 = vmul.f32 0.5, %v1365
        %v1367 = vsub.f32 1.5, %v1366
        %v1368 = vmul.f32 %v1363, %v1367
        %vm1369 = vweird.f32 %v1362
        %vm1370 = vweird.f32 %v1363
        %vm1371 = vmor %vm1369, %vm1370
        %v1372 = vsel %vm1371, %v1363, %v1368
        %v1373 = vmul.f32 %v1356, %v1372
        %v1375 = vperm.slane %v1350, 0
        %v1377 = vmul.f32 %v1373, %v1375
        %v1379 = vperm.slane %v1351, 0
        %v1381 = vadd.f32 %v1377, %v1379
        %1382 = vst.msk [vmem:[%s655] sm:$0xff] %vm765, %v1381
        %s1383 = sand.u32 %s473, 1
        %s1384 = scalar_lea.sflag [#allocation5], %s1383
        %s1385 = sand.u32 %s473, 1
        %s1386 = smul.addr %s1385, 8
        %s1387 = scalar_lea.vmem [#allocation4], %s1386
        // Predicated region
        $region101: #{tpu_custom_call.1} parent=95 // pred_check
          %p1388 = pneg %p483
        $region102: #{tpu_custom_call.1} parent=95 // pred_check_branch
          %1390 = sbr.rel (%p1388) target = $region104
        $region103: #{tpu_custom_call.1} parent=95 // pred_region
          %1392 = vsyncadd %s1384, 0
          %s1393 = smul.addr %s37, 2
          %s1394 = sadd.s32 %s38, %s1393
          %s1395 = smul.addr %s1394, 8
          %s1396 = scalar_lea.hbm %s19, %s1395
          %s1398 = sshll.u32 %s1387, 4
          %s1399 = int_to_ptr.vmem [resolvable:$true] %s1398
          %s1400 = sshll.u32 %s1396, 4
          %s1401 = int_to_ptr.hbm [resolvable:$true] %s1400
          %1403 = dma.vmem_to_hbm [thread:$0]  %s1399, 128, %s1401, %s1384
        $region104: #{tpu_custom_call.1} parent=95 // pred_fallthru
          _
      $region96: #{tpu_custom_call.1} parent=5 // pred_fallthru
        _
      %p1404 = scmp.le.s32.totalorder 2, %s28
      // Predicated region
      $region105: #{tpu_custom_call.1} parent=5 // pred_check
        %p1405 = pneg %p1404
      $region106: #{tpu_custom_call.1} parent=5 // pred_check_branch
        %1407 = sbr.rel (%p1405) target = $region108
      $region107: #{tpu_custom_call.1} parent=5 // pred_region
        %s1408 = ssub.s32 %s28, 2
        // Predicated region
        $region109: #{tpu_custom_call.1} parent=107 // pred_check
          %p1409 = pneg %p489
        $region110: #{tpu_custom_call.1} parent=107 // pred_check_branch
          %1411 = sbr.rel (%p1409) target = $region112
        $region111: #{tpu_custom_call.1} parent=107 // pred_region
          %s1412 = sand.u32 %s474, 1
          %s1413 = scalar_lea.sflag [#allocation5], %s1412
          %s1414 = sand.u32 %s474, 1
          %s1415 = smul.addr %s1414, 8
          %s1416 = scalar_lea.vmem [#allocation4], %s1415
          %1418 = dma.done %s1413, 128
        $region112: #{tpu_custom_call.1} parent=107 // pred_fallthru
          _
      $region108: #{tpu_custom_call.1} parent=5 // pred_fallthru
        _
    $region6: #{tpu_custom_call.1} parent=1 // loop_footer
      %s32 = sadd.s32 1, %s28
    $region7: #{tpu_custom_call.1} parent=1 // loop_footer_branch
      %27 = sbr.rel target = $region3
    $region8: #{tpu_custom_call.1} parent=1 // loop_exit
      _
    %1419 = vsyncpa [#allocation5], 1
    %s1420 = scalar_lea.sflag [#allocation5], 1
    %1421 = vsyncpa %s1420, 1

// kernel: tpu_custom_call.1
$region0: #{tpu_custom_call.1}
  #allocation0 [shape = 'u32[]', space=smem, size = 0x4, offset = 0x4, fixed_abs, tag = 'smem constant byte address 0x4 - core index']
  #allocation1 [shape = 'u32[72,128]{1,0:T(1,128)}', space=vmem, size = 0x9000, scoped, tag = 'internal scratch']
  #allocation2 [shape = 'f32[16,32]{1,0:T(8,128)}', space=vmem, size = 0x2000, scoped, tag = 'scratch operand']
  #allocation3 [shape = 'f32[16,32]{1,0:T(8,128)}', space=vmem, size = 0x2000, scoped, tag = 'scratch operand']
  %s0 = inlined_call_operand.vmem [shape: f32[2,16,32], index: 0, kind: input, shape index: {}]
  %s1 = inlined_call_operand.vmem [shape: f32[2,16,32], index: 1, kind: input, shape index: {}]
  %s2 = inlined_call_operand.vmem [shape: bf16[2,16,16], index: 2, kind: input, shape index: {}]
  %s3 = inlined_call_operand.vmem [shape: f32[32,32], index: 3, kind: input, shape index: {}]
  %s4 = inlined_call_operand.vmem [shape: f32[1,32], index: 4, kind: input, shape index: {}]
  %s5 = inlined_call_operand.vmem [shape: f32[32,32], index: 5, kind: input, shape index: {}]
  %s6 = inlined_call_operand.vmem [shape: f32[1,32], index: 6, kind: input, shape index: {}]
  %s7 = inlined_call_operand.vmem [shape: f32[32,32], index: 7, kind: input, shape index: {}]
  %s8 = inlined_call_operand.vmem [shape: f32[1,32], index: 8, kind: input, shape index: {}]
  %s9 = inlined_call_operand.vmem [shape: f32[32,32], index: 9, kind: input, shape index: {}]
  %s10 = inlined_call_operand.vmem [shape: f32[1,32], index: 10, kind: input, shape index: {}]
  %s11 = inlined_call_operand.vmem [shape: f32[1,32], index: 11, kind: input, shape index: {}]
  %s12 = inlined_call_operand.vmem [shape: f32[1,32], index: 12, kind: input, shape index: {}]
  %s13 = inlined_call_operand.vmem [shape: f32[128,32], index: 13, kind: input, shape index: {}]
  %s14 = inlined_call_operand.vmem [shape: f32[2,64], index: 14, kind: input, shape index: {}]
  %s15 = inlined_call_operand.vmem [shape: f32[128,32], index: 15, kind: input, shape index: {}]
  %s16 = inlined_call_operand.vmem [shape: f32[1,32], index: 16, kind: input, shape index: {}]
  %s17 = inlined_call_operand.vmem [shape: f32[1,32], index: 17, kind: input, shape index: {}]
  %s18 = inlined_call_operand.vmem [shape: f32[1,32], index: 18, kind: input, shape index: {}]
  %s19 = inlined_call_operand.hbm [shape: f32[2,16,32], index: 19, kind: output, shape index: {}]
  %s20 = sld [smem:[#allocation0]]
  $region113: #{tpu_custom_call.1} parent=0
    _
  %s22 = ssub.s32 1, %s20
  %s23 = scalar_select 0, %s22, %s20
  $region1: #{tpu_custom_call.1} parent=0
    #allocation4 [shape = 'u8[8192]{0}', space=vmem, size = 0x2000, scoped, tag = 'output window, operand 0']
    #allocation5 [shape = 's32[2]{0}', space=sflag, size = 0x8, scoped, tag = 'scoped memory for tpu_custom_call.1']
    %24 = vsyncpa [#allocation5], 0
    %s25 = scalar_lea.sflag [#allocation5], 1
    %26 = vsyncpa %s25, 0
    loop: start=0, step=1, limit=6
    $region2: #{tpu_custom_call.1} parent=1 // loop_pre_header
      _
    $region3: #{tpu_custom_call.1} parent=1 // loop_header
      %s28 = sphi 0, %s32
      %p29 = scmp.ge.s32.totalorder %s28, 6
      %s35 = sphi 0, %s47
      %s36 = sphi 0, %s43
      %s37 = sphi 0, %s35
      %s38 = sphi 0, %s36
      %s39 = sphi 0, %s37
      %s40 = sphi 0, %s38
      %s50 = sphi 0, %s52
      %s53 = sphi 0, %s50
      %s54 = sphi 0, %s53
      %s70 = sphi 0, %s54
      %s78 = sphi 0, %s80
      %s81 = sphi 0, %s78
      %s82 = sphi 0, %s81
      %s98 = sphi 0, %s82
      %s106 = sphi 0, %s108
      %s109 = sphi 0, %s106
      %s110 = sphi 0, %s109
      %s126 = sphi 0, %s110
      %s130 = sphi 0, %s130
      %s132 = sphi 0, %s130
      %s133 = sphi 0, %s132
      %s147 = sphi 0, %s133
      %s151 = sphi 0, %s151
      %s153 = sphi 0, %s151
      %s154 = sphi 0, %s153
      %s168 = sphi 0, %s154
      %s172 = sphi 0, %s172
      %s174 = sphi 0, %s172
      %s175 = sphi 0, %s174
      %s189 = sphi 0, %s175
      %s193 = sphi 0, %s193
      %s195 = sphi 0, %s193
      %s196 = sphi 0, %s195
      %s210 = sphi 0, %s196
      %s214 = sphi 0, %s214
      %s216 = sphi 0, %s214
      %s217 = sphi 0, %s216
      %s231 = sphi 0, %s217
      %s235 = sphi 0, %s235
      %s237 = sphi 0, %s235
      %s238 = sphi 0, %s237
      %s252 = sphi 0, %s238
      %s256 = sphi 0, %s256
      %s258 = sphi 0, %s256
      %s259 = sphi 0, %s258
      %s273 = sphi 0, %s259
      %s277 = sphi 0, %s277
      %s279 = sphi 0, %s277
      %s280 = sphi 0, %s279
      %s294 = sphi 0, %s280
      %s298 = sphi 0, %s298
      %s300 = sphi 0, %s298
      %s301 = sphi 0, %s300
      %s315 = sphi 0, %s301
      %s319 = sphi 0, %s319
      %s321 = sphi 0, %s319
      %s322 = sphi 0, %s321
      %s336 = sphi 0, %s322
      %s340 = sphi 0, %s340
      %s342 = sphi 0, %s340
      %s343 = sphi 0, %s342
      %s357 = sphi 0, %s343
      %s361 = sphi 0, %s361
      %s363 = sphi 0, %s361
      %s364 = sphi 0, %s363
      %s378 = sphi 0, %s364
      %s382 = sphi 0, %s382
      %s384 = sphi 0, %s382
      %s385 = sphi 0, %s384
      %s399 = sphi 0, %s385
      %s403 = sphi 0, %s403
      %s405 = sphi 0, %s403
      %s406 = sphi 0, %s405
      %s420 = sphi 0, %s406
      %s424 = sphi 0, %s424
      %s426 = sphi 0, %s424
      %s427 = sphi 0, %s426
      %s441 = sphi 0, %s427
      %s445 = sphi 0, %s445
      %s447 = sphi 0, %s445
      %s448 = sphi 0, %s447
      %s462 = sphi 0, %s448
      %s470 = sphi 0, %s472
      %s473 = sphi 0, %s470
      %s474 = sphi 0, %s473
      %s490 = sphi 0, %s474
    $region4: #{tpu_custom_call.1} parent=1 // loop_header_branch
      %31 = sbr.rel (%p29) target = $region8
    $region5: #{tpu_custom_call.1} parent=1 // loop_body
      %s33 = ssub.s32 %s28, 1
      %s34 = ssub.s32 %s28, 2
      %s41 = sadd.s32 1, %s36
      %p42 = scmp.ge.s32.totalorder %s41, 2
      %s43 = scalar_select %p42, 0, %s41
      %s44 = sadd.s32 1, %s35
      %s45 = scalar_select %p42, %s44, %s35
      %p46 = scmp.ge.s32.totalorder %s45, 2
      %s47 = scalar_select %p46, 0, %s45
      %s48 = ssub.s32 %s35, %s47
      %p49 = scmp.eq.s32.totalorder %s48, 0
      %s51 = sadd.s32 %s50, 1
      %s52 = scalar_select %p49, %s50, %s51
      %p55 = pneg %p49
      %p56 = scmp.eq.s32.totalorder %s28, 3
      %p57 = por %p55, %p56
      %p58 = scmp.ne.s32.totalorder %s50, %s53
      %p59 = scmp.eq.s32.totalorder %s28, 0
      %p60 = por %p58, %p59
      %p61 = scmp.ne.s32.totalorder %s50, %s53
      %p62 = scmp.eq.s32.totalorder %s33, 3
      %p63 = por %p61, %p62
      %p64 = scmp.ne.s32.totalorder %s53, %s54
      %p65 = scmp.eq.s32.totalorder %s33, 0
      %p66 = por %p64, %p65
      %p67 = scmp.ne.s32.totalorder %s53, %s54
      %p68 = scmp.eq.s32.totalorder %s34, 3
      %p69 = por %p67, %p68
      %p71 = scmp.ne.s32.totalorder %s54, %s70
      %p72 = scmp.eq.s32.totalorder %s34, 0
      %p73 = por %p71, %p72
      %s74 = ssub.s32 %s35, %s47
      %s75 = ssub.s32 %s36, %s43
      %s76 = sor.u32 %s74, %s75
      %p77 = scmp.eq.s32.totalorder %s76, 0
      %s79 = sadd.s32 %s78, 1
      %s80 = scalar_select %p77, %s78, %s79
      %p83 = pneg %p77
      %p84 = scmp.eq.s32.totalorder %s28, 3
      %p85 = por %p83, %p84
      %p86 = scmp.ne.s32.totalorder %s78, %s81
      %p87 = scmp.eq.s32.totalorder %s28, 0
      %p88 = por %p86, %p87
      %p89 = scmp.ne.s32.totalorder %s78, %s81
      %p90 = scmp.eq.s32.totalorder %s33, 3
      %p91 = por %p89, %p90
      %p92 = scmp.ne.s32.totalorder %s81, %s82
      %p93 = scmp.eq.s32.totalorder %s33, 0
      %p94 = por %p92, %p93
      %p95 = scmp.ne.s32.totalorder %s81, %s82
      %p96 = scmp.eq.s32.totalorder %s34, 3
      %p97 = por %p95, %p96
      %p99 = scmp.ne.s32.totalorder %s82, %s98
      %p100 = scmp.eq.s32.totalorder %s34, 0
      %p101 = por %p99, %p100
      %s102 = ssub.s32 %s35, %s47
      %s103 = ssub.s32 %s36, %s43
      %s104 = sor.u32 %s102, %s103
      %p105 = scmp.eq.s32.totalorder %s104, 0
      %s107 = sadd.s32 %s106, 1
      %s108 = scalar_select %p105, %s106, %s107
      %p111 = pneg %p105
      %p112 = scmp.eq.s32.totalorder %s28, 3
      %p113 = por %p111, %p112
      %p114 = scmp.ne.s32.totalorder %s106, %s109
      %p115 = scmp.eq.s32.totalorder %s28, 0
      %p116 = por %p114, %p115
      %p117 = scmp.ne.s32.totalorder %s106, %s109
      %p118 = scmp.eq.s32.totalorder %s33, 3
      %p119 = por %p117, %p118
      %p120 = scmp.ne.s32.totalorder %s109, %s110
      %p121 = scmp.eq.s32.totalorder %s33, 0
      %p122 = por %p120, %p121
      %p123 = scmp.ne.s32.totalorder %s109, %s110
      %p124 = scmp.eq.s32.totalorder %s34, 3
      %p125 = por %p123, %p124
      %p127 = scmp.ne.s32.totalorder %s110, %s126
      %p128 = scmp.eq.s32.totalorder %s34, 0
      %p129 = por %p127, %p128
      %s131 = sadd.s32 %s130, 1
      %p134 = scmp.eq.s32.totalorder %s28, 3
      %p135 = scmp.ne.s32.totalorder %s130, %s132
      %p136 = scmp.eq.s32.totalorder %s28, 0
      %p137 = por %p135, %p136
      %p138 = scmp.ne.s32.totalorder %s130, %s132
      %p139 = scmp.eq.s32.totalorder %s33, 3
      %p140 = por %p138, %p139
      %p141 = scmp.ne.s32.totalorder %s132, %s133
      %p142 = scmp.eq.s32.totalorder %s33, 0
      %p143 = por %p141, %p142
      %p144 = scmp.ne.s32.totalorder %s132, %s133
      %p145 = scmp.eq.s32.totalorder %s34, 3
      %p146 = por %p144, %p145
      %p148 = scmp.ne.s32.totalorder %s133, %s147
      %p149 = scmp.eq.s32.totalorder %s34, 0
      %p150 = por %p148, %p149
      %s152 = sadd.s32 %s151, 1
      %p155 = scmp.eq.s32.totalorder %s28, 3
      %p156 = scmp.ne.s32.totalorder %s151, %s153
      %p157 = scmp.eq.s32.totalorder %s28, 0
      %p158 = por %p156, %p157
      %p159 = scmp.ne.s32.totalorder %s151, %s153
      %p160 = scmp.eq.s32.totalorder %s33, 3
      %p161 = por %p159, %p160
      %p162 = scmp.ne.s32.totalorder %s153, %s154
      %p163 = scmp.eq.s32.totalorder %s33, 0
      %p164 = por %p162, %p163
      %p165 = scmp.ne.s32.totalorder %s153, %s154
      %p166 = scmp.eq.s32.totalorder %s34, 3
      %p167 = por %p165, %p166
      %p169 = scmp.ne.s32.totalorder %s154, %s168
      %p170 = scmp.eq.s32.totalorder %s34, 0
      %p171 = por %p169, %p170
      %s173 = sadd.s32 %s172, 1
      %p176 = scmp.eq.s32.totalorder %s28, 3
      %p177 = scmp.ne.s32.totalorder %s172, %s174
      %p178 = scmp.eq.s32.totalorder %s28, 0
      %p179 = por %p177, %p178
      %p180 = scmp.ne.s32.totalorder %s172, %s174
      %p181 = scmp.eq.s32.totalorder %s33, 3
      %p182 = por %p180, %p181
      %p183 = scmp.ne.s32.totalorder %s174, %s175
      %p184 = scmp.eq.s32.totalorder %s33, 0
      %p185 = por %p183, %p184
      %p186 = scmp.ne.s32.totalorder %s174, %s175
      %p187 = scmp.eq.s32.totalorder %s34, 3
      %p188 = por %p186, %p187
      %p190 = scmp.ne.s32.totalorder %s175, %s189
      %p191 = scmp.eq.s32.totalorder %s34, 0
      %p192 = por %p190, %p191
      %s194 = sadd.s32 %s193, 1
      %p197 = scmp.eq.s32.totalorder %s28, 3
      %p198 = scmp.ne.s32.totalorder %s193, %s195
      %p199 = scmp.eq.s32.totalorder %s28, 0
      %p200 = por %p198, %p199
      %p201 = scmp.ne.s32.totalorder %s193, %s195
      %p202 = scmp.eq.s32.totalorder %s33, 3
      %p203 = por %p201, %p202
      %p204 = scmp.ne.s32.totalorder %s195, %s196
      %p205 = scmp.eq.s32.totalorder %s33, 0
      %p206 = por %p204, %p205
      %p207 = scmp.ne.s32.totalorder %s195, %s196
      %p208 = scmp.eq.s32.totalorder %s34, 3
      %p209 = por %p207, %p208
      %p211 = scmp.ne.s32.totalorder %s196, %s210
      %p212 = scmp.eq.s32.totalorder %s34, 0
      %p213 = por %p211, %p212
      %s215 = sadd.s32 %s214, 1
      %p218 = scmp.eq.s32.totalorder %s28, 3
      %p219 = scmp.ne.s32.totalorder %s214, %s216
      %p220 = scmp.eq.s32.totalorder %s28, 0
      %p221 = por %p219, %p220
      %p222 = scmp.ne.s32.totalorder %s214, %s216
      %p223 = scmp.eq.s32.totalorder %s33, 3
      %p224 = por %p222, %p223
      %p225 = scmp.ne.s32.totalorder %s216, %s217
      %p226 = scmp.eq.s32.totalorder %s33, 0
      %p227 = por %p225, %p226
      %p228 = scmp.ne.s32.totalorder %s216, %s217
      %p229 = scmp.eq.s32.totalorder %s34, 3
      %p230 = por %p228, %p229
      %p232 = scmp.ne.s32.totalorder %s217, %s231
      %p233 = scmp.eq.s32.totalorder %s34, 0
      %p234 = por %p232, %p233
      %s236 = sadd.s32 %s235, 1
      %p239 = scmp.eq.s32.totalorder %s28, 3
      %p240 = scmp.ne.s32.totalorder %s235, %s237
      %p241 = scmp.eq.s32.totalorder %s28, 0
      %p242 = por %p240, %p241
      %p243 = scmp.ne.s32.totalorder %s235, %s237
      %p244 = scmp.eq.s32.totalorder %s33, 3
      %p245 = por %p243, %p244
      %p246 = scmp.ne.s32.totalorder %s237, %s238
      %p247 = scmp.eq.s32.totalorder %s33, 0
      %p248 = por %p246, %p247
      %p249 = scmp.ne.s32.totalorder %s237, %s238
      %p250 = scmp.eq.s32.totalorder %s34, 3
      %p251 = por %p249, %p250
      %p253 = scmp.ne.s32.totalorder %s238, %s252
      %p254 = scmp.eq.s32.totalorder %s34, 0
      %p255 = por %p253, %p254
      %s257 = sadd.s32 %s256, 1
      %p260 = scmp.eq.s32.totalorder %s28, 3
      %p261 = scmp.ne.s32.totalorder %s256, %s258
      %p262 = scmp.eq.s32.totalorder %s28, 0
      %p263 = por %p261, %p262
      %p264 = scmp.ne.s32.totalorder %s256, %s258
      %p265 = scmp.eq.s32.totalorder %s33, 3
      %p266 = por %p264, %p265
      %p267 = scmp.ne.s32.totalorder %s258, %s259
      %p268 = scmp.eq.s32.totalorder %s33, 0
      %p269 = por %p267, %p268
      %p270 = scmp.ne.s32.totalorder %s258, %s259
      %p271 = scmp.eq.s32.totalorder %s34, 3
      %p272 = por %p270, %p271
      %p274 = scmp.ne.s32.totalorder %s259, %s273
      %p275 = scmp.eq.s32.totalorder %s34, 0
      %p276 = por %p274, %p275
      %s278 = sadd.s32 %s277, 1
      %p281 = scmp.eq.s32.totalorder %s28, 3
      %p282 = scmp.ne.s32.totalorder %s277, %s279
      %p283 = scmp.eq.s32.totalorder %s28, 0
      %p284 = por %p282, %p283
      %p285 = scmp.ne.s32.totalorder %s277, %s279
      %p286 = scmp.eq.s32.totalorder %s33, 3
      %p287 = por %p285, %p286
      %p288 = scmp.ne.s32.totalorder %s279, %s280
      %p289 = scmp.eq.s32.totalorder %s33, 0
      %p290 = por %p288, %p289
      %p291 = scmp.ne.s32.totalorder %s279, %s280
      %p292 = scmp.eq.s32.totalorder %s34, 3
      %p293 = por %p291, %p292
      %p295 = scmp.ne.s32.totalorder %s280, %s294
      %p296 = scmp.eq.s32.totalorder %s34, 0
      %p297 = por %p295, %p296
      %s299 = sadd.s32 %s298, 1
      %p302 = scmp.eq.s32.totalorder %s28, 3
      %p303 = scmp.ne.s32.totalorder %s298, %s300
      %p304 = scmp.eq.s32.totalorder %s28, 0
      %p305 = por %p303, %p304
      %p306 = scmp.ne.s32.totalorder %s298, %s300
      %p307 = scmp.eq.s32.totalorder %s33, 3
      %p308 = por %p306, %p307
      %p309 = scmp.ne.s32.totalorder %s300, %s301
      %p310 = scmp.eq.s32.totalorder %s33, 0
      %p311 = por %p309, %p310
      %p312 = scmp.ne.s32.totalorder %s300, %s301
      %p313 = scmp.eq.s32.totalorder %s34, 3
      %p314 = por %p312, %p313
      %p316 = scmp.ne.s32.totalorder %s301, %s315
      %p317 = scmp.eq.s32.totalorder %s34, 0
      %p318 = por %p316, %p317
      %s320 = sadd.s32 %s319, 1
      %p323 = scmp.eq.s32.totalorder %s28, 3
      %p324 = scmp.ne.s32.totalorder %s319, %s321
      %p325 = scmp.eq.s32.totalorder %s28, 0
      %p326 = por %p324, %p325
      %p327 = scmp.ne.s32.totalorder %s319, %s321
      %p328 = scmp.eq.s32.totalorder %s33, 3
      %p329 = por %p327, %p328
      %p330 = scmp.ne.s32.totalorder %s321, %s322
      %p331 = scmp.eq.s32.totalorder %s33, 0
      %p332 = por %p330, %p331
      %p333 = scmp.ne.s32.totalorder %s321, %s322
      %p334 = scmp.eq.s32.totalorder %s34, 3
      %p335 = por %p333, %p334
      %p337 = scmp.ne.s32.totalorder %s322, %s336
      %p338 = scmp.eq.s32.totalorder %s34, 0
      %p339 = por %p337, %p338
      %s341 = sadd.s32 %s340, 1
      %p344 = scmp.eq.s32.totalorder %s28, 3
      %p345 = scmp.ne.s32.totalorder %s340, %s342
      %p346 = scmp.eq.s32.totalorder %s28, 0
      %p347 = por %p345, %p346
      %p348 = scmp.ne.s32.totalorder %s340, %s342
      %p349 = scmp.eq.s32.totalorder %s33, 3
      %p350 = por %p348, %p349
      %p351 = scmp.ne.s32.totalorder %s342, %s343
      %p352 = scmp.eq.s32.totalorder %s33, 0
      %p353 = por %p351, %p352
      %p354 = scmp.ne.s32.totalorder %s342, %s343
      %p355 = scmp.eq.s32.totalorder %s34, 3
      %p356 = por %p354, %p355
      %p358 = scmp.ne.s32.totalorder %s343, %s357
      %p359 = scmp.eq.s32.totalorder %s34, 0
      %p360 = por %p358, %p359
      %s362 = sadd.s32 %s361, 1
      %p365 = scmp.eq.s32.totalorder %s28, 3
      %p366 = scmp.ne.s32.totalorder %s361, %s363
      %p367 = scmp.eq.s32.totalorder %s28, 0
      %p368 = por %p366, %p367
      %p369 = scmp.ne.s32.totalorder %s361, %s363
      %p370 = scmp.eq.s32.totalorder %s33, 3
      %p371 = por %p369, %p370
      %p372 = scmp.ne.s32.totalorder %s363, %s364
      %p373 = scmp.eq.s32.totalorder %s33, 0
      %p374 = por %p372, %p373
      %p375 = scmp.ne.s32.totalorder %s363, %s364
      %p376 = scmp.eq.s32.totalorder %s34, 3
      %p377 = por %p375, %p376
      %p379 = scmp.ne.s32.totalorder %s364, %s378
      %p380 = scmp.eq.s32.totalorder %s34, 0
      %p381 = por %p379, %p380
      %s383 = sadd.s32 %s382, 1
      %p386 = scmp.eq.s32.totalorder %s28, 3
      %p387 = scmp.ne.s32.totalorder %s382, %s384
      %p388 = scmp.eq.s32.totalorder %s28, 0
      %p389 = por %p387, %p388
      %p390 = scmp.ne.s32.totalorder %s382, %s384
      %p391 = scmp.eq.s32.totalorder %s33, 3
      %p392 = por %p390, %p391
      %p393 = scmp.ne.s32.totalorder %s384, %s385
      %p394 = scmp.eq.s32.totalorder %s33, 0
      %p395 = por %p393, %p394
      %p396 = scmp.ne.s32.totalorder %s384, %s385
      %p397 = scmp.eq.s32.totalorder %s34, 3
      %p398 = por %p396, %p397
      %p400 = scmp.ne.s32.totalorder %s385, %s399
      %p401 = scmp.eq.s32.totalorder %s34, 0
      %p402 = por %p400, %p401
      %s404 = sadd.s32 %s403, 1
      %p407 = scmp.eq.s32.totalorder %s28, 3
      %p408 = scmp.ne.s32.totalorder %s403, %s405
      %p409 = scmp.eq.s32.totalorder %s28, 0
      %p410 = por %p408, %p409
      %p411 = scmp.ne.s32.totalorder %s403, %s405
      %p412 = scmp.eq.s32.totalorder %s33, 3
      %p413 = por %p411, %p412
      %p414 = scmp.ne.s32.totalorder %s405, %s406
      %p415 = scmp.eq.s32.totalorder %s33, 0
      %p416 = por %p414, %p415
      %p417 = scmp.ne.s32.totalorder %s405, %s406
      %p418 = scmp.eq.s32.totalorder %s34, 3
      %p419 = por %p417, %p418
      %p421 = scmp.ne.s32.totalorder %s406, %s420
      %p422 = scmp.eq.s32.totalorder %s34, 0
      %p423 = por %p421, %p422
      %s425 = sadd.s32 %s424, 1
      %p428 = scmp.eq.s32.totalorder %s28, 3
      %p429 = scmp.ne.s32.totalorder %s424, %s426
      %p430 = scmp.eq.s32.totalorder %s28, 0
      %p431 = por %p429, %p430
      %p432 = scmp.ne.s32.totalorder %s424, %s426
      %p433 = scmp.eq.s32.totalorder %s33, 3
      %p434 = por %p432, %p433
      %p435 = scmp.ne.s32.totalorder %s426, %s427
      %p436 = scmp.eq.s32.totalorder %s33, 0
      %p437 = por %p435, %p436
      %p438 = scmp.ne.s32.totalorder %s426, %s427
      %p439 = scmp.eq.s32.totalorder %s34, 3
      %p440 = por %p438, %p439
      %p442 = scmp.ne.s32.totalorder %s427, %s441
      %p443 = scmp.eq.s32.totalorder %s34, 0
      %p444 = por %p442, %p443
      %s446 = sadd.s32 %s445, 1
      %p449 = scmp.eq.s32.totalorder %s28, 3
      %p450 = scmp.ne.s32.totalorder %s445, %s447
      %p451 = scmp.eq.s32.totalorder %s28, 0
      %p452 = por %p450, %p451
      %p453 = scmp.ne.s32.totalorder %s445, %s447
      %p454 = scmp.eq.s32.totalorder %s33, 3
      %p455 = por %p453, %p454
      %p456 = scmp.ne.s32.totalorder %s447, %s448
      %p457 = scmp.eq.s32.totalorder %s33, 0
      %p458 = por %p456, %p457
      %p459 = scmp.ne.s32.totalorder %s447, %s448
      %p460 = scmp.eq.s32.totalorder %s34, 3
      %p461 = por %p459, %p460
      %p463 = scmp.ne.s32.totalorder %s448, %s462
      %p464 = scmp.eq.s32.totalorder %s34, 0
      %p465 = por %p463, %p464
      %s466 = ssub.s32 %s35, %s47
      %s467 = ssub.s32 %s36, %s43
      %s468 = sor.u32 %s466, %s467
      %p469 = scmp.eq.s32.totalorder %s468, 0
      %s471 = sadd.s32 %s470, 1
      %s472 = scalar_select %p469, %s470, %s471
      %p475 = pneg %p469
      %p476 = scmp.eq.s32.totalorder %s28, 3
      %p477 = por %p475, %p476
      %p478 = scmp.ne.s32.totalorder %s470, %s473
      %p479 = scmp.eq.s32.totalorder %s28, 0
      %p480 = por %p478, %p479
      %p481 = scmp.ne.s32.totalorder %s470, %s473
      %p482 = scmp.eq.s32.totalorder %s33, 3
      %p483 = por %p481, %p482
      %p484 = scmp.ne.s32.totalorder %s473, %s474
      %p485 = scmp.eq.s32.totalorder %s33, 0
      %p486 = por %p484, %p485
      %p487 = scmp.ne.s32.totalorder %s473, %s474
      %p488 = scmp.eq.s32.totalorder %s34, 3
      %p489 = por %p487, %p488
      %p491 = scmp.ne.s32.totalorder %s474, %s490
      %p492 = scmp.eq.s32.totalorder %s34, 0
      %p493 = por %p491, %p492
      %p494 = scmp.le.s32.totalorder 1, %s28
      %p495 = scmp.lt.s32.totalorder %s28, 5
      %p496 = pnand %p494, %p495
      %p497 = pneg %p496
      // Predicated region
      $region9: #{tpu_custom_call.1} parent=5 // pred_check
        _
      $region10: #{tpu_custom_call.1} parent=5 // pred_check_branch
        %499 = sbr.rel (%p496) target = $region12
      $region11: #{tpu_custom_call.1} parent=5 // pred_region
        %s500 = ssub.s32 %s28, 1
        // Predicated region
        $region13: #{tpu_custom_call.1} parent=11 // pred_check
          %p501 = pneg %p143
        $region14: #{tpu_custom_call.1} parent=11 // pred_check_branch
          %503 = sbr.rel (%p501) target = $region16
        $region15: #{tpu_custom_call.1} parent=11 // pred_region
          _
        $region16: #{tpu_custom_call.1} parent=11 // pred_fallthru
          _
        // Predicated region
        $region17: #{tpu_custom_call.1} parent=11 // pred_check
          %p504 = pneg %p164
        $region18: #{tpu_custom_call.1} parent=11 // pred_check_branch
          %506 = sbr.rel (%p504) target = $region20
        $region19: #{tpu_custom_call.1} parent=11 // pred_region
          _
        $region20: #{tpu_custom_call.1} parent=11 // pred_fallthru
          _
        // Predicated region
        $region21: #{tpu_custom_call.1} parent=11 // pred_check
          %p507 = pneg %p185
        $region22: #{tpu_custom_call.1} parent=11 // pred_check_branch
          %509 = sbr.rel (%p507) target = $region24
        $region23: #{tpu_custom_call.1} parent=11 // pred_region
          _
        $region24: #{tpu_custom_call.1} parent=11 // pred_fallthru
          _
        // Predicated region
        $region25: #{tpu_custom_call.1} parent=11 // pred_check
          %p510 = pneg %p206
        $region26: #{tpu_custom_call.1} parent=11 // pred_check_branch
          %512 = sbr.rel (%p510) target = $region28
        $region27: #{tpu_custom_call.1} parent=11 // pred_region
          _
        $region28: #{tpu_custom_call.1} parent=11 // pred_fallthru
          _
        // Predicated region
        $region29: #{tpu_custom_call.1} parent=11 // pred_check
          %p513 = pneg %p227
        $region30: #{tpu_custom_call.1} parent=11 // pred_check_branch
          %515 = sbr.rel (%p513) target = $region32
        $region31: #{tpu_custom_call.1} parent=11 // pred_region
          _
        $region32: #{tpu_custom_call.1} parent=11 // pred_fallthru
          _
        // Predicated region
        $region33: #{tpu_custom_call.1} parent=11 // pred_check
          %p516 = pneg %p248
        $region34: #{tpu_custom_call.1} parent=11 // pred_check_branch
          %518 = sbr.rel (%p516) target = $region36
        $region35: #{tpu_custom_call.1} parent=11 // pred_region
          _
        $region36: #{tpu_custom_call.1} parent=11 // pred_fallthru
          _
        // Predicated region
        $region37: #{tpu_custom_call.1} parent=11 // pred_check
          %p519 = pneg %p269
        $region38: #{tpu_custom_call.1} parent=11 // pred_check_branch
          %521 = sbr.rel (%p519) target = $region40
        $region39: #{tpu_custom_call.1} parent=11 // pred_region
          _
        $region40: #{tpu_custom_call.1} parent=11 // pred_fallthru
          _
        // Predicated region
        $region41: #{tpu_custom_call.1} parent=11 // pred_check
          %p522 = pneg %p290
        $region42: #{tpu_custom_call.1} parent=11 // pred_check_branch
          %524 = sbr.rel (%p522) target = $region44
        $region43: #{tpu_custom_call.1} parent=11 // pred_region
          _
        $region44: #{tpu_custom_call.1} parent=11 // pred_fallthru
          _
        // Predicated region
        $region45: #{tpu_custom_call.1} parent=11 // pred_check
          %p525 = pneg %p311
        $region46: #{tpu_custom_call.1} parent=11 // pred_check_branch
          %527 = sbr.rel (%p525) target = $region48
        $region47: #{tpu_custom_call.1} parent=11 // pred_region
          _
        $region48: #{tpu_custom_call.1} parent=11 // pred_fallthru
          _
        // Predicated region
        $region49: #{tpu_custom_call.1} parent=11 // pred_check
          %p528 = pneg %p332
        $region50: #{tpu_custom_call.1} parent=11 // pred_check_branch
          %530 = sbr.rel (%p528) target = $region52
        $region51: #{tpu_custom_call.1} parent=11 // pred_region
          _
        $region52: #{tpu_custom_call.1} parent=11 // pred_fallthru
          _
        // Predicated region
        $region53: #{tpu_custom_call.1} parent=11 // pred_check
          %p531 = pneg %p353
        $region54: #{tpu_custom_call.1} parent=11 // pred_check_branch
          %533 = sbr.rel (%p531) target = $region56
        $region55: #{tpu_custom_call.1} parent=11 // pred_region
          _
        $region56: #{tpu_custom_call.1} parent=11 // pred_fallthru
          _
        // Predicated region
        $region57: #{tpu_custom_call.1} parent=11 // pred_check
          %p534 = pneg %p374
        $region58: #{tpu_custom_call.1} parent=11 // pred_check_branch
          %536 = sbr.rel (%p534) target = $region60
        $region59: #{tpu_custom_call.1} parent=11 // pred_region
          _
        $region60: #{tpu_custom_call.1} parent=11 // pred_fallthru
          _
        // Predicated region
        $region61: #{tpu_custom_call.1} parent=11 // pred_check
          %p537 = pneg %p395
        $region62: #{tpu_custom_call.1} parent=11 // pred_check_branch
          %539 = sbr.rel (%p537) target = $region64
        $region63: #{tpu_custom_call.1} parent=11 // pred_region
          _
        $region64: #{tpu_custom_call.1} parent=11 // pred_fallthru
          _
        // Predicated region
        $region65: #{tpu_custom_call.1} parent=11 // pred_check
          %p540 = pneg %p416
        $region66: #{tpu_custom_call.1} parent=11 // pred_check_branch
          %542 = sbr.rel (%p540) target = $region68
        $region67: #{tpu_custom_call.1} parent=11 // pred_region
          _
        $region68: #{tpu_custom_call.1} parent=11 // pred_fallthru
          _
        // Predicated region
        $region69: #{tpu_custom_call.1} parent=11 // pred_check
          %p543 = pneg %p437
        $region70: #{tpu_custom_call.1} parent=11 // pred_check_branch
          %545 = sbr.rel (%p543) target = $region72
        $region71: #{tpu_custom_call.1} parent=11 // pred_region
          _
        $region72: #{tpu_custom_call.1} parent=11 // pred_fallthru
          _
        // Predicated region
        $region73: #{tpu_custom_call.1} parent=11 // pred_check
          %p546 = pneg %p458
        $region74: #{tpu_custom_call.1} parent=11 // pred_check_branch
          %548 = sbr.rel (%p546) target = $region76
        $region75: #{tpu_custom_call.1} parent=11 // pred_region
          _
        $region76: #{tpu_custom_call.1} parent=11 // pred_fallthru
          _
      $region12: #{tpu_custom_call.1} parent=5 // pred_fallthru
        _
      %p549 = scmp.lt.s32.totalorder %s28, 4
      // Predicated region
      $region77: #{tpu_custom_call.1} parent=5 // pred_check
        %p550 = pneg %p549
      $region78: #{tpu_custom_call.1} parent=5 // pred_check_branch
        %552 = sbr.rel (%p550) target = $region80
      $region79: #{tpu_custom_call.1} parent=5 // pred_region
        // Predicated region
        $region81: #{tpu_custom_call.1} parent=79 // pred_check
          %p553 = pneg %p60
        $region82: #{tpu_custom_call.1} parent=79 // pred_check_branch
          %555 = sbr.rel (%p553) target = $region84
        $region83: #{tpu_custom_call.1} parent=79 // pred_region
          %p556 = scmp.lt.s32.totalorder %s35, 1
          %s557 = scalar_select %p556, %s35, 1
          %s558 = smul.addr %s557, 2
          %s559 = smul.addr %s558, 8
          %s560 = scalar_lea.vmem %s0, %s559
        $region84: #{tpu_custom_call.1} parent=79 // pred_fallthru
          _
        // Predicated region
        $region85: #{tpu_custom_call.1} parent=79 // pred_check
          %p561 = pneg %p88
        $region86: #{tpu_custom_call.1} parent=79 // pred_check_branch
          %563 = sbr.rel (%p561) target = $region88
        $region87: #{tpu_custom_call.1} parent=79 // pred_region
          %p564 = scmp.lt.s32.totalorder %s35, 1
          %s565 = scalar_select %p564, %s35, 1
          %p566 = scmp.lt.s32.totalorder %s36, 1
          %s567 = scalar_select %p566, %s36, 1
          %s568 = smul.addr %s565, 2
          %s569 = sadd.s32 %s567, %s568
          %s570 = smul.addr %s569, 8
          %s571 = scalar_lea.vmem %s1, %s570
        $region88: #{tpu_custom_call.1} parent=79 // pred_fallthru
          _
        // Predicated region
        $region89: #{tpu_custom_call.1} parent=79 // pred_check
          %p572 = pneg %p116
        $region90: #{tpu_custom_call.1} parent=79 // pred_check_branch
          %574 = sbr.rel (%p572) target = $region92
        $region91: #{tpu_custom_call.1} parent=79 // pred_region
          %p575 = scmp.lt.s32.totalorder %s35, 1
          %s576 = scalar_select %p575, %s35, 1
          %p577 = scmp.lt.s32.totalorder %s36, 1
          %s578 = scalar_select %p577, %s36, 1
          %s579 = smul.addr %s576, 2
          %s580 = sadd.s32 %s578, %s579
          %s581 = smul.addr %s580, 4
          %s582 = scalar_lea.vmem %s2, %s581
        $region92: #{tpu_custom_call.1} parent=79 // pred_fallthru
          _
      $region80: #{tpu_custom_call.1} parent=5 // pred_fallthru
        _
      %p583 = scmp.le.s32.totalorder 1, %s28
      %p584 = scmp.lt.s32.totalorder %s28, 5
      %p585 = pnand %p583, %p584
      %p586 = pneg %p585
      // Predicated region
      $region93: #{tpu_custom_call.1} parent=5 // pred_check
        _
      $region94: #{tpu_custom_call.1} parent=5 // pred_check_branch
        %588 = sbr.rel (%p585) target = $region96
      $region95: #{tpu_custom_call.1} parent=5 // pred_region
        %s589 = ssub.s32 %s28, 1
        %p590 = scmp.lt.s32.totalorder %s37, 1
        %s591 = scalar_select %p590, %s37, 1
        %s592 = smul.addr %s591, 2
        %s593 = smul.addr %s592, 8
        %s594 = scalar_lea.vmem %s0, %s593
        %p595 = pneg %p66
        %p596 = pneg %p63
        %p597 = scmp.lt.s32.totalorder %s37, 1
        %s598 = scalar_select %p597, %s37, 1
        %p599 = scmp.lt.s32.totalorder %s38, 1
        %s600 = scalar_select %p599, %s38, 1
        %s601 = smul.addr %s598, 2
        %s602 = sadd.s32 %s600, %s601
        %s603 = smul.addr %s602, 8
        %s604 = scalar_lea.vmem %s1, %s603
        %p605 = pneg %p94
        %p606 = pneg %p91
        %p607 = scmp.lt.s32.totalorder %s37, 1
        %s608 = scalar_select %p607, %s37, 1
        %p609 = scmp.lt.s32.totalorder %s38, 1
        %s610 = scalar_select %p609, %s38, 1
        %s611 = smul.addr %s608, 2
        %s612 = sadd.s32 %s610, %s611
        %s613 = smul.addr %s612, 4
        %s614 = scalar_lea.vmem %s2, %s613
        %p615 = pneg %p122
        %p616 = pneg %p119
        %p617 = pneg %p143
        %p618 = pneg %p140
        %p619 = pneg %p164
        %p620 = pneg %p161
        %p621 = pneg %p185
        %p622 = pneg %p182
        %p623 = pneg %p206
        %p624 = pneg %p203
        %p625 = pneg %p227
        %p626 = pneg %p224
        %p627 = pneg %p248
        %p628 = pneg %p245
        %p629 = pneg %p269
        %p630 = pneg %p266
        %p631 = pneg %p290
        %p632 = pneg %p287
        %p633 = pneg %p311
        %p634 = pneg %p308
        %p635 = pneg %p332
        %p636 = pneg %p329
        %p637 = pneg %p353
        %p638 = pneg %p350
        %p639 = pneg %p374
        %p640 = pneg %p371
        %p641 = pneg %p395
        %p642 = pneg %p392
        %p643 = pneg %p416
        %p644 = pneg %p413
        %p645 = pneg %p437
        %p646 = pneg %p434
        %p647 = pneg %p458
        %p648 = pneg %p455
        %p649 = pneg %p486
        %p650 = pneg %p483
        %s651 = sand.u32 %s473, 1
        %s652 = scalar_lea.sflag [#allocation5], %s651
        %s653 = sand.u32 %s473, 1
        %s654 = smul.addr %s653, 8
        %s655 = scalar_lea.vmem [#allocation4], %s654
        %p656 = scmp.lt.s32.totalorder %s37, 1
        %s657 = scalar_select %p656, %s37, 1
        %s658 = smul.addr %s657, 2
        %s659 = smul.addr %s658, 8
        %s660 = scalar_lea.vmem %s0, %s659
        %p661 = scmp.lt.s32.totalorder %s37, 1
        %s662 = scalar_select %p661, %s37, 1
        %p663 = scmp.lt.s32.totalorder %s38, 1
        %s664 = scalar_select %p663, %s38, 1
        %s665 = smul.addr %s662, 2
        %s666 = sadd.s32 %s664, %s665
        %s667 = smul.addr %s666, 8
        %s668 = scalar_lea.vmem %s1, %s667
        %p669 = scmp.lt.s32.totalorder %s37, 1
        %s670 = scalar_select %p669, %s37, 1
        %p671 = scmp.lt.s32.totalorder %s38, 1
        %s672 = scalar_select %p671, %s38, 1
        %s673 = smul.addr %s670, 2
        %s674 = sadd.s32 %s672, %s673
        %s675 = smul.addr %s674, 4
        %s676 = scalar_lea.vmem %s2, %s675
        %p677 = scmp.eq.s32.totalorder %s38, 0
        // Predicated region
        $region97: #{tpu_custom_call.1} parent=95 // pred_check
          %p678 = pneg %p677
        $region98: #{tpu_custom_call.1} parent=95 // pred_check_branch
          %680 = sbr.rel (%p678) target = $region100
        $region99: #{tpu_custom_call.1} parent=95 // pred_region
          %v681 = vld [vmem:[%s660] sm:$0xff]
          %v682 = vld [vmem:[%s660 + $0x8] sm:$0xff]
          %v683 = vld [vmem:[%s5] sm:$0xff]
          %v684 = vld [vmem:[%s5 + $0x8] sm:$0xff]
          %v685 = vld [vmem:[%s5 + $0x10] sm:$0xff]
          %v686 = vld [vmem:[%s5 + $0x18] sm:$0xff]
          %v687 = vld [vmem:[%s6] sm:$0x1]
          %v689 = vperm.slane %v687, 0
          %vm691 = vcmask 261120
          %v693 = vsel %vm691, %v681, 0
          %v696 = vsel %vm691, %v682, 0
          %698 = vmatpush.msra.mxu0 0.0
          %699 = vmatpush.msra.mxu0 0.0
          %700 = vmatpush.msra.mxu0 0.0
          %701 = vmatpush.msra.mxu0 0.0
          %702 = vmatpush.msra.mxu0 0.0
          %703 = vmatpush.msra.mxu0 0.0
          %704 = vmatpush.msra.mxu0 0.0
          %705 = vmatpush.msra.mxu0 0.0
          %706 = vmatpush.msra.mxu0 0.0
          %707 = vmatpush.msra.mxu0 0.0
          %708 = vmatpush.msra.mxu0 0.0
          %709 = vmatpush.msra.mxu0 0.0
          %710 = vmatpush.msra.mxu0 %v686
          %711 = vmatpush.msra.mxu0 %v685
          %712 = vmatpush.msra.mxu0 %v684
          %713 = vmatpush.msra.mxu0 %v683
          %714 = vmatmul.f32.gmra.mxu0 %v693
          %v715 = vpop.f32.mrf.mxu0
          %v716 = vadd.f32 %v689, %v715
          %717 = vmatmul.f32.gmra.mxu0 %v696
          %v718 = vpop.f32.mrf.mxu0
          %v719 = vadd.f32 %v689, %v718
          %720 = vdwg.mxu0
          %721 = vst.msk [vmem:[#allocation2] sm:$0xff] %vm691, %v716
          %722 = vst.msk [vmem:[#allocation2 + $0x8] sm:$0xff] %vm691, %v719
          %v723 = vld [vmem:[%s7] sm:$0xff]
          %v724 = vld [vmem:[%s7 + $0x8] sm:$0xff]
          %v725 = vld [vmem:[%s7 + $0x10] sm:$0xff]
          %v726 = vld [vmem:[%s7 + $0x18] sm:$0xff]
          %v727 = vld [vmem:[%s8] sm:$0x1]
          %v729 = vperm.slane %v727, 0
          %731 = vmatpush.msra.mxu0 0.0
          %732 = vmatpush.msra.mxu0 0.0
          %733 = vmatpush.msra.mxu0 0.0
          %734 = vmatpush.msra.mxu0 0.0
          %735 = vmatpush.msra.mxu0 0.0
          %736 = vmatpush.msra.mxu0 0.0
          %737 = vmatpush.msra.mxu0 0.0
          %738 = vmatpush.msra.mxu0 0.0
          %739 = vmatpush.msra.mxu0 0.0
          %740 = vmatpush.msra.mxu0 0.0
          %741 = vmatpush.msra.mxu0 0.0
          %742 = vmatpush.msra.mxu0 0.0
          %743 = vmatpush.msra.mxu0 %v726
          %744 = vmatpush.msra.mxu0 %v725
          %745 = vmatpush.msra.mxu0 %v724
          %746 = vmatpush.msra.mxu0 %v723
          %747 = vmatmul.f32.gmra.mxu0 %v693
          %v748 = vpop.f32.mrf.mxu0
          %v749 = vadd.f32 %v729, %v748
          %750 = vmatmul.f32.gmra.mxu0 %v696
          %v751 = vpop.f32.mrf.mxu0
          %v752 = vadd.f32 %v729, %v751
          %753 = vdwg.mxu0
          %754 = vst.msk [vmem:[#allocation3] sm:$0xff] %vm691, %v749
          %755 = vst.msk [vmem:[#allocation3 + $0x8] sm:$0xff] %vm691, %v752
        $region100: #{tpu_custom_call.1} parent=95 // pred_fallthru
          _
        %v756 = vld [vmem:[%s668] sm:$0xff]
        %v757 = vld [vmem:[%s3] sm:$0xff]
        %v758 = vld [vmem:[%s3 + $0x8] sm:$0xff]
        %v759 = vld [vmem:[%s3 + $0x10] sm:$0xff]
        %v760 = vld [vmem:[%s3 + $0x18] sm:$0xff]
        %v761 = vld [vmem:[%s4] sm:$0x1]
        %v763 = vperm.slane %v761, 0
        %vm765 = vcmask 261120
        %v767 = vsel %vm765, %v756, 0
        %769 = vmatpush.msra.mxu0 0.0
        %770 = vmatpush.msra.mxu0 0.0
        %771 = vmatpush.msra.mxu0 0.0
        %772 = vmatpush.msra.mxu0 0.0
        %773 = vmatpush.msra.mxu0 0.0
        %774 = vmatpush.msra.mxu0 0.0
        %775 = vmatpush.msra.mxu0 0.0
        %776 = vmatpush.msra.mxu0 0.0
        %777 = vmatpush.msra.mxu0 0.0
        %778 = vmatpush.msra.mxu0 0.0
        %779 = vmatpush.msra.mxu0 0.0
        %780 = vmatpush.msra.mxu0 0.0
        %781 = vmatpush.msra.mxu0 %v760
        %782 = vmatpush.msra.mxu0 %v759
        %783 = vmatpush.msra.mxu0 %v758
        %784 = vmatpush.msra.mxu0 %v757
        %785 = vmatmul.f32.gmra.mxu0 %v767
        %v786 = vpop.f32.mrf.mxu0
        %v787 = vadd.f32 %v763, %v786
        %788 = vdwg.mxu0
        %v789 = vmul.f32 %v787, 0.35355338
        %v790 = vld [vmem:[#allocation2] sm:$0xff]
        %v791 = vld [vmem:[#allocation2 + $0x8] sm:$0xff]
        %v792 = vld [vmem:[#allocation3] sm:$0xff]
        %v793 = vld [vmem:[#allocation3 + $0x8] sm:$0xff]
        %v794 = vld [vmem:[%s676] sm:$0xf]
        %v795 = vunpack.c.l.bf16 %v794
        %vm796 = vcmask 64512
        %v798 = vsel %vm796, %v789, 0
        %v801 = vsel %vm796, %v790, 0
        %v804 = vsel %vm796, %v791, 0
        %806 = vmatpush.xpose.msra.mxu0 0.0
        %807 = vmatpush.xpose.msra.mxu0 0.0
        %808 = vmatpush.xpose.msra.mxu0 0.0
        %809 = vmatpush.xpose.msra.mxu0 0.0
        %810 = vmatpush.xpose.msra.mxu0 0.0
        %811 = vmatpush.xpose.msra.mxu0 0.0
        %812 = vmatpush.xpose.msra.mxu0 0.0
        %813 = vmatpush.xpose.msra.mxu0 0.0
        %814 = vmatpush.xpose.msra.mxu0 0.0
        %815 = vmatpush.xpose.msra.mxu0 0.0
        %816 = vmatpush.xpose.msra.mxu0 0.0
        %817 = vmatpush.xpose.msra.mxu0 0.0
        %818 = vmatpush.xpose.msra.mxu0 0.0
        %819 = vmatpush.xpose.msra.mxu0 0.0
        %820 = vmatpush.xpose.msra.mxu0 %v804
        %821 = vmatpush.xpose.msra.mxu0 %v801
        %822 = vmatmul.f32.gmra.mxu0 %v798
        %v823 = vpop.f32.mrf.mxu0
        %v824 = vadd.f32 %v795, %v823
        %825 = vdwg.mxu0
        %vm826 = vcmask 130048
        %v827 = vsel %vm826, %v824, -inf
        %828 = vmax.xlane.f32.xlu0 %v827
        %v829 = vpop.xlane.xlu0 %828
        %v830 = vsub.f32 %v824, %v829
        %v831 = vmul.f32 %v830, 1.442695
        %v832 = vpow.pop %v831
        %v833 = vsel %vm826, %v832, 0.0
        %834 = vadd.xlane.f32.xlu0 %v833
        %v835 = vpop.xlane.xlu0 %834
        %v836 = vrcp.pop %v835
        %v838 = vsel %vm826, %v832, 0
        %840 = vmatpush.msra.mxu0 0.0
        %841 = vmatpush.msra.mxu0 0.0
        %842 = vmatpush.msra.mxu0 0.0
        %843 = vmatpush.msra.mxu0 0.0
        %844 = vmatpush.msra.mxu0 0.0
        %845 = vmatpush.msra.mxu0 0.0
        %846 = vmatpush.msra.mxu0 0.0
        %847 = vmatpush.msra.mxu0 0.0
        %848 = vmatpush.msra.mxu0 0.0
        %849 = vmatpush.msra.mxu0 0.0
        %850 = vmatpush.msra.mxu0 0.0
        %851 = vmatpush.msra.mxu0 0.0
        %852 = vmatpush.msra.mxu0 0.0
        %853 = vmatpush.msra.mxu0 0.0
        %854 = vmatpush.msra.mxu0 %v793
        %855 = vmatpush.msra.mxu0 %v792
        %856 = vmatmul.f32.gmra.mxu0 %v838
        %v857 = vpop.f32.mrf.mxu0
        %v858 = vadd.f32 0.0, %v857
        %859 = vdwg.mxu0
        %v860 = vmul.f32 %v858, %v836
        %861 = vrot.lane.b32.xlu0 %v789, 120
        %v862 = vpop.permute.xlu0 %861
        %863 = vrot.lane.b32.xlu0 %v790, 120
        %v864 = vpop.permute.xlu0 %863
        %865 = vrot.lane.b32.xlu0 %v791, 120
        %v866 = vpop.permute.xlu0 %865
        %v867 = vsel %vm796, %v862, 0
        %v869 = vsel %vm796, %v864, 0
        %v871 = vsel %vm796, %v866, 0
        %873 = vmatpush.xpose.msra.mxu0 0.0
        %874 = vmatpush.xpose.msra.mxu0 0.0
        %875 = vmatpush.xpose.msra.mxu0 0.0
        %876 = vmatpush.xpose.msra.mxu0 0.0
        %877 = vmatpush.xpose.msra.mxu0 0.0
        %878 = vmatpush.xpose.msra.mxu0 0.0
        %879 = vmatpush.xpose.msra.mxu0 0.0
        %880 = vmatpush.xpose.msra.mxu0 0.0
        %881 = vmatpush.xpose.msra.mxu0 0.0
        %882 = vmatpush.xpose.msra.mxu0 0.0
        %883 = vmatpush.xpose.msra.mxu0 0.0
        %884 = vmatpush.xpose.msra.mxu0 0.0
        %885 = vmatpush.xpose.msra.mxu0 0.0
        %886 = vmatpush.xpose.msra.mxu0 0.0
        %887 = vmatpush.xpose.msra.mxu0 %v871
        %888 = vmatpush.xpose.msra.mxu0 %v869
        %889 = vmatmul.f32.gmra.mxu0 %v867
        %v890 = vpop.f32.mrf.mxu0
        %v891 = vadd.f32 %v795, %v890
        %892 = vdwg.mxu0
        %v893 = vsel %vm826, %v891, -inf
        %894 = vmax.xlane.f32.xlu0 %v893
        %v895 = vpop.xlane.xlu0 %894
        %v896 = vsub.f32 %v891, %v895
        %v897 = vmul.f32 %v896, 1.442695
        %v898 = vpow.pop %v897
        %v899 = vsel %vm826, %v898, 0.0
        %900 = vadd.xlane.f32.xlu0 %v899
        %v901 = vpop.xlane.xlu0 %900
        %v902 = vrcp.pop %v901
        %905 = vrot.lane.b32.xlu0 %v792, 120
        %v906 = vpop.permute.xlu0 %905
        %907 = vrot.lane.b32.xlu0 %v793, 120
        %v908 = vpop.permute.xlu0 %907
        %v912 = vsel %vm826, %v898, 0
        %914 = vmatpush.msra.mxu0 0.0
        %915 = vmatpush.msra.mxu0 0.0
        %916 = vmatpush.msra.mxu0 0.0
        %917 = vmatpush.msra.mxu0 0.0
        %918 = vmatpush.msra.mxu0 0.0
        %919 = vmatpush.msra.mxu0 0.0
        %920 = vmatpush.msra.mxu0 0.0
        %921 = vmatpush.msra.mxu0 0.0
        %922 = vmatpush.msra.mxu0 0.0
        %923 = vmatpush.msra.mxu0 0.0
        %924 = vmatpush.msra.mxu0 0.0
        %925 = vmatpush.msra.mxu0 0.0
        %926 = vmatpush.msra.mxu0 0.0
        %927 = vmatpush.msra.mxu0 0.0
        %928 = vmatpush.msra.mxu0 %v908
        %929 = vmatpush.msra.mxu0 %v906
        %930 = vmatmul.f32.gmra.mxu0 %v912
        %v931 = vpop.f32.mrf.mxu0
        %v932 = vadd.f32 0.0, %v931
        %933 = vdwg.mxu0
        %v934 = vmul.f32 %v932, %v902
        %935 = vrot.lane.b32.xlu0 %v789, 112
        %v936 = vpop.permute.xlu0 %935
        %937 = vrot.lane.b32.xlu0 %v790, 112
        %v938 = vpop.permute.xlu0 %937
        %939 = vrot.lane.b32.xlu0 %v791, 112
        %v940 = vpop.permute.xlu0 %939
        %v941 = vsel %vm796, %v936, 0
        %v943 = vsel %vm796, %v938, 0
        %v945 = vsel %vm796, %v940, 0
        %947 = vmatpush.xpose.msra.mxu0 0.0
        %948 = vmatpush.xpose.msra.mxu0 0.0
        %949 = vmatpush.xpose.msra.mxu0 0.0
        %950 = vmatpush.xpose.msra.mxu0 0.0
        %951 = vmatpush.xpose.msra.mxu0 0.0
        %952 = vmatpush.xpose.msra.mxu0 0.0
        %953 = vmatpush.xpose.msra.mxu0 0.0
        %954 = vmatpush.xpose.msra.mxu0 0.0
        %955 = vmatpush.xpose.msra.mxu0 0.0
        %956 = vmatpush.xpose.msra.mxu0 0.0
        %957 = vmatpush.xpose.msra.mxu0 0.0
        %958 = vmatpush.xpose.msra.mxu0 0.0
        %959 = vmatpush.xpose.msra.mxu0 0.0
        %960 = vmatpush.xpose.msra.mxu0 0.0
        %961 = vmatpush.xpose.msra.mxu0 %v945
        %962 = vmatpush.xpose.msra.mxu0 %v943
        %963 = vmatmul.f32.gmra.mxu0 %v941
        %v964 = vpop.f32.mrf.mxu0
        %v965 = vadd.f32 %v795, %v964
        %966 = vdwg.mxu0
        %v967 = vsel %vm826, %v965, -inf
        %968 = vmax.xlane.f32.xlu0 %v967
        %v969 = vpop.xlane.xlu0 %968
        %v970 = vsub.f32 %v965, %v969
        %v971 = vmul.f32 %v970, 1.442695
        %v972 = vpow.pop %v971
        %v973 = vsel %vm826, %v972, 0.0
        %974 = vadd.xlane.f32.xlu0 %v973
        %v975 = vpop.xlane.xlu0 %974
        %v976 = vrcp.pop %v975
        %977 = vrot.lane.b32.xlu0 %v792, 112
        %v978 = vpop.permute.xlu0 %977
        %979 = vrot.lane.b32.xlu0 %v793, 112
        %v980 = vpop.permute.xlu0 %979
        %v984 = vsel %vm826, %v972, 0
        %986 = vmatpush.msra.mxu0 0.0
        %987 = vmatpush.msra.mxu0 0.0
        %988 = vmatpush.msra.mxu0 0.0
        %989 = vmatpush.msra.mxu0 0.0
        %990 = vmatpush.msra.mxu0 0.0
        %991 = vmatpush.msra.mxu0 0.0
        %992 = vmatpush.msra.mxu0 0.0
        %993 = vmatpush.msra.mxu0 0.0
        %994 = vmatpush.msra.mxu0 0.0
        %995 = vmatpush.msra.mxu0 0.0
        %996 = vmatpush.msra.mxu0 0.0
        %997 = vmatpush.msra.mxu0 0.0
        %998 = vmatpush.msra.mxu0 0.0
        %999 = vmatpush.msra.mxu0 0.0
        %1000 = vmatpush.msra.mxu0 %v980
        %1001 = vmatpush.msra.mxu0 %v978
        %1002 = vmatmul.f32.gmra.mxu0 %v984
        %v1003 = vpop.f32.mrf.mxu0
        %v1004 = vadd.f32 0.0, %v1003
        %1005 = vdwg.mxu0
        %v1006 = vmul.f32 %v1004, %v976
        %1007 = vrot.lane.b32.xlu0 %v789, 104
        %v1008 = vpop.permute.xlu0 %1007
        %1009 = vrot.lane.b32.xlu0 %v790, 104
        %v1010 = vpop.permute.xlu0 %1009
        %1011 = vrot.lane.b32.xlu0 %v791, 104
        %v1012 = vpop.permute.xlu0 %1011
        %v1013 = vsel %vm796, %v1008, 0
        %v1015 = vsel %vm796, %v1010, 0
        %v1017 = vsel %vm796, %v1012, 0
        %1019 = vmatpush.xpose.msra.mxu0 0.0
        %1020 = vmatpush.xpose.msra.mxu0 0.0
        %1021 = vmatpush.xpose.msra.mxu0 0.0
        %1022 = vmatpush.xpose.msra.mxu0 0.0
        %1023 = vmatpush.xpose.msra.mxu0 0.0
        %1024 = vmatpush.xpose.msra.mxu0 0.0
        %1025 = vmatpush.xpose.msra.mxu0 0.0
        %1026 = vmatpush.xpose.msra.mxu0 0.0
        %1027 = vmatpush.xpose.msra.mxu0 0.0
        %1028 = vmatpush.xpose.msra.mxu0 0.0
        %1029 = vmatpush.xpose.msra.mxu0 0.0
        %1030 = vmatpush.xpose.msra.mxu0 0.0
        %1031 = vmatpush.xpose.msra.mxu0 0.0
        %1032 = vmatpush.xpose.msra.mxu0 0.0
        %1033 = vmatpush.xpose.msra.mxu0 %v1017
        %1034 = vmatpush.xpose.msra.mxu0 %v1015
        %1035 = vmatmul.f32.gmra.mxu0 %v1013
        %v1036 = vpop.f32.mrf.mxu0
        %v1037 = vadd.f32 %v795, %v1036
        %1038 = vdwg.mxu0
        %v1039 = vsel %vm826, %v1037, -inf
        %1040 = vmax.xlane.f32.xlu0 %v1039
        %v1041 = vpop.xlane.xlu0 %1040
        %v1042 = vsub.f32 %v1037, %v1041
        %v1043 = vmul.f32 %v1042, 1.442695
        %v1044 = vpow.pop %v1043
        %v1045 = vsel %vm826, %v1044, 0.0
        %1046 = vadd.xlane.f32.xlu0 %v1045
        %v1047 = vpop.xlane.xlu0 %1046
        %v1048 = vrcp.pop %v1047
        %1049 = vrot.lane.b32.xlu0 %v792, 104
        %v1050 = vpop.permute.xlu0 %1049
        %1051 = vrot.lane.b32.xlu0 %v793, 104
        %v1052 = vpop.permute.xlu0 %1051
        %v1056 = vsel %vm826, %v1044, 0
        %1058 = vmatpush.msra.mxu0 0.0
        %1059 = vmatpush.msra.mxu0 0.0
        %1060 = vmatpush.msra.mxu0 0.0
        %1061 = vmatpush.msra.mxu0 0.0
        %1062 = vmatpush.msra.mxu0 0.0
        %1063 = vmatpush.msra.mxu0 0.0
        %1064 = vmatpush.msra.mxu0 0.0
        %1065 = vmatpush.msra.mxu0 0.0
        %1066 = vmatpush.msra.mxu0 0.0
        %1067 = vmatpush.msra.mxu0 0.0
        %1068 = vmatpush.msra.mxu0 0.0
        %1069 = vmatpush.msra.mxu0 0.0
        %1070 = vmatpush.msra.mxu0 0.0
        %1071 = vmatpush.msra.mxu0 0.0
        %1072 = vmatpush.msra.mxu0 %v1052
        %1073 = vmatpush.msra.mxu0 %v1050
        %1074 = vmatmul.f32.gmra.mxu0 %v1056
        %v1075 = vpop.f32.mrf.mxu0
        %v1076 = vadd.f32 0.0, %v1075
        %1077 = vdwg.mxu0
        %v1078 = vmul.f32 %v1076, %v1048
        %1080 = vrot.lane.b32.xlu0 %v934, 8
        %v1081 = vpop.permute.xlu0 %1080
        %1084 = vrot.lane.b32.xlu0 %v1006, 16
        %v1085 = vpop.permute.xlu0 %1084
        %1088 = vrot.lane.b32.xlu0 %v1078, 24
        %v1089 = vpop.permute.xlu0 %1088
        %v1091 = vsel %vm796, %v860, %v1081
        %v1092 = vsel %vm826, %v1091, %v1085
        %vm1093 = vcmask 195584
        %v1094 = vsel %vm1093, %v1092, %v1089
        %v1095 = vld [vmem:[%s9] sm:$0xff]
        %v1096 = vld [vmem:[%s9 + $0x8] sm:$0xff]
        %v1097 = vld [vmem:[%s9 + $0x10] sm:$0xff]
        %v1098 = vld [vmem:[%s9 + $0x18] sm:$0xff]
        %v1099 = vld [vmem:[%s10] sm:$0x1]
        %v1101 = vperm.slane %v1099, 0
        %v1104 = vsel %vm765, %v1094, 0
        %1106 = vmatpush.msra.mxu0 0.0
        %1107 = vmatpush.msra.mxu0 0.0
        %1108 = vmatpush.msra.mxu0 0.0
        %1109 = vmatpush.msra.mxu0 0.0
        %1110 = vmatpush.msra.mxu0 0.0
        %1111 = vmatpush.msra.mxu0 0.0
        %1112 = vmatpush.msra.mxu0 0.0
        %1113 = vmatpush.msra.mxu0 0.0
        %1114 = vmatpush.msra.mxu0 0.0
        %1115 = vmatpush.msra.mxu0 0.0
        %1116 = vmatpush.msra.mxu0 0.0
        %1117 = vmatpush.msra.mxu0 0.0
        %1118 = vmatpush.msra.mxu0 %v1098
        %1119 = vmatpush.msra.mxu0 %v1097
        %1120 = vmatpush.msra.mxu0 %v1096
        %1121 = vmatpush.msra.mxu0 %v1095
        %1122 = vmatmul.f32.gmra.mxu0 %v1104
        %v1123 = vpop.f32.mrf.mxu0
        %v1124 = vadd.f32 %v1101, %v1123
        %1125 = vdwg.mxu0
        %v1126 = vadd.f32 %v1124, %v756
        %v1127 = vld [vmem:[%s11] sm:$0x1]
        %v1128 = vld [vmem:[%s12] sm:$0x1]
        %v1129 = vsel %vm765, %v1126, 0.0
        %1130 = vadd.xlane.f32.xlu0 %v1129
        %v1131 = vpop.xlane.xlu0 %1130
        %v1132 = vrcp.pop 32.0
        %v1133 = vmul.f32 32.0, %v1132
        %v1134 = vsub.f32 1.0, %v1133
        %v1135 = vmul.f32 %v1132, %v1134
        %v1136 = vadd.f32 %v1132, %v1135
        %vm1137 = vweird.f32 %v1132
        %v1138 = vsel %vm1137, %v1132, %v1136
        %v1139 = vmul.f32 %v1131, %v1138
        %v1140 = vsub.f32 %v1126, %v1139
        %v1141 = vmul.f32 %v1140, %v1140
        %v1142 = vsel %vm765, %v1141, 0.0
        %1143 = vadd.xlane.f32.xlu0 %v1142
        %v1144 = vpop.xlane.xlu0 %1143
        %v1145 = vmul.f32 %v1144, %v1138
        %v1146 = vadd.f32 %v1145, 1e-12
        %v1147 = vrsqrt.pop %v1146
        %v1148 = vmul.f32 %v1147, %v1146
        %v1149 = vmul.f32 %v1148, %v1147
        %v1150 = vmul.f32 0.5, %v1149
        %v1151 = vsub.f32 1.5, %v1150
        %v1152 = vmul.f32 %v1147, %v1151
        %vm1153 = vweird.f32 %v1146
        %vm1154 = vweird.f32 %v1147
        %vm1155 = vmor %vm1153, %vm1154
        %v1156 = vsel %vm1155, %v1147, %v1152
        %v1157 = vmul.f32 %v1140, %v1156
        %v1159 = vperm.slane %v1127, 0
        %v1161 = vmul.f32 %v1157, %v1159
        %v1163 = vperm.slane %v1128, 0
        %v1165 = vadd.f32 %v1161, %v1163
        %v1166 = vld [vmem:[%s13] sm:$0xff]
        %v1167 = vld [vmem:[%s13 + $0x8] sm:$0xff]
        %v1168 = vld [vmem:[%s13 + $0x10] sm:$0xff]
        %v1169 = vld [vmem:[%s13 + $0x18] sm:$0xff]
        %v1170 = vld [vmem:[%s13 + $0x20] sm:$0xff]
        %v1171 = vld [vmem:[%s13 + $0x28] sm:$0xff]
        %v1172 = vld [vmem:[%s13 + $0x30] sm:$0xff]
        %v1173 = vld [vmem:[%s13 + $0x38] sm:$0xff]
        %v1174 = vld [vmem:[%s14] sm:$0x1]
        %v1175 = vperm.slane %v1174, 0
        %v1177 = vsel %vm765, %v1124, 0
        %v1180 = vsel %vm765, %v1166, 0
        %v1183 = vsel %vm765, %v1167, 0
        %v1186 = vsel %vm765, %v1168, 0
        %v1189 = vsel %vm765, %v1169, 0
        %v1192 = vsel %vm765, %v1170, 0
        %v1195 = vsel %vm765, %v1171, 0
        %v1198 = vsel %vm765, %v1172, 0
        %v1201 = vsel %vm765, %v1173, 0
        %1203 = vmatpush.xpose.msra.mxu0 0.0
        %1204 = vmatpush.xpose.msra.mxu0 0.0
        %1205 = vmatpush.xpose.msra.mxu0 0.0
        %1206 = vmatpush.xpose.msra.mxu0 0.0
        %1207 = vmatpush.xpose.msra.mxu0 0.0
        %1208 = vmatpush.xpose.msra.mxu0 0.0
        %1209 = vmatpush.xpose.msra.mxu0 0.0
        %1210 = vmatpush.xpose.msra.mxu0 0.0
        %1211 = vmatpush.xpose.msra.mxu0 %v1201
        %1212 = vmatpush.xpose.msra.mxu0 %v1198
        %1213 = vmatpush.xpose.msra.mxu0 %v1195
        %1214 = vmatpush.xpose.msra.mxu0 %v1192
        %1215 = vmatpush.xpose.msra.mxu0 %v1189
        %1216 = vmatpush.xpose.msra.mxu0 %v1186
        %1217 = vmatpush.xpose.msra.mxu0 %v1183
        %1218 = vmatpush.xpose.msra.mxu0 %v1180
        %1219 = vmatmul.f32.gmra.mxu0 %v1177
        %v1220 = vpop.f32.mrf.mxu0
        %v1221 = vadd.f32 %v1175, %v1220
        %1222 = vdwg.mxu0
        %v1223 = vmax.f32 %v1221, 0.0
        %v1224 = vld [vmem:[%s15] sm:$0xff]
        %v1225 = vld [vmem:[%s15 + $0x8] sm:$0xff]
        %v1226 = vld [vmem:[%s15 + $0x10] sm:$0xff]
        %v1227 = vld [vmem:[%s15 + $0x18] sm:$0xff]
        %v1228 = vld [vmem:[%s15 + $0x20] sm:$0xff]
        %v1229 = vld [vmem:[%s15 + $0x28] sm:$0xff]
        %v1230 = vld [vmem:[%s15 + $0x30] sm:$0xff]
        %v1231 = vld [vmem:[%s15 + $0x38] sm:$0xff]
        %s1232 = scalar_lea.vmem %s13, 64
        %v1233 = vld [vmem:[%s1232] sm:$0xff]
        %v1234 = vld [vmem:[%s1232 + $0x8] sm:$0xff]
        %v1235 = vld [vmem:[%s1232 + $0x10] sm:$0xff]
        %v1236 = vld [vmem:[%s1232 + $0x18] sm:$0xff]
        %v1237 = vld [vmem:[%s1232 + $0x20] sm:$0xff]
        %v1238 = vld [vmem:[%s1232 + $0x28] sm:$0xff]
        %v1239 = vld [vmem:[%s1232 + $0x30] sm:$0xff]
        %v1240 = vld [vmem:[%s1232 + $0x38] sm:$0xff]
        %v1241 = vld [vmem:[%s14 + $0x1] sm:$0x1]
        %v1242 = vperm.slane %v1241, 0
        %v1244 = vsel %vm765, %v1233, 0
        %v1247 = vsel %vm765, %v1234, 0
        %v1250 = vsel %vm765, %v1235, 0
        %v1253 = vsel %vm765, %v1236, 0
        %v1256 = vsel %vm765, %v1237, 0
        %v1259 = vsel %vm765, %v1238, 0
        %v1262 = vsel %vm765, %v1239, 0
        %v1265 = vsel %vm765, %v1240, 0
        %1267 = vmatpush.xpose.msra.mxu0 0.0
        %1268 = vmatpush.xpose.msra.mxu0 0.0
        %1269 = vmatpush.xpose.msra.mxu0 0.0
        %1270 = vmatpush.xpose.msra.mxu0 0.0
        %1271 = vmatpush.xpose.msra.mxu0 0.0
        %1272 = vmatpush.xpose.msra.mxu0 0.0
        %1273 = vmatpush.xpose.msra.mxu0 0.0
        %1274 = vmatpush.xpose.msra.mxu0 0.0
        %1275 = vmatpush.xpose.msra.mxu0 %v1265
        %1276 = vmatpush.xpose.msra.mxu0 %v1262
        %1277 = vmatpush.xpose.msra.mxu0 %v1259
        %1278 = vmatpush.xpose.msra.mxu0 %v1256
        %1279 = vmatpush.xpose.msra.mxu0 %v1253
        %1280 = vmatpush.xpose.msra.mxu0 %v1250
        %1281 = vmatpush.xpose.msra.mxu0 %v1247
        %1282 = vmatpush.xpose.msra.mxu0 %v1244
        %1283 = vmatmul.f32.gmra.mxu0 %v1177
        %v1284 = vpop.f32.mrf.mxu0
        %v1285 = vadd.f32 %v1242, %v1284
        %1286 = vdwg.mxu0
        %v1287 = vmax.f32 %v1285, 0.0
        %s1288 = scalar_lea.vmem %s15, 64
        %v1289 = vld [vmem:[%s1288] sm:$0xff]
        %v1290 = vld [vmem:[%s1288 + $0x8] sm:$0xff]
        %v1291 = vld [vmem:[%s1288 + $0x10] sm:$0xff]
        %v1292 = vld [vmem:[%s1288 + $0x18] sm:$0xff]
        %v1293 = vld [vmem:[%s1288 + $0x20] sm:$0xff]
        %v1294 = vld [vmem:[%s1288 + $0x28] sm:$0xff]
        %v1295 = vld [vmem:[%s1288 + $0x30] sm:$0xff]
        %v1296 = vld [vmem:[%s1288 + $0x38] sm:$0xff]
        %vm1297 = vcmask 523264
        %v1299 = vsel %vm1297, %v1287, 0
        %1301 = vmatpush.msra.mxu0 0.0
        %1302 = vmatpush.msra.mxu0 0.0
        %1303 = vmatpush.msra.mxu0 0.0
        %1304 = vmatpush.msra.mxu0 0.0
        %1305 = vmatpush.msra.mxu0 0.0
        %1306 = vmatpush.msra.mxu0 0.0
        %1307 = vmatpush.msra.mxu0 0.0
        %1308 = vmatpush.msra.mxu0 0.0
        %1309 = vmatpush.msra.mxu0 %v1296
        %1310 = vmatpush.msra.mxu0 %v1295
        %1311 = vmatpush.msra.mxu0 %v1294
        %1312 = vmatpush.msra.mxu0 %v1293
        %1313 = vmatpush.msra.mxu0 %v1292
        %1314 = vmatpush.msra.mxu0 %v1291
        %1315 = vmatpush.msra.mxu0 %v1290
        %1316 = vmatpush.msra.mxu0 %v1289
        %1317 = vmatmul.f32.gmra.mxu0 %v1299
        %v1318 = vpop.f32.mrf.mxu0
        %v1319 = vadd.f32 0.0, %v1318
        %1320 = vdwg.mxu0
        %v1322 = vsel %vm1297, %v1223, 0
        %1324 = vmatpush.msra.mxu0 0.0
        %1325 = vmatpush.msra.mxu0 0.0
        %1326 = vmatpush.msra.mxu0 0.0
        %1327 = vmatpush.msra.mxu0 0.0
        %1328 = vmatpush.msra.mxu0 0.0
        %1329 = vmatpush.msra.mxu0 0.0
        %1330 = vmatpush.msra.mxu0 0.0
        %1331 = vmatpush.msra.mxu0 0.0
        %1332 = vmatpush.msra.mxu0 %v1231
        %1333 = vmatpush.msra.mxu0 %v1230
        %1334 = vmatpush.msra.mxu0 %v1229
        %1335 = vmatpush.msra.mxu0 %v1228
        %1336 = vmatpush.msra.mxu0 %v1227
        %1337 = vmatpush.msra.mxu0 %v1226
        %1338 = vmatpush.msra.mxu0 %v1225
        %1339 = vmatpush.msra.mxu0 %v1224
        %1340 = vmatmul.f32.gmra.mxu0 %v1322
        %v1341 = vpop.f32.mrf.mxu0
        %v1342 = vadd.f32 %v1319, %v1341
        %1343 = vdwg.mxu0
        %v1344 = vld [vmem:[%s16] sm:$0x1]
        %v1346 = vperm.slane %v1344, 0
        %v1348 = vadd.f32 %v1342, %v1346
        %v1349 = vadd.f32 %v1348, %v1165
        %v1350 = vld [vmem:[%s17] sm:$0x1]
        %v1351 = vld [vmem:[%s18] sm:$0x1]
        %v1352 = vsel %vm765, %v1349, 0.0
        %1353 = vadd.xlane.f32.xlu0 %v1352
        %v1354 = vpop.xlane.xlu0 %1353
        %v1355 = vmul.f32 %v1354, %v1138
        %v1356 = vsub.f32 %v1349, %v1355
        %v1357 = vmul.f32 %v1356, %v1356
        %v1358 = vsel %vm765, %v1357, 0.0
        %1359 = vadd.xlane.f32.xlu0 %v1358
        %v1360 = vpop.xlane.xlu0 %1359
        %v1361 = vmul.f32 %v1360, %v1138
        %v1362 = vadd.f32 %v1361, 1e-12
        %v1363 = vrsqrt.pop %v1362
        %v1364 = vmul.f32 %v1363, %v1362
        %v1365 = vmul.f32 %v1364, %v1363
        %v1366 = vmul.f32 0.5, %v1365
        %v1367 = vsub.f32 1.5, %v1366
        %v1368 = vmul.f32 %v1363, %v1367
        %vm1369 = vweird.f32 %v1362
        %vm1370 = vweird.f32 %v1363
        %vm1371 = vmor %vm1369, %vm1370
        %v1372 = vsel %vm1371, %v1363, %v1368
        %v1373 = vmul.f32 %v1356, %v1372
        %v1375 = vperm.slane %v1350, 0
        %v1377 = vmul.f32 %v1373, %v1375
        %v1379 = vperm.slane %v1351, 0
        %v1381 = vadd.f32 %v1377, %v1379
        %1382 = vst.msk [vmem:[%s655] sm:$0xff] %vm765, %v1381
        %s1383 = sand.u32 %s473, 1
        %s1384 = scalar_lea.sflag [#allocation5], %s1383
        %s1385 = sand.u32 %s473, 1
        %s1386 = smul.addr %s1385, 8
        %s1387 = scalar_lea.vmem [#allocation4], %s1386
        // Predicated region
        $region101: #{tpu_custom_call.1} parent=95 // pred_check
          %p1388 = pneg %p483
        $region102: #{tpu_custom_call.1} parent=95 // pred_check_branch
          %1390 = sbr.rel (%p1388) target = $region104
        $region103: #{tpu_custom_call.1} parent=95 // pred_region
          %1392 = vsyncadd %s1384, 0
          %s1393 = smul.addr %s37, 2
          %s1394 = sadd.s32 %s38, %s1393
          %s1395 = smul.addr %s1394, 8
          %s1396 = scalar_lea.hbm %s19, %s1395
          %s1398 = sshll.u32 %s1387, 4
          %s1399 = int_to_ptr.vmem [resolvable:$true] %s1398
          %s1400 = sshll.u32 %s1396, 4
          %s1401 = int_to_ptr.hbm [resolvable:$true] %s1400
          %1403 = dma.vmem_to_hbm [thread:$0]  %s1399, 128, %s1401, %s1384
        $region104: #{tpu_custom_call.1} parent=95 // pred_fallthru
          _
      $region96: #{tpu_custom_call.1} parent=5 // pred_fallthru
        _
      %p1404 = scmp.le.s32.totalorder 2, %s28
      // Predicated region
      $region105: #{tpu_custom_call.1} parent=5 // pred_check
        %p1405 = pneg %p1404
      $region106: #{tpu_custom_call.1} parent=5 // pred_check_branch
        %1407 = sbr.rel (%p1405) target = $region108
      $region107: #{tpu_custom_call.1} parent=5 // pred_region
        %s1408 = ssub.s32 %s28, 2
        // Predicated region
        $region109: #{tpu_custom_call.1} parent=107 // pred_check
          %p1409 = pneg %p489
        $region110: #{tpu_custom_call.1} parent=107 // pred_check_branch
          %1411 = sbr.rel (%p1409) target = $region112
        $region111: #{tpu_custom_call.1} parent=107 // pred_region
          %s1412 = sand.u32 %s474, 1
          %s1413 = scalar_lea.sflag [#allocation5], %s1412
          %s1414 = sand.u32 %s474, 1
          %s1415 = smul.addr %s1414, 8
          %s1416 = scalar_lea.vmem [#allocation4], %s1415
          %1418 = dma.done %s1413, 128
        $region112: #{tpu_custom_call.1} parent=107 // pred_fallthru
          _
      $region108: #{tpu_custom_call.1} parent=5 // pred_fallthru
        _
    $region6: #{tpu_custom_call.1} parent=1 // loop_footer
      %s32 = sadd.s32 1, %s28
    $region7: #{tpu_custom_call.1} parent=1 // loop_footer_branch
      %27 = sbr.rel target = $region3
    $region8: #{tpu_custom_call.1} parent=1 // loop_exit
      _
    %1419 = vsyncpa [#allocation5], 1
    %s1420 = scalar_lea.sflag [#allocation5], 1
    %1421 = vsyncpa %s1420, 1

</llo_original>
